<compile_context>
chip_gen: v7x
topology: tpu7x:2x2x1
jax: 0.10.0
libtpu: 0.0.40
codegen_flags: <defaults>
</compile_context>

<pallas_src>
import jax
import jax.numpy as jnp
from jax import lax
from jax.experimental import pallas as pl
from jax.experimental.pallas import tpu as pltpu

EPS = 1e-3  # BatchNorm eps in the PyTorch module
_VMEM_BIG = 48 * 1024 * 1024


# ---------------------------------------------------------------------------
# Pallas kernels
# ---------------------------------------------------------------------------
def _head_kernel(x_ref, w_ref, b_ref, y_ref, b0_ref):
    """Fused 1x1x1 heads. x:(tm,192) bf16, w:(192,192) bf16 laid out as
    [b1a(96)|b2a(16)|zero(16) | b0(64)].  y <- cols[:128] (bf16), b0 <- cols[128:192] (f32)."""
    acc = jnp.dot(x_ref[...], w_ref[...], preferred_element_type=jnp.float32)
    acc = jnp.maximum(acc + b_ref[...], 0.0)
    y_ref[...] = acc[:, 0:128].astype(y_ref.dtype)
    b0_ref[...] = acc[:, 128:192].astype(b0_ref.dtype)


def _spatial_conv_kernel(x_ref, w_ref, b_ref, o_ref):
    """(1,3,3) conv as 9 shifted in-VMEM matmuls. x:(F,H+2,W+2,128) bf16 (zero pad),
    w:(9,128,256) bf16 block-diag [b1b | b2b], out:(F,H,W,256) bf16."""
    F, Hp, Wp, Cin = x_ref.shape
    H, W = Hp - 2, Wp - 2
    Cout = w_ref.shape[-1]
    rows = F * H * W
    x = x_ref[...]
    # TODO(synk): on v6e/v7x pack the 9 taps along K (im2col concat, K=9*128) to fill
    # the 256-deep MXU and cut accumulator RMWs; per-tap K=128 already fills v5e.
    acc = None
    k = 0
    for dy in range(3):
        for dx in range(3):
            xt = x[:, dy:dy + H, dx:dx + W, :].reshape(rows, Cin)
            d = jnp.dot(xt, w_ref[k], preferred_element_type=jnp.float32)
            acc = d if acc is None else acc + d
            k += 1
    y = jnp.maximum(acc + b_ref[...], 0.0)
    o_ref[...] = y.reshape(F, H, W, Cout).astype(o_ref.dtype)


def _temporal_assemble_kernel(ys_ref, b0_ref, b3_ref, w_ref, b_ref, o_ref):
    """(3,1,1) conv (K=256 -> 160) fused with final channel assembly.
    ys:(1,T+2,th,W,256) bf16 (zero T-pad), b0:(1,T,th,W,64) f32, b3:(1,T,th,W,32) f32.
    Output layout (torch.cat order): [b0 64 | b1 128 | b2 32 | b3 32] = 256 f32."""
    _, Tp, th, W, Cin = ys_ref.shape
    T = Tp - 2
    Cout = w_ref.shape[-1]            # 160 = b1c(128) | b2c(32)
    rows = T * th * W
    x = ys_ref[...]
    acc = jnp.dot(x[:, 0:T].reshape(rows, Cin), w_ref[0],
                  preferred_element_type=jnp.float32)
    for dt in (1, 2):
        acc = acc + jnp.dot(x[:, dt:dt + T].reshape(rows, Cin), w_ref[dt],
                            preferred_element_type=jnp.float32)
    t = jnp.maximum(acc + b_ref[...], 0.0).reshape(1, T, th, W, Cout)
    # Assemble in VMEM; the HBM writeback of the block is one lane-dense 256-wide DMA.
    o_ref[:, :, :, :, 0:64] = b0_ref[...].astype(o_ref.dtype)
    o_ref[:, :, :, :, 64:64 + Cout] = t.astype(o_ref.dtype)
    o_ref[:, :, :, :, 64 + Cout:] = b3_ref[...].astype(o_ref.dtype)


def _pool_conv_kernel(x_ref, w_ref, b_ref, o_ref):
    """Separable 3x3x3 max-pool (stride 1, -inf pad), order T->H->W, fused with
    1x1x1 conv + BN + ReLU.  x:(1,T+2,H+2,W+2,192) bf16, out:(1,T,H,W,32) f32."""
    _, Tp, Hp, Wp, C = x_ref.shape
    T, H, W = Tp - 2, Hp - 2, Wp - 2
    Cout = w_ref.shape[-1]
    x = x_ref[...]
    m = jnp.maximum(jnp.maximum(x[:, 0:T], x[:, 1:T + 1]), x[:, 2:T + 2])
    m = jnp.maximum(jnp.maximum(m[:, :, 0:H], m[:, :, 1:H + 1]), m[:, :, 2:H + 2])
    m = jnp.maximum(jnp.maximum(m[:, :, :, 0:W], m[:, :, :, 1:W + 1]),
                    m[:, :, :, 2:W + 2])
    acc = jnp.dot(m.reshape(T * H * W, C), w_ref[...],
                  preferred_element_type=jnp.float32)
    y = jnp.maximum(acc + b_ref[...], 0.0)
    o_ref[...] = y.reshape(1, T, H, W, Cout).astype(o_ref.dtype)


# ---------------------------------------------------------------------------
# pallas_call wrappers
# ---------------------------------------------------------------------------
def _round_up(x, m):
    return (x + m - 1) // m * m


def _pick_tm(m):
    """Largest row tile (<=2048) dividing M with >=2 grid steps; else round-up pad."""
    for tm in (2048, 1024, 896, 768, 640, 512, 384, 256, 128):
        if m % tm == 0 and m // tm >= 2:
            return tm
    return min(1024, _round_up(m, 128))


def fused_head(x2d, w, bias):
    """x2d:(M,192) bf16 -> y:(M,128) bf16 (sep-conv input), b0:(M,64) f32 (branch0)."""
    M, Cin = x2d.shape
    tm = _pick_tm(M)
    Mp = _round_up(M, tm)
    if Mp != M:
        x2d = jnp.pad(x2d, ((0, Mp - M), (0, 0)))
    y, b0 = pl.pallas_call(
        _head_kernel,
        out_shape=(jax.ShapeDtypeStruct((Mp, 128), jnp.bfloat16),
                   jax.ShapeDtypeStruct((Mp, 64), jnp.float32)),
        grid=(Mp // tm,),
        in_specs=[
            pl.BlockSpec((tm, Cin), lambda i: (i, 0)),
            pl.BlockSpec((Cin, 192), lambda i: (0, 0)),   # weight resident in VMEM
            pl.BlockSpec((1, 192), lambda i: (0, 0)),
        ],
        out_specs=[pl.BlockSpec((tm, 128), lambda i: (i, 0)),
                   pl.BlockSpec((tm, 64), lambda i: (i, 0))],
        compiler_params=pltpu.CompilerParams(dimension_semantics=("parallel",)),
    )(x2d, w, bias)
    if Mp != M:
        y, b0 = y[:M], b0[:M]
    return y, b0


def spatial_conv(y_fhwc, w9, bias):
    """y:(NT,H,W,128) bf16 -> (NT,H,W,256) bf16 (branch1|branch2 after the (1,3,3) conv)."""
    NT, H, W, Cin = y_fhwc.shape
    Cout = w9.shape[-1]
    fpb = 2 if (NT % 2 == 0 and NT >= 8) else 1     # >=4 grid steps at small NT
    # TODO(synk): handle the H/W halo inside the kernel (masked taps) to drop this pad pass.
    xp = jnp.pad(y_fhwc, ((0, 0), (1, 1), (1, 1), (0, 0)))      # bf16 zero pad
    return pl.pallas_call(
        _spatial_conv_kernel,
        out_shape=jax.ShapeDtypeStruct((NT, H, W, Cout), jnp.bfloat16),
        grid=(NT // fpb,),
        in_specs=[
            pl.BlockSpec((fpb, H + 2, W + 2, Cin), lambda i: (i, 0, 0, 0)),
            pl.BlockSpec((9, Cin, Cout), lambda i: (0, 0, 0)),
            pl.BlockSpec((1, Cout), lambda i: (0, 0)),
        ],
        out_specs=pl.BlockSpec((fpb, H, W, Cout), lambda i: (i, 0, 0, 0)),
        compiler_params=pltpu.CompilerParams(
            dimension_semantics=("parallel",), vmem_limit_bytes=_VMEM_BIG),
    )(xp, w9, bias)


def temporal_assemble(ys, b0, b3, w3, bias):
    """(3,1,1) conv on ys (K=256 -> 160) + final 256-channel assembly (b0|b1|b2|b3)."""
    N, T, H, W, Cs = ys.shape
    # TODO(synk): pull the T-halo into the kernel (masked end taps) to drop this pad pass.
    ysp = jnp.pad(ys, ((0, 0), (1, 1), (0, 0), (0, 0), (0, 0)))  # bf16 zero pad in T
    n_h = 4 if H % 4 == 0 else (2 if H % 2 == 0 else 1)
    th = H // n_h
    return pl.pallas_call(
        _temporal_assemble_kernel,
        out_shape=jax.ShapeDtypeStruct((N, T, H, W, 256), jnp.float32),
        grid=(N, n_h),
        in_specs=[
            pl.BlockSpec((1, T + 2, th, W, Cs), lambda n, j: (n, 0, j, 0, 0)),
            pl.BlockSpec((1, T, th, W, 64), lambda n, j: (n, 0, j, 0, 0)),
            pl.BlockSpec((1, T, th, W, 32), lambda n, j: (n, 0, j, 0, 0)),
            pl.BlockSpec((3, Cs, 160), lambda n, j: (0, 0, 0)),
            pl.BlockSpec((1, 160), lambda n, j: (0, 0)),
        ],
        out_specs=pl.BlockSpec((1, T, th, W, 256), lambda n, j: (n, 0, j, 0, 0)),
        compiler_params=pltpu.CompilerParams(
            dimension_semantics=("parallel", "parallel"),
            vmem_limit_bytes=_VMEM_BIG),
    )(ysp, b0, b3, w3, bias)


def maxpool_conv(x_bf, w, bias):
    """x:(N,T,H,W,192) bf16 -> maxpool3x3x3(s=1,p=1) -> 1x1 conv+BN+ReLU -> (N,T,H,W,32) f32."""
    N, T, H, W, C = x_bf.shape
    Cout = w.shape[-1]
    # TODO(synk): for large T*H*W (realistic I3D, v7x 64MiB VMEM), tile over T with a
    # 1-frame halo via memory_space=pl.ANY + manual async copies instead of one block/batch.
    xp = jnp.pad(x_bf, ((0, 0), (1, 1), (1, 1), (1, 1), (0, 0)),
                 constant_values=-jnp.inf)
    return pl.pallas_call(
        _pool_conv_kernel,
        out_shape=jax.ShapeDtypeStruct((N, T, H, W, Cout), jnp.float32),
        grid=(N,),
        in_specs=[
            pl.BlockSpec((1, T + 2, H + 2, W + 2, C), lambda n: (n, 0, 0, 0, 0)),
            pl.BlockSpec((C, Cout), lambda n: (0, 0)),
            pl.BlockSpec((1, Cout), lambda n: (0, 0)),
        ],
        out_specs=pl.BlockSpec((1, T, H, W, Cout), lambda n: (n, 0, 0, 0, 0)),
        compiler_params=pltpu.CompilerParams(
            dimension_semantics=("parallel",), vmem_limit_bytes=_VMEM_BIG),
    )(xp, w, bias)


# ---------------------------------------------------------------------------
# Parameter construction / BN folding / branch fusion
# ---------------------------------------------------------------------------
def init_conv_bn(key, cin, cout, kshape):
    """Deterministic synthetic Conv3d(bias=False) + BatchNorm3d parameters."""
    k1, k2, k3, k4, k5 = jax.random.split(key, 5)
    return dict(
        w=jax.random.normal(k1, (cout, cin) + kshape, jnp.float32) * 0.1,
        gamma=1.0 + 0.1 * jax.random.normal(k2, (cout,), jnp.float32),
        beta=0.1 * jax.random.normal(k3, (cout,), jnp.float32),
        mean=0.1 * jax.random.normal(k4, (cout,), jnp.float32),
        var=jax.random.uniform(k5, (cout,), jnp.float32, minval=0.5, maxval=1.5),
    )


def _fold_bn(p):
    scale = p["gamma"] / jnp.sqrt(p["var"] + EPS)
    return scale, p["beta"] - p["mean"] * scale


def prep_point(p):
    scale, bias = _fold_bn(p)
    w = p["w"][:, :, 0, 0, 0] * scale[:, None]            # (Cout, Cin), BN folded
    return jnp.transpose(w, (1, 0)), bias                 # (Cin, Cout)


def prep_spatial(p):
    scale, bias = _fold_bn(p)
    w = p["w"][:, :, 0] * scale[:, None, None, None]      # (Cout, Cin, 3, 3)
    cout, cin = w.shape[0], w.shape[1]
    wk = jnp.transpose(w, (2, 3, 1, 0)).reshape(9, cin, cout)   # (9, Cin, Cout), (dy,dx)
    return wk, bias


def prep_temporal(p):
    scale, bias = _fold_bn(p)
    w = p["w"][:, :, :, 0, 0] * scale[:, None, None]      # (Cout, Cin, 3)
    wk = jnp.transpose(w, (2, 1, 0))                      # (3, Cin, Cout), dt
    return wk, bias


def prepare_params(P):
    """Fold BN into weights, fuse/align branch heads and sep-convs, cast to bf16."""
    bf16 = jnp.bfloat16
    # fused 1x1x1 head, lane-aligned layout: [b1a(96) | b2a(16) | pad->128 | b0(64)]
    w1, c1 = prep_point(P["b1a"])                         # 192 -> 96
    w2, c2 = prep_point(P["b2a"])                         # 192 -> 16
    w0, c0 = prep_point(P["b0"])                          # 192 -> 64
    w_head = jnp.zeros((192, 192), jnp.float32)
    w_head = w_head.at[:, 0:96].set(w1).at[:, 96:112].set(w2).at[:, 128:192].set(w0)
    b_head = jnp.zeros((192,), jnp.float32)
    b_head = b_head.at[0:96].set(c1).at[96:112].set(c2).at[128:192].set(c0)

    # fused spatial (1,3,3): block-diag over [b1b: 96->128 | b2b: 16->32], padded to
    # Cin=128 / Cout=256 so both the input reshape and output store are lane-exact.
    wsa, csa = prep_spatial(P["b1b"])
    wsb, csb = prep_spatial(P["b2b"])
    w_sp = jnp.zeros((9, 128, 256), jnp.float32)
    w_sp = w_sp.at[:, 0:96, 0:128].set(wsa).at[:, 96:112, 128:160].set(wsb)
    b_sp = jnp.zeros((256,), jnp.float32)
    b_sp = b_sp.at[0:128].set(csa).at[128:160].set(csb)

    # fused temporal (3,1,1): K padded to 256, Cout=160 = [b1c 128 | b2c 32]
    wta, cta = prep_temporal(P["b1c"])
    wtb, ctb = prep_temporal(P["b2c"])
    w_tp = jnp.zeros((3, 256, 160), jnp.float32)
    w_tp = w_tp.at[:, 0:128, 0:128].set(wta).at[:, 128:160, 128:160].set(wtb)
    b_tp = jnp.concatenate([cta, ctb])

    # pool-branch 1x1x1 head: 192 -> 32
    w3, c3 = prep_point(P["b3"])

    return dict(
        w_head=w_head.astype(bf16), b_head=b_head.reshape(1, -1),
        w_sp=w_sp.astype(bf16), b_sp=b_sp.reshape(1, -1),
        w_tp=w_tp.astype(bf16), b_tp=b_tp.reshape(1, -1),
        w_pool=w3.astype(bf16), b_pool=c3.reshape(1, -1),
    )


# ---------------------------------------------------------------------------
# Mixed_3b forward
# ---------------------------------------------------------------------------
def mixed_3b(x_ncdhw, P):
    """x: (N,192,T,H,W) f32 -> (N,256,T,H,W) f32 (same semantics as the PyTorch module)."""
    Q = prepare_params(P)
    x = jnp.transpose(x_ncdhw, (0, 2, 3, 4, 1)).astype(jnp.bfloat16)   # NDHWC bf16
    N, T, H, W, C = x.shape
    M = N * T * H * W

    # fused 1x1x1 heads: one HBM read of x for branches 0/1/2
    y, b0 = fused_head(x.reshape(M, C), Q["w_head"], Q["b_head"])  # (M,128) bf16, (M,64) f32

    # branch1|branch2 separable conv, spatial part
    ys = spatial_conv(y.reshape(N * T, H, W, 128), Q["w_sp"], Q["b_sp"])   # (NT,H,W,256) bf16

    # branch3: fused separable max-pool + 1x1x1 conv
    b3 = maxpool_conv(x, Q["w_pool"], Q["b_pool"])                         # (N,T,H,W,32) f32

    # temporal part of the sep-conv, fused with the final channel-concat
    out = temporal_assemble(ys.reshape(N, T, H, W, 256),
                            b0.reshape(N, T, H, W, 64),
                            b3, Q["w_tp"], Q["b_tp"])                      # (N,T,H,W,256) f32

    # TODO(synk): skip this transpose and return NDHWC if the downstream consumer allows.
    return jnp.transpose(out, (0, 4, 1, 2, 3))


# ---------------------------------------------------------------------------
# Pure-JAX reference (lax conv / reduce_window) for a correctness check
# ---------------------------------------------------------------------------
def _ref_basic(x, p, pad):
    w = jnp.transpose(p["w"], (2, 3, 4, 1, 0))  # DHWIO
    y = lax.conv_general_dilated(
        x, w, (1, 1, 1),
        [(pad[0], pad[0]), (pad[1], pad[1]), (pad[2], pad[2])],
        dimension_numbers=("NDHWC", "DHWIO", "NDHWC"),
        precision=lax.Precision.HIGHEST)
    scale = p["gamma"] / jnp.sqrt(p["var"] + EPS)
    return jnp.maximum(y * scale + (p["beta"] - p["mean"] * scale), 0.0)


def ref_mixed_3b(x_ndhwc, P):
    b0 = _ref_basic(x_ndhwc, P["b0"], (0, 0, 0))
    b1 = _ref_basic(
        _ref_basic(_ref_basic(x_ndhwc, P["b1a"], (0, 0, 0)), P["b1b"], (0, 1, 1)),
        P["b1c"], (1, 0, 0))
    b2 = _ref_basic(
        _ref_basic(_ref_basic(x_ndhwc, P["b2a"], (0, 0, 0)), P["b2b"], (0, 1, 1)),
        P["b2c"], (1, 0, 0))
    pooled = lax.reduce_window(
        x_ndhwc, -jnp.inf, lax.max,
        (1, 3, 3, 3, 1), (1, 1, 1, 1, 1),
        [(0, 0), (1, 1), (1, 1), (1, 1), (0, 0)])
    b3 = _ref_basic(pooled, P["b3"], (0, 0, 0))
    return jnp.concatenate([b0, b1, b2, b3], axis=-1)


# ---------------------------------------------------------------------------
if __name__ == "__main__":
    key = jax.random.PRNGKey(0)
    keys = jax.random.split(key, 9)

    N, C, T, H, W = 1, 192, 4, 8, 8  # in-channels fixed to 192 by the module
    x = jax.random.normal(keys[0], (N, C, T, H, W), jnp.float32)

    P = {
        "b0":  init_conv_bn(keys[1], 192, 64, (1, 1, 1)),
        "b1a": init_conv_bn(keys[2], 192, 96, (1, 1, 1)),
        "b1b": init_conv_bn(keys[3], 96, 128, (1, 3, 3)),
        "b1c": init_conv_bn(keys[4], 128, 128, (3, 1, 1)),
        "b2a": init_conv_bn(keys[5], 192, 16, (1, 1, 1)),
        "b2b": init_conv_bn(keys[6], 16, 32, (1, 3, 3)),
        "b2c": init_conv_bn(keys[7], 32, 32, (3, 1, 1)),
        "b3":  init_conv_bn(keys[8], 192, 32, (1, 1, 1)),
    }

    fwd = jax.jit(mixed_3b)
    out = jax.block_until_ready(fwd(x, P))
    assert out.shape == (N, 256, T, H, W), out.shape

    ref = ref_mixed_3b(jnp.transpose(x, (0, 2, 3, 4, 1)), P)
    ref = jnp.transpose(ref, (0, 4, 1, 2, 3))
    abs_err = float(jnp.max(jnp.abs(out - ref)))
    rel_err = abs_err / (float(jnp.max(jnp.abs(ref))) + 1e-6)
    # bf16 matmul operands / bf16 intermediates (f32 accumulation): ~1e-3 rel-to-max error.
    assert rel_err < 2e-2, f"max abs err = {abs_err}, rel = {rel_err}"

    print("KERNEL_OK")
</pallas_src>

<mosaic_0001>
module attributes {stable_mosaic.version = 11 : i64} {
  func.func @_head_kernel(%arg0: i32, %arg1: memref<128x192xbf16, #tpu.memory_space<vmem>>, %arg2: memref<192x192xbf16, #tpu.memory_space<vmem>>, %arg3: memref<1x192xf32, #tpu.memory_space<vmem>>, %arg4: memref<128x128xbf16, #tpu.memory_space<vmem>>, %arg5: memref<128x64xf32, #tpu.memory_space<vmem>>) attributes {dimension_semantics = [#tpu.dimension_semantics<parallel>], iteration_bounds = array<i64: 2>, scalar_prefetch = 0 : i64, scratch_operands = 0 : i64, tpu.core_type = #tpu.core_type<tc>, window_params = [{transform_indices = @transform_0, window_bounds = array<i64: 128, 192>}, {pipeline_mode = #tpu.pipeline_mode<synchronous>, transform_indices = @transform_1, window_bounds = array<i64: 192, 192>}, {pipeline_mode = #tpu.pipeline_mode<synchronous>, transform_indices = @transform_2, window_bounds = array<i64: 1, 192>}, {transform_indices = @transform_3, window_bounds = array<i64: 128, 128>}, {transform_indices = @transform_4, window_bounds = array<i64: 128, 64>}]} {
    %c0 = arith.constant 0 : index
    %c0_0 = arith.constant 0 : index
    %0 = vector.load %arg1[%c0, %c0_0] : memref<128x192xbf16, #tpu.memory_space<vmem>>, vector<128x192xbf16>
    %c0_1 = arith.constant 0 : index
    %c0_2 = arith.constant 0 : index
    %1 = vector.load %arg2[%c0_1, %c0_2] : memref<192x192xbf16, #tpu.memory_space<vmem>>, vector<192x192xbf16>
    %cst = arith.constant dense<0.000000e+00> : vector<128x192xf32>
    %2 = tpu.matmul %0, %1, %cst {dimension_numbers = #tpu.dot_dimension_numbers<[1], [0], [0], [1], [0, 0, 1, 1], [], []>} : vector<128x192xbf16>, vector<192x192xbf16>, vector<128x192xf32> -> vector<128x192xf32>
    %c0_3 = arith.constant 0 : index
    %c0_4 = arith.constant 0 : index
    %3 = vector.load %arg3[%c0_3, %c0_4] : memref<1x192xf32, #tpu.memory_space<vmem>>, vector<1x192xf32>
    %4 = vector.broadcast %3 : vector<1x192xf32> to vector<128x192xf32>
    %5 = arith.addf %2, %4 : vector<128x192xf32>
    %cst_5 = arith.constant 0.000000e+00 : f32
    %6 = vector.broadcast %cst_5 : f32 to vector<128x192xf32>
    %7 = arith.maximumf %5, %6 : vector<128x192xf32>
    %8 = vector.extract_strided_slice %7 {offsets = [0, 0], sizes = [128, 128], strides = [1, 1]} : vector<128x192xf32> to vector<128x128xf32>
    %9 = arith.truncf %8 : vector<128x128xf32> to vector<128x128xbf16>
    %c0_6 = arith.constant 0 : index
    %c0_7 = arith.constant 0 : index
    %10 = vector.load %arg4[%c0_6, %c0_7] : memref<128x128xbf16, #tpu.memory_space<vmem>>, vector<128x128xbf16>
    tpu.vector_store %arg4[%c0_6, %c0_7], %9 {strides = array<i32>} : memref<128x128xbf16, #tpu.memory_space<vmem>>, vector<128x128xbf16>,
    %11 = vector.extract_strided_slice %7 {offsets = [0, 128], sizes = [128, 64], strides = [1, 1]} : vector<128x192xf32> to vector<128x64xf32>
    %c0_8 = arith.constant 0 : index
    %c0_9 = arith.constant 0 : index
    %12 = vector.load %arg5[%c0_8, %c0_9] : memref<128x64xf32, #tpu.memory_space<vmem>>, vector<128x64xf32>
    tpu.vector_store %arg5[%c0_8, %c0_9], %11 {strides = array<i32>} : memref<128x64xf32, #tpu.memory_space<vmem>>, vector<128x64xf32>,
    return
  }
  func.func @transform_0(%arg0: i32) -> (i32, i32) {
    %c0_i32 = arith.constant 0 : i32
    %c0_i32_0 = arith.constant 0 : i32
    return %arg0, %c0_i32 : i32, i32
  }
  func.func @transform_1(%arg0: i32) -> (i32, i32) {
    %c0_i32 = arith.constant 0 : i32
    %c0_i32_0 = arith.constant 0 : i32
    %c0_i32_1 = arith.constant 0 : i32
    return %c0_i32, %c0_i32_0 : i32, i32
  }
  func.func @transform_2(%arg0: i32) -> (i32, i32) {
    %c0_i32 = arith.constant 0 : i32
    %c0_i32_0 = arith.constant 0 : i32
    %c0_i32_1 = arith.constant 0 : i32
    return %c0_i32, %c0_i32_0 : i32, i32
  }
  func.func @transform_3(%arg0: i32) -> (i32, i32) {
    %c0_i32 = arith.constant 0 : i32
    %c0_i32_0 = arith.constant 0 : i32
    return %arg0, %c0_i32 : i32, i32
  }
  func.func @transform_4(%arg0: i32) -> (i32, i32) {
    %c0_i32 = arith.constant 0 : i32
    %c0_i32_0 = arith.constant 0 : i32
    return %arg0, %c0_i32 : i32, i32
  }
}

module attributes {stable_mosaic.version = 11 : i64} {
  func.func @_spatial_conv_kernel(%arg0: i32, %arg1: memref<1x10x10x128xbf16, #tpu.memory_space<vmem>>, %arg2: memref<9x128x256xbf16, #tpu.memory_space<vmem>>, %arg3: memref<1x256xf32, #tpu.memory_space<vmem>>, %arg4: memref<1x8x8x256xbf16, #tpu.memory_space<vmem>>) attributes {dimension_semantics = [#tpu.dimension_semantics<parallel>], iteration_bounds = array<i64: 4>, scalar_prefetch = 0 : i64, scratch_operands = 0 : i64, tpu.core_type = #tpu.core_type<tc>, window_params = [{transform_indices = @transform_0, window_bounds = array<i64: 1, 10, 10, 128>}, {pipeline_mode = #tpu.pipeline_mode<synchronous>, transform_indices = @transform_1, window_bounds = array<i64: 9, 128, 256>}, {pipeline_mode = #tpu.pipeline_mode<synchronous>, transform_indices = @transform_2, window_bounds = array<i64: 1, 256>}, {transform_indices = @transform_3, window_bounds = array<i64: 1, 8, 8, 256>}]} {
    %c0 = arith.constant 0 : index
    %c0_0 = arith.constant 0 : index
    %c0_1 = arith.constant 0 : index
    %c0_2 = arith.constant 0 : index
    %0 = vector.load %arg1[%c0, %c0_0, %c0_1, %c0_2] : memref<1x10x10x128xbf16, #tpu.memory_space<vmem>>, vector<1x10x10x128xbf16>
    %1 = vector.extract_strided_slice %0 {offsets = [0, 0, 0, 0], sizes = [1, 8, 8, 128], strides = [1, 1, 1, 1]} : vector<1x10x10x128xbf16> to vector<1x8x8x128xbf16>
    %2 = vector.shape_cast %1 : vector<1x8x8x128xbf16> to vector<64x128xbf16>
    %c0_3 = arith.constant 0 : index
    %c0_4 = arith.constant 0 : index
    %c0_5 = arith.constant 0 : index
    %3 = vector.load %arg2[%c0_3, %c0_4, %c0_5] : memref<9x128x256xbf16, #tpu.memory_space<vmem>>, vector<1x128x256xbf16>
    %4 = vector.shape_cast %3 : vector<1x128x256xbf16> to vector<128x256xbf16>
    %cst = arith.constant dense<0.000000e+00> : vector<64x256xf32>
    %5 = tpu.matmul %2, %4, %cst {dimension_numbers = #tpu.dot_dimension_numbers<[1], [0], [0], [1], [0, 0, 1, 1], [], []>} : vector<64x128xbf16>, vector<128x256xbf16>, vector<64x256xf32> -> vector<64x256xf32>
    %6 = vector.extract_strided_slice %0 {offsets = [0, 0, 1, 0], sizes = [1, 8, 8, 128], strides = [1, 1, 1, 1]} : vector<1x10x10x128xbf16> to vector<1x8x8x128xbf16>
    %7 = vector.shape_cast %6 : vector<1x8x8x128xbf16> to vector<64x128xbf16>
    %c1 = arith.constant 1 : index
    %c0_6 = arith.constant 0 : index
    %c0_7 = arith.constant 0 : index
    %8 = vector.load %arg2[%c1, %c0_6, %c0_7] : memref<9x128x256xbf16, #tpu.memory_space<vmem>>, vector<1x128x256xbf16>
    %9 = vector.shape_cast %8 : vector<1x128x256xbf16> to vector<128x256xbf16>
    %cst_8 = arith.constant dense<0.000000e+00> : vector<64x256xf32>
    %10 = tpu.matmul %7, %9, %cst_8 {dimension_numbers = #tpu.dot_dimension_numbers<[1], [0], [0], [1], [0, 0, 1, 1], [], []>} : vector<64x128xbf16>, vector<128x256xbf16>, vector<64x256xf32> -> vector<64x256xf32>
    %11 = arith.addf %5, %10 : vector<64x256xf32>
    %12 = vector.extract_strided_slice %0 {offsets = [0, 0, 2, 0], sizes = [1, 8, 8, 128], strides = [1, 1, 1, 1]} : vector<1x10x10x128xbf16> to vector<1x8x8x128xbf16>
    %13 = vector.shape_cast %12 : vector<1x8x8x128xbf16> to vector<64x128xbf16>
    %c2 = arith.constant 2 : index
    %c0_9 = arith.constant 0 : index
    %c0_10 = arith.constant 0 : index
    %14 = vector.load %arg2[%c2, %c0_9, %c0_10] : memref<9x128x256xbf16, #tpu.memory_space<vmem>>, vector<1x128x256xbf16>
    %15 = vector.shape_cast %14 : vector<1x128x256xbf16> to vector<128x256xbf16>
    %cst_11 = arith.constant dense<0.000000e+00> : vector<64x256xf32>
    %16 = tpu.matmul %13, %15, %cst_11 {dimension_numbers = #tpu.dot_dimension_numbers<[1], [0], [0], [1], [0, 0, 1, 1], [], []>} : vector<64x128xbf16>, vector<128x256xbf16>, vector<64x256xf32> -> vector<64x256xf32>
    %17 = arith.addf %11, %16 : vector<64x256xf32>
    %18 = vector.extract_strided_slice %0 {offsets = [0, 1, 0, 0], sizes = [1, 8, 8, 128], strides = [1, 1, 1, 1]} : vector<1x10x10x128xbf16> to vector<1x8x8x128xbf16>
    %19 = vector.shape_cast %18 : vector<1x8x8x128xbf16> to vector<64x128xbf16>
    %c3 = arith.constant 3 : index
    %c0_12 = arith.constant 0 : index
    %c0_13 = arith.constant 0 : index
    %20 = vector.load %arg2[%c3, %c0_12, %c0_13] : memref<9x128x256xbf16, #tpu.memory_space<vmem>>, vector<1x128x256xbf16>
    %21 = vector.shape_cast %20 : vector<1x128x256xbf16> to vector<128x256xbf16>
    %cst_14 = arith.constant dense<0.000000e+00> : vector<64x256xf32>
    %22 = tpu.matmul %19, %21, %cst_14 {dimension_numbers = #tpu.dot_dimension_numbers<[1], [0], [0], [1], [0, 0, 1, 1], [], []>} : vector<64x128xbf16>, vector<128x256xbf16>, vector<64x256xf32> -> vector<64x256xf32>
    %23 = arith.addf %17, %22 : vector<64x256xf32>
    %24 = vector.extract_strided_slice %0 {offsets = [0, 1, 1, 0], sizes = [1, 8, 8, 128], strides = [1, 1, 1, 1]} : vector<1x10x10x128xbf16> to vector<1x8x8x128xbf16>
    %25 = vector.shape_cast %24 : vector<1x8x8x128xbf16> to vector<64x128xbf16>
    %c4 = arith.constant 4 : index
    %c0_15 = arith.constant 0 : index
    %c0_16 = arith.constant 0 : index
    %26 = vector.load %arg2[%c4, %c0_15, %c0_16] : memref<9x128x256xbf16, #tpu.memory_space<vmem>>, vector<1x128x256xbf16>
    %27 = vector.shape_cast %26 : vector<1x128x256xbf16> to vector<128x256xbf16>
    %cst_17 = arith.constant dense<0.000000e+00> : vector<64x256xf32>
    %28 = tpu.matmul %25, %27, %cst_17 {dimension_numbers = #tpu.dot_dimension_numbers<[1], [0], [0], [1], [0, 0, 1, 1], [], []>} : vector<64x128xbf16>, vector<128x256xbf16>, vector<64x256xf32> -> vector<64x256xf32>
    %29 = arith.addf %23, %28 : vector<64x256xf32>
    %30 = vector.extract_strided_slice %0 {offsets = [0, 1, 2, 0], sizes = [1, 8, 8, 128], strides = [1, 1, 1, 1]} : vector<1x10x10x128xbf16> to vector<1x8x8x128xbf16>
    %31 = vector.shape_cast %30 : vector<1x8x8x128xbf16> to vector<64x128xbf16>
    %c5 = arith.constant 5 : index
    %c0_18 = arith.constant 0 : index
    %c0_19 = arith.constant 0 : index
    %32 = vector.load %arg2[%c5, %c0_18, %c0_19] : memref<9x128x256xbf16, #tpu.memory_space<vmem>>, vector<1x128x256xbf16>
    %33 = vector.shape_cast %32 : vector<1x128x256xbf16> to vector<128x256xbf16>
    %cst_20 = arith.constant dense<0.000000e+00> : vector<64x256xf32>
    %34 = tpu.matmul %31, %33, %cst_20 {dimension_numbers = #tpu.dot_dimension_numbers<[1], [0], [0], [1], [0, 0, 1, 1], [], []>} : vector<64x128xbf16>, vector<128x256xbf16>, vector<64x256xf32> -> vector<64x256xf32>
    %35 = arith.addf %29, %34 : vector<64x256xf32>
    %36 = vector.extract_strided_slice %0 {offsets = [0, 2, 0, 0], sizes = [1, 8, 8, 128], strides = [1, 1, 1, 1]} : vector<1x10x10x128xbf16> to vector<1x8x8x128xbf16>
    %37 = vector.shape_cast %36 : vector<1x8x8x128xbf16> to vector<64x128xbf16>
    %c6 = arith.constant 6 : index
    %c0_21 = arith.constant 0 : index
    %c0_22 = arith.constant 0 : index
    %38 = vector.load %arg2[%c6, %c0_21, %c0_22] : memref<9x128x256xbf16, #tpu.memory_space<vmem>>, vector<1x128x256xbf16>
    %39 = vector.shape_cast %38 : vector<1x128x256xbf16> to vector<128x256xbf16>
    %cst_23 = arith.constant dense<0.000000e+00> : vector<64x256xf32>
    %40 = tpu.matmul %37, %39, %cst_23 {dimension_numbers = #tpu.dot_dimension_numbers<[1], [0], [0], [1], [0, 0, 1, 1], [], []>} : vector<64x128xbf16>, vector<128x256xbf16>, vector<64x256xf32> -> vector<64x256xf32>
    %41 = arith.addf %35, %40 : vector<64x256xf32>
    %42 = vector.extract_strided_slice %0 {offsets = [0, 2, 1, 0], sizes = [1, 8, 8, 128], strides = [1, 1, 1, 1]} : vector<1x10x10x128xbf16> to vector<1x8x8x128xbf16>
    %43 = vector.shape_cast %42 : vector<1x8x8x128xbf16> to vector<64x128xbf16>
    %c7 = arith.constant 7 : index
    %c0_24 = arith.constant 0 : index
    %c0_25 = arith.constant 0 : index
    %44 = vector.load %arg2[%c7, %c0_24, %c0_25] : memref<9x128x256xbf16, #tpu.memory_space<vmem>>, vector<1x128x256xbf16>
    %45 = vector.shape_cast %44 : vector<1x128x256xbf16> to vector<128x256xbf16>
    %cst_26 = arith.constant dense<0.000000e+00> : vector<64x256xf32>
    %46 = tpu.matmul %43, %45, %cst_26 {dimension_numbers = #tpu.dot_dimension_numbers<[1], [0], [0], [1], [0, 0, 1, 1], [], []>} : vector<64x128xbf16>, vector<128x256xbf16>, vector<64x256xf32> -> vector<64x256xf32>
    %47 = arith.addf %41, %46 : vector<64x256xf32>
    %48 = vector.extract_strided_slice %0 {offsets = [0, 2, 2, 0], sizes = [1, 8, 8, 128], strides = [1, 1, 1, 1]} : vector<1x10x10x128xbf16> to vector<1x8x8x128xbf16>
    %49 = vector.shape_cast %48 : vector<1x8x8x128xbf16> to vector<64x128xbf16>
    %c8 = arith.constant 8 : index
    %c0_27 = arith.constant 0 : index
    %c0_28 = arith.constant 0 : index
    %50 = vector.load %arg2[%c8, %c0_27, %c0_28] : memref<9x128x256xbf16, #tpu.memory_space<vmem>>, vector<1x128x256xbf16>
    %51 = vector.shape_cast %50 : vector<1x128x256xbf16> to vector<128x256xbf16>
    %cst_29 = arith.constant dense<0.000000e+00> : vector<64x256xf32>
    %52 = tpu.matmul %49, %51, %cst_29 {dimension_numbers = #tpu.dot_dimension_numbers<[1], [0], [0], [1], [0, 0, 1, 1], [], []>} : vector<64x128xbf16>, vector<128x256xbf16>, vector<64x256xf32> -> vector<64x256xf32>
    %53 = arith.addf %47, %52 : vector<64x256xf32>
    %c0_30 = arith.constant 0 : index
    %c0_31 = arith.constant 0 : index
    %54 = vector.load %arg3[%c0_30, %c0_31] : memref<1x256xf32, #tpu.memory_space<vmem>>, vector<1x256xf32>
    %55 = vector.broadcast %54 : vector<1x256xf32> to vector<64x256xf32>
    %56 = arith.addf %53, %55 : vector<64x256xf32>
    %cst_32 = arith.constant 0.000000e+00 : f32
    %57 = vector.broadcast %cst_32 : f32 to vector<64x256xf32>
    %58 = arith.maximumf %56, %57 : vector<64x256xf32>
    %59 = vector.shape_cast %58 : vector<64x256xf32> to vector<1x8x8x256xf32>
    %60 = arith.truncf %59 : vector<1x8x8x256xf32> to vector<1x8x8x256xbf16>
    %c0_33 = arith.constant 0 : index
    %c0_34 = arith.constant 0 : index
    %c0_35 = arith.constant 0 : index
    %c0_36 = arith.constant 0 : index
    %61 = vector.load %arg4[%c0_33, %c0_34, %c0_35, %c0_36] : memref<1x8x8x256xbf16, #tpu.memory_space<vmem>>, vector<1x8x8x256xbf16>
    tpu.vector_store %arg4[%c0_33, %c0_34, %c0_35, %c0_36], %60 {strides = array<i32>} : memref<1x8x8x256xbf16, #tpu.memory_space<vmem>>, vector<1x8x8x256xbf16>,
    return
  }
  func.func @transform_0(%arg0: i32) -> (i32, i32, i32, i32) {
    %c0_i32 = arith.constant 0 : i32
    %c0_i32_0 = arith.constant 0 : i32
    %c0_i32_1 = arith.constant 0 : i32
    %c0_i32_2 = arith.constant 0 : i32
    return %arg0, %c0_i32, %c0_i32_0, %c0_i32_1 : i32, i32, i32, i32
  }
  func.func @transform_1(%arg0: i32) -> (i32, i32, i32) {
    %c0_i32 = arith.constant 0 : i32
    %c0_i32_0 = arith.constant 0 : i32
    %c0_i32_1 = arith.constant 0 : i32
    %c0_i32_2 = arith.constant 0 : i32
    return %c0_i32, %c0_i32_0, %c0_i32_1 : i32, i32, i32
  }
  func.func @transform_2(%arg0: i32) -> (i32, i32) {
    %c0_i32 = arith.constant 0 : i32
    %c0_i32_0 = arith.constant 0 : i32
    %c0_i32_1 = arith.constant 0 : i32
    return %c0_i32, %c0_i32_0 : i32, i32
  }
  func.func @transform_3(%arg0: i32) -> (i32, i32, i32, i32) {
    %c0_i32 = arith.constant 0 : i32
    %c0_i32_0 = arith.constant 0 : i32
    %c0_i32_1 = arith.constant 0 : i32
    %c0_i32_2 = arith.constant 0 : i32
    return %arg0, %c0_i32, %c0_i32_0, %c0_i32_1 : i32, i32, i32, i32
  }
}

module attributes {stable_mosaic.version = 11 : i64} {
  func.func @_pool_conv_kernel(%arg0: i32, %arg1: memref<1x6x10x10x192xbf16, #tpu.memory_space<vmem>>, %arg2: memref<192x32xbf16, #tpu.memory_space<vmem>>, %arg3: memref<1x32xf32, #tpu.memory_space<vmem>>, %arg4: memref<1x4x8x8x32xf32, #tpu.memory_space<vmem>>) attributes {dimension_semantics = [#tpu.dimension_semantics<parallel>], iteration_bounds = array<i64: 1>, scalar_prefetch = 0 : i64, scratch_operands = 0 : i64, tpu.core_type = #tpu.core_type<tc>, window_params = [{transform_indices = @transform_0, window_bounds = array<i64: 1, 6, 10, 10, 192>}, {pipeline_mode = #tpu.pipeline_mode<synchronous>, transform_indices = @transform_1, window_bounds = array<i64: 192, 32>}, {pipeline_mode = #tpu.pipeline_mode<synchronous>, transform_indices = @transform_2, window_bounds = array<i64: 1, 32>}, {transform_indices = @transform_3, window_bounds = array<i64: 1, 4, 8, 8, 32>}]} {
    %c0 = arith.constant 0 : index
    %c0_0 = arith.constant 0 : index
    %c0_1 = arith.constant 0 : index
    %c0_2 = arith.constant 0 : index
    %c0_3 = arith.constant 0 : index
    %0 = vector.load %arg1[%c0, %c0_0, %c0_1, %c0_2, %c0_3] : memref<1x6x10x10x192xbf16, #tpu.memory_space<vmem>>, vector<1x6x10x10x192xbf16>
    %1 = vector.extract_strided_slice %0 {offsets = [0, 0, 0, 0, 0], sizes = [1, 4, 10, 10, 192], strides = [1, 1, 1, 1, 1]} : vector<1x6x10x10x192xbf16> to vector<1x4x10x10x192xbf16>
    %2 = vector.extract_strided_slice %0 {offsets = [0, 1, 0, 0, 0], sizes = [1, 4, 10, 10, 192], strides = [1, 1, 1, 1, 1]} : vector<1x6x10x10x192xbf16> to vector<1x4x10x10x192xbf16>
    %3 = arith.maximumf %1, %2 : vector<1x4x10x10x192xbf16>
    %4 = vector.extract_strided_slice %0 {offsets = [0, 2, 0, 0, 0], sizes = [1, 4, 10, 10, 192], strides = [1, 1, 1, 1, 1]} : vector<1x6x10x10x192xbf16> to vector<1x4x10x10x192xbf16>
    %5 = arith.maximumf %3, %4 : vector<1x4x10x10x192xbf16>
    %6 = vector.extract_strided_slice %5 {offsets = [0, 0, 0, 0, 0], sizes = [1, 4, 8, 10, 192], strides = [1, 1, 1, 1, 1]} : vector<1x4x10x10x192xbf16> to vector<1x4x8x10x192xbf16>
    %7 = vector.extract_strided_slice %5 {offsets = [0, 0, 1, 0, 0], sizes = [1, 4, 8, 10, 192], strides = [1, 1, 1, 1, 1]} : vector<1x4x10x10x192xbf16> to vector<1x4x8x10x192xbf16>
    %8 = arith.maximumf %6, %7 : vector<1x4x8x10x192xbf16>
    %9 = vector.extract_strided_slice %5 {offsets = [0, 0, 2, 0, 0], sizes = [1, 4, 8, 10, 192], strides = [1, 1, 1, 1, 1]} : vector<1x4x10x10x192xbf16> to vector<1x4x8x10x192xbf16>
    %10 = arith.maximumf %8, %9 : vector<1x4x8x10x192xbf16>
    %11 = vector.extract_strided_slice %10 {offsets = [0, 0, 0, 0, 0], sizes = [1, 4, 8, 8, 192], strides = [1, 1, 1, 1, 1]} : vector<1x4x8x10x192xbf16> to vector<1x4x8x8x192xbf16>
    %12 = vector.extract_strided_slice %10 {offsets = [0, 0, 0, 1, 0], sizes = [1, 4, 8, 8, 192], strides = [1, 1, 1, 1, 1]} : vector<1x4x8x10x192xbf16> to vector<1x4x8x8x192xbf16>
    %13 = arith.maximumf %11, %12 : vector<1x4x8x8x192xbf16>
    %14 = vector.extract_strided_slice %10 {offsets = [0, 0, 0, 2, 0], sizes = [1, 4, 8, 8, 192], strides = [1, 1, 1, 1, 1]} : vector<1x4x8x10x192xbf16> to vector<1x4x8x8x192xbf16>
    %15 = arith.maximumf %13, %14 : vector<1x4x8x8x192xbf16>
    %16 = vector.shape_cast %15 : vector<1x4x8x8x192xbf16> to vector<256x192xbf16>
    %c0_4 = arith.constant 0 : index
    %c0_5 = arith.constant 0 : index
    %17 = vector.load %arg2[%c0_4, %c0_5] : memref<192x32xbf16, #tpu.memory_space<vmem>>, vector<192x32xbf16>
    %cst = arith.constant dense<0.000000e+00> : vector<256x32xf32>
    %18 = tpu.matmul %16, %17, %cst {dimension_numbers = #tpu.dot_dimension_numbers<[1], [0], [0], [1], [0, 0, 1, 1], [], []>} : vector<256x192xbf16>, vector<192x32xbf16>, vector<256x32xf32> -> vector<256x32xf32>
    %c0_6 = arith.constant 0 : index
    %c0_7 = arith.constant 0 : index
    %19 = vector.load %arg3[%c0_6, %c0_7] : memref<1x32xf32, #tpu.memory_space<vmem>>, vector<1x32xf32>
    %20 = vector.broadcast %19 : vector<1x32xf32> to vector<256x32xf32>
    %21 = arith.addf %18, %20 : vector<256x32xf32>
    %cst_8 = arith.constant 0.000000e+00 : f32
    %22 = vector.broadcast %cst_8 : f32 to vector<256x32xf32>
    %23 = arith.maximumf %21, %22 : vector<256x32xf32>
    %24 = vector.shape_cast %23 : vector<256x32xf32> to vector<1x4x8x8x32xf32>
    %c0_9 = arith.constant 0 : index
    %c0_10 = arith.constant 0 : index
    %c0_11 = arith.constant 0 : index
    %c0_12 = arith.constant 0 : index
    %c0_13 = arith.constant 0 : index
    %25 = vector.load %arg4[%c0_9, %c0_10, %c0_11, %c0_12, %c0_13] : memref<1x4x8x8x32xf32, #tpu.memory_space<vmem>>, vector<1x4x8x8x32xf32>
    tpu.vector_store %arg4[%c0_9, %c0_10, %c0_11, %c0_12, %c0_13], %24 {strides = array<i32>} : memref<1x4x8x8x32xf32, #tpu.memory_space<vmem>>, vector<1x4x8x8x32xf32>,
    return
  }
  func.func @transform_0(%arg0: i32) -> (i32, i32, i32, i32, i32) {
    %c0_i32 = arith.constant 0 : i32
    %c0_i32_0 = arith.constant 0 : i32
    %c0_i32_1 = arith.constant 0 : i32
    %c0_i32_2 = arith.constant 0 : i32
    %c0_i32_3 = arith.constant 0 : i32
    return %arg0, %c0_i32, %c0_i32_0, %c0_i32_1, %c0_i32_2 : i32, i32, i32, i32, i32
  }
  func.func @transform_1(%arg0: i32) -> (i32, i32) {
    %c0_i32 = arith.constant 0 : i32
    %c0_i32_0 = arith.constant 0 : i32
    %c0_i32_1 = arith.constant 0 : i32
    return %c0_i32, %c0_i32_0 : i32, i32
  }
  func.func @transform_2(%arg0: i32) -> (i32, i32) {
    %c0_i32 = arith.constant 0 : i32
    %c0_i32_0 = arith.constant 0 : i32
    %c0_i32_1 = arith.constant 0 : i32
    return %c0_i32, %c0_i32_0 : i32, i32
  }
  func.func @transform_3(%arg0: i32) -> (i32, i32, i32, i32, i32) {
    %c0_i32 = arith.constant 0 : i32
    %c0_i32_0 = arith.constant 0 : i32
    %c0_i32_1 = arith.constant 0 : i32
    %c0_i32_2 = arith.constant 0 : i32
    %c0_i32_3 = arith.constant 0 : i32
    return %arg0, %c0_i32, %c0_i32_0, %c0_i32_1, %c0_i32_2 : i32, i32, i32, i32, i32
  }
}

module attributes {stable_mosaic.version = 11 : i64} {
  func.func @_temporal_assemble_kernel(%arg0: i32, %arg1: i32, %arg2: memref<1x6x2x8x256xbf16, #tpu.memory_space<vmem>>, %arg3: memref<1x4x2x8x64xf32, #tpu.memory_space<vmem>>, %arg4: memref<1x4x2x8x32xf32, #tpu.memory_space<vmem>>, %arg5: memref<3x256x160xbf16, #tpu.memory_space<vmem>>, %arg6: memref<1x160xf32, #tpu.memory_space<vmem>>, %arg7: memref<1x4x2x8x256xf32, #tpu.memory_space<vmem>>) attributes {dimension_semantics = [#tpu.dimension_semantics<parallel>, #tpu.dimension_semantics<parallel>], iteration_bounds = array<i64: 1, 4>, scalar_prefetch = 0 : i64, scratch_operands = 0 : i64, tpu.core_type = #tpu.core_type<tc>, window_params = [{transform_indices = @transform_0, window_bounds = array<i64: 1, 6, 2, 8, 256>}, {transform_indices = @transform_1, window_bounds = array<i64: 1, 4, 2, 8, 64>}, {transform_indices = @transform_2, window_bounds = array<i64: 1, 4, 2, 8, 32>}, {pipeline_mode = #tpu.pipeline_mode<synchronous>, transform_indices = @transform_3, window_bounds = array<i64: 3, 256, 160>}, {pipeline_mode = #tpu.pipeline_mode<synchronous>, transform_indices = @transform_4, window_bounds = array<i64: 1, 160>}, {transform_indices = @transform_5, window_bounds = array<i64: 1, 4, 2, 8, 256>}]} {
    %c0 = arith.constant 0 : index
    %c0_0 = arith.constant 0 : index
    %c0_1 = arith.constant 0 : index
    %c0_2 = arith.constant 0 : index
    %c0_3 = arith.constant 0 : index
    %0 = vector.load %arg2[%c0, %c0_0, %c0_1, %c0_2, %c0_3] : memref<1x6x2x8x256xbf16, #tpu.memory_space<vmem>>, vector<1x6x2x8x256xbf16>
    %1 = vector.extract_strided_slice %0 {offsets = [0, 0, 0, 0, 0], sizes = [1, 4, 2, 8, 256], strides = [1, 1, 1, 1, 1]} : vector<1x6x2x8x256xbf16> to vector<1x4x2x8x256xbf16>
    %2 = vector.shape_cast %1 : vector<1x4x2x8x256xbf16> to vector<64x256xbf16>
    %c0_4 = arith.constant 0 : index
    %c0_5 = arith.constant 0 : index
    %c0_6 = arith.constant 0 : index
    %3 = vector.load %arg5[%c0_4, %c0_5, %c0_6] : memref<3x256x160xbf16, #tpu.memory_space<vmem>>, vector<1x256x160xbf16>
    %4 = vector.shape_cast %3 : vector<1x256x160xbf16> to vector<256x160xbf16>
    %cst = arith.constant dense<0.000000e+00> : vector<64x160xf32>
    %5 = tpu.matmul %2, %4, %cst {dimension_numbers = #tpu.dot_dimension_numbers<[1], [0], [0], [1], [0, 0, 1, 1], [], []>} : vector<64x256xbf16>, vector<256x160xbf16>, vector<64x160xf32> -> vector<64x160xf32>
    %6 = vector.extract_strided_slice %0 {offsets = [0, 1, 0, 0, 0], sizes = [1, 4, 2, 8, 256], strides = [1, 1, 1, 1, 1]} : vector<1x6x2x8x256xbf16> to vector<1x4x2x8x256xbf16>
    %7 = vector.shape_cast %6 : vector<1x4x2x8x256xbf16> to vector<64x256xbf16>
    %c1 = arith.constant 1 : index
    %c0_7 = arith.constant 0 : index
    %c0_8 = arith.constant 0 : index
    %8 = vector.load %arg5[%c1, %c0_7, %c0_8] : memref<3x256x160xbf16, #tpu.memory_space<vmem>>, vector<1x256x160xbf16>
    %9 = vector.shape_cast %8 : vector<1x256x160xbf16> to vector<256x160xbf16>
    %cst_9 = arith.constant dense<0.000000e+00> : vector<64x160xf32>
    %10 = tpu.matmul %7, %9, %cst_9 {dimension_numbers = #tpu.dot_dimension_numbers<[1], [0], [0], [1], [0, 0, 1, 1], [], []>} : vector<64x256xbf16>, vector<256x160xbf16>, vector<64x160xf32> -> vector<64x160xf32>
    %11 = arith.addf %5, %10 : vector<64x160xf32>
    %12 = vector.extract_strided_slice %0 {offsets = [0, 2, 0, 0, 0], sizes = [1, 4, 2, 8, 256], strides = [1, 1, 1, 1, 1]} : vector<1x6x2x8x256xbf16> to vector<1x4x2x8x256xbf16>
    %13 = vector.shape_cast %12 : vector<1x4x2x8x256xbf16> to vector<64x256xbf16>
    %c2 = arith.constant 2 : index
    %c0_10 = arith.constant 0 : index
    %c0_11 = arith.constant 0 : index
    %14 = vector.load %arg5[%c2, %c0_10, %c0_11] : memref<3x256x160xbf16, #tpu.memory_space<vmem>>, vector<1x256x160xbf16>
    %15 = vector.shape_cast %14 : vector<1x256x160xbf16> to vector<256x160xbf16>
    %cst_12 = arith.constant dense<0.000000e+00> : vector<64x160xf32>
    %16 = tpu.matmul %13, %15, %cst_12 {dimension_numbers = #tpu.dot_dimension_numbers<[1], [0], [0], [1], [0, 0, 1, 1], [], []>} : vector<64x256xbf16>, vector<256x160xbf16>, vector<64x160xf32> -> vector<64x160xf32>
    %17 = arith.addf %11, %16 : vector<64x160xf32>
    %c0_13 = arith.constant 0 : index
    %c0_14 = arith.constant 0 : index
    %18 = vector.load %arg6[%c0_13, %c0_14] : memref<1x160xf32, #tpu.memory_space<vmem>>, vector<1x160xf32>
    %19 = vector.broadcast %18 : vector<1x160xf32> to vector<64x160xf32>
    %20 = arith.addf %17, %19 : vector<64x160xf32>
    %cst_15 = arith.constant 0.000000e+00 : f32
    %21 = vector.broadcast %cst_15 : f32 to vector<64x160xf32>
    %22 = arith.maximumf %20, %21 : vector<64x160xf32>
    %23 = vector.shape_cast %22 : vector<64x160xf32> to vector<1x4x2x8x160xf32>
    %c0_16 = arith.constant 0 : index
    %c0_17 = arith.constant 0 : index
    %c0_18 = arith.constant 0 : index
    %c0_19 = arith.constant 0 : index
    %c0_20 = arith.constant 0 : index
    %24 = vector.load %arg3[%c0_16, %c0_17, %c0_18, %c0_19, %c0_20] : memref<1x4x2x8x64xf32, #tpu.memory_space<vmem>>, vector<1x4x2x8x64xf32>
    %c0_21 = arith.constant 0 : index
    %c0_22 = arith.constant 0 : index
    %c0_23 = arith.constant 0 : index
    %c0_24 = arith.constant 0 : index
    %c0_25 = arith.constant 0 : index
    %25 = vector.load %arg7[%c0_21, %c0_22, %c0_23, %c0_24, %c0_25] : memref<1x4x2x8x256xf32, #tpu.memory_space<vmem>>, vector<1x4x2x8x64xf32>
    tpu.vector_store %arg7[%c0_21, %c0_22, %c0_23, %c0_24, %c0_25], %24 {strides = array<i32>} : memref<1x4x2x8x256xf32, #tpu.memory_space<vmem>>, vector<1x4x2x8x64xf32>,
    %c0_26 = arith.constant 0 : index
    %c0_27 = arith.constant 0 : index
    %c0_28 = arith.constant 0 : index
    %c0_29 = arith.constant 0 : index
    %c64 = arith.constant 64 : index
    %26 = vector.load %arg7[%c0_26, %c0_27, %c0_28, %c0_29, %c64] : memref<1x4x2x8x256xf32, #tpu.memory_space<vmem>>, vector<1x4x2x8x160xf32>
    tpu.vector_store %arg7[%c0_26, %c0_27, %c0_28, %c0_29, %c64], %23 {strides = array<i32>} : memref<1x4x2x8x256xf32, #tpu.memory_space<vmem>>, vector<1x4x2x8x160xf32>,
    %c0_30 = arith.constant 0 : index
    %c0_31 = arith.constant 0 : index
    %c0_32 = arith.constant 0 : index
    %c0_33 = arith.constant 0 : index
    %c0_34 = arith.constant 0 : index
    %27 = vector.load %arg4[%c0_30, %c0_31, %c0_32, %c0_33, %c0_34] : memref<1x4x2x8x32xf32, #tpu.memory_space<vmem>>, vector<1x4x2x8x32xf32>
    %c0_35 = arith.constant 0 : index
    %c0_36 = arith.constant 0 : index
    %c0_37 = arith.constant 0 : index
    %c0_38 = arith.constant 0 : index
    %c224 = arith.constant 224 : index
    %28 = vector.load %arg7[%c0_35, %c0_36, %c0_37, %c0_38, %c224] : memref<1x4x2x8x256xf32, #tpu.memory_space<vmem>>, vector<1x4x2x8x32xf32>
    tpu.vector_store %arg7[%c0_35, %c0_36, %c0_37, %c0_38, %c224], %27 {strides = array<i32>} : memref<1x4x2x8x256xf32, #tpu.memory_space<vmem>>, vector<1x4x2x8x32xf32>,
    return
  }
  func.func @transform_0(%arg0: i32, %arg1: i32) -> (i32, i32, i32, i32, i32) {
    %c0_i32 = arith.constant 0 : i32
    %c0_i32_0 = arith.constant 0 : i32
    %c0_i32_1 = arith.constant 0 : i32
    %c0_i32_2 = arith.constant 0 : i32
    return %arg0, %c0_i32, %arg1, %c0_i32_0, %c0_i32_1 : i32, i32, i32, i32, i32
  }
  func.func @transform_1(%arg0: i32, %arg1: i32) -> (i32, i32, i32, i32, i32) {
    %c0_i32 = arith.constant 0 : i32
    %c0_i32_0 = arith.constant 0 : i32
    %c0_i32_1 = arith.constant 0 : i32
    %c0_i32_2 = arith.constant 0 : i32
    return %arg0, %c0_i32, %arg1, %c0_i32_0, %c0_i32_1 : i32, i32, i32, i32, i32
  }
  func.func @transform_2(%arg0: i32, %arg1: i32) -> (i32, i32, i32, i32, i32) {
    %c0_i32 = arith.constant 0 : i32
    %c0_i32_0 = arith.constant 0 : i32
    %c0_i32_1 = arith.constant 0 : i32
    %c0_i32_2 = arith.constant 0 : i32
    return %arg0, %c0_i32, %arg1, %c0_i32_0, %c0_i32_1 : i32, i32, i32, i32, i32
  }
  func.func @transform_3(%arg0: i32, %arg1: i32) -> (i32, i32, i32) {
    %c0_i32 = arith.constant 0 : i32
    %c0_i32_0 = arith.constant 0 : i32
    %c0_i32_1 = arith.constant 0 : i32
    %c0_i32_2 = arith.constant 0 : i32
    return %c0_i32, %c0_i32_0, %c0_i32_1 : i32, i32, i32
  }
  func.func @transform_4(%arg0: i32, %arg1: i32) -> (i32, i32) {
    %c0_i32 = arith.constant 0 : i32
    %c0_i32_0 = arith.constant 0 : i32
    %c0_i32_1 = arith.constant 0 : i32
    return %c0_i32, %c0_i32_0 : i32, i32
  }
  func.func @transform_5(%arg0: i32, %arg1: i32) -> (i32, i32, i32, i32, i32) {
    %c0_i32 = arith.constant 0 : i32
    %c0_i32_0 = arith.constant 0 : i32
    %c0_i32_1 = arith.constant 0 : i32
    %c0_i32_2 = arith.constant 0 : i32
    return %arg0, %c0_i32, %arg1, %c0_i32_0, %c0_i32_1 : i32, i32, i32, i32, i32
  }
}

</mosaic_0001>

<llo_original>
// kernel: mixed_3b.4
$region0: #{mixed_3b.4}
  #allocation0 [shape = 'u32[]', space=smem, size = 0x4, offset = 0x4, fixed_abs, tag = 'smem constant byte address 0x4 - core index']
  #allocation1 [shape = 'u32[144,128]{1,0:T(1,128)}', space=vmem, size = 0x12000, scoped, tag = 'internal scratch']
  %s0 = inlined_call_operand.vmem [shape: bf16[256,192], index: 0, kind: input, shape index: {}]
  %s1 = inlined_call_operand.vmem [shape: bf16[192,192], index: 1, kind: input, shape index: {}]
  %s2 = inlined_call_operand.vmem [shape: f32[1,192], index: 2, kind: input, shape index: {}]
  %s3 = inlined_call_operand.vmem [shape: bf16[256,128], index: 3, kind: output, shape index: {0}]
  %s4 = inlined_call_operand.vmem [shape: f32[256,64], index: 4, kind: output, shape index: {1}]
  %5 = xla_tuple %s3, %s4
  %s6 = sld [smem:[#allocation0]]
  $region53: #{mixed_3b.4} parent=0
    _
  %s8 = ssub.s32 1, %s6
  %s9 = scalar_select 0, %s8, %s6
  loop: start=0, step=1, limit=4
  $region2: #{mixed_3b.4} parent=0 // loop_pre_header
    _
  $region3: #{mixed_3b.4} parent=0 // loop_header
    %s11 = sphi 0, %s15
    %p12 = scmp.ge.s32.totalorder %s11, 4
    %s21 = sphi 0, %s23
    %s24 = sphi 0, %s21
    %s25 = sphi 0, %s24
    %s41 = sphi 0, %s25
    %s45 = sphi 0, %s45
    %s47 = sphi 0, %s45
    %s48 = sphi 0, %s47
    %s62 = sphi 0, %s48
    %s66 = sphi 0, %s66
    %s68 = sphi 0, %s66
    %s69 = sphi 0, %s68
    %s83 = sphi 0, %s69
    %s89 = sphi 0, %s91
    %s92 = sphi 0, %s89
    %s93 = sphi 0, %s92
    %s109 = sphi 0, %s93
    %s115 = sphi 0, %s117
    %s118 = sphi 0, %s115
    %s119 = sphi 0, %s118
    %s135 = sphi 0, %s119
  $region4: #{mixed_3b.4} parent=0 // loop_header_branch
    %14 = sbr.rel (%p12) target = $region8
  $region5: #{mixed_3b.4} parent=0 // loop_body
    %s16 = ssub.s32 %s11, 1
    %s17 = ssub.s32 %s11, 2
    %s18 = sadd.s32 %s11, 1
    %s19 = ssub.s32 %s11, %s18
    %p20 = scmp.eq.s32.totalorder %s19, 0
    %s22 = sadd.s32 %s21, 1
    %s23 = scalar_select %p20, %s21, %s22
    %p26 = pneg %p20
    %p27 = scmp.eq.s32.totalorder %s11, 1
    %p28 = por %p26, %p27
    %p29 = scmp.ne.s32.totalorder %s21, %s24
    %p30 = scmp.eq.s32.totalorder %s11, 0
    %p31 = por %p29, %p30
    %p32 = scmp.ne.s32.totalorder %s21, %s24
    %p33 = scmp.eq.s32.totalorder %s16, 1
    %p34 = por %p32, %p33
    %p35 = scmp.ne.s32.totalorder %s24, %s25
    %p36 = scmp.eq.s32.totalorder %s16, 0
    %p37 = por %p35, %p36
    %p38 = scmp.ne.s32.totalorder %s24, %s25
    %p39 = scmp.eq.s32.totalorder %s17, 1
    %p40 = por %p38, %p39
    %p42 = scmp.ne.s32.totalorder %s25, %s41
    %p43 = scmp.eq.s32.totalorder %s17, 0
    %p44 = por %p42, %p43
    %s46 = sadd.s32 %s45, 1
    %p49 = scmp.eq.s32.totalorder %s11, 1
    %p50 = scmp.ne.s32.totalorder %s45, %s47
    %p51 = scmp.eq.s32.totalorder %s11, 0
    %p52 = por %p50, %p51
    %p53 = scmp.ne.s32.totalorder %s45, %s47
    %p54 = scmp.eq.s32.totalorder %s16, 1
    %p55 = por %p53, %p54
    %p56 = scmp.ne.s32.totalorder %s47, %s48
    %p57 = scmp.eq.s32.totalorder %s16, 0
    %p58 = por %p56, %p57
    %p59 = scmp.ne.s32.totalorder %s47, %s48
    %p60 = scmp.eq.s32.totalorder %s17, 1
    %p61 = por %p59, %p60
    %p63 = scmp.ne.s32.totalorder %s48, %s62
    %p64 = scmp.eq.s32.totalorder %s17, 0
    %p65 = por %p63, %p64
    %s67 = sadd.s32 %s66, 1
    %p70 = scmp.eq.s32.totalorder %s11, 1
    %p71 = scmp.ne.s32.totalorder %s66, %s68
    %p72 = scmp.eq.s32.totalorder %s11, 0
    %p73 = por %p71, %p72
    %p74 = scmp.ne.s32.totalorder %s66, %s68
    %p75 = scmp.eq.s32.totalorder %s16, 1
    %p76 = por %p74, %p75
    %p77 = scmp.ne.s32.totalorder %s68, %s69
    %p78 = scmp.eq.s32.totalorder %s16, 0
    %p79 = por %p77, %p78
    %p80 = scmp.ne.s32.totalorder %s68, %s69
    %p81 = scmp.eq.s32.totalorder %s17, 1
    %p82 = por %p80, %p81
    %p84 = scmp.ne.s32.totalorder %s69, %s83
    %p85 = scmp.eq.s32.totalorder %s17, 0
    %p86 = por %p84, %p85
    %s87 = ssub.s32 %s11, %s18
    %p88 = scmp.eq.s32.totalorder %s87, 0
    %s90 = sadd.s32 %s89, 1
    %s91 = scalar_select %p88, %s89, %s90
    %p94 = pneg %p88
    %p95 = scmp.eq.s32.totalorder %s11, 1
    %p96 = por %p94, %p95
    %p97 = scmp.ne.s32.totalorder %s89, %s92
    %p98 = scmp.eq.s32.totalorder %s11, 0
    %p99 = por %p97, %p98
    %p100 = scmp.ne.s32.totalorder %s89, %s92
    %p101 = scmp.eq.s32.totalorder %s16, 1
    %p102 = por %p100, %p101
    %p103 = scmp.ne.s32.totalorder %s92, %s93
    %p104 = scmp.eq.s32.totalorder %s16, 0
    %p105 = por %p103, %p104
    %p106 = scmp.ne.s32.totalorder %s92, %s93
    %p107 = scmp.eq.s32.totalorder %s17, 1
    %p108 = por %p106, %p107
    %p110 = scmp.ne.s32.totalorder %s93, %s109
    %p111 = scmp.eq.s32.totalorder %s17, 0
    %p112 = por %p110, %p111
    %s113 = ssub.s32 %s11, %s18
    %p114 = scmp.eq.s32.totalorder %s113, 0
    %s116 = sadd.s32 %s115, 1
    %s117 = scalar_select %p114, %s115, %s116
    %p120 = pneg %p114
    %p121 = scmp.eq.s32.totalorder %s11, 1
    %p122 = por %p120, %p121
    %p123 = scmp.ne.s32.totalorder %s115, %s118
    %p124 = scmp.eq.s32.totalorder %s11, 0
    %p125 = por %p123, %p124
    %p126 = scmp.ne.s32.totalorder %s115, %s118
    %p127 = scmp.eq.s32.totalorder %s16, 1
    %p128 = por %p126, %p127
    %p129 = scmp.ne.s32.totalorder %s118, %s119
    %p130 = scmp.eq.s32.totalorder %s16, 0
    %p131 = por %p129, %p130
    %p132 = scmp.ne.s32.totalorder %s118, %s119
    %p133 = scmp.eq.s32.totalorder %s17, 1
    %p134 = por %p132, %p133
    %p136 = scmp.ne.s32.totalorder %s119, %s135
    %p137 = scmp.eq.s32.totalorder %s17, 0
    %p138 = por %p136, %p137
    %p139 = scmp.le.s32.totalorder 1, %s11
    %p140 = scmp.lt.s32.totalorder %s11, 3
    %p141 = pnand %p139, %p140
    %p142 = pneg %p141
    // Predicated region
    $region9: #{mixed_3b.4} parent=5 // pred_check
      _
    $region10: #{mixed_3b.4} parent=5 // pred_check_branch
      %144 = sbr.rel (%p141) target = $region12
    $region11: #{mixed_3b.4} parent=5 // pred_region
      %s145 = ssub.s32 %s11, 1
      // Predicated region
      $region13: #{mixed_3b.4} parent=11 // pred_check
        %p146 = pneg %p58
      $region14: #{mixed_3b.4} parent=11 // pred_check_branch
        %148 = sbr.rel (%p146) target = $region16
      $region15: #{mixed_3b.4} parent=11 // pred_region
        _
      $region16: #{mixed_3b.4} parent=11 // pred_fallthru
        _
      // Predicated region
      $region17: #{mixed_3b.4} parent=11 // pred_check
        %p149 = pneg %p79
      $region18: #{mixed_3b.4} parent=11 // pred_check_branch
        %151 = sbr.rel (%p149) target = $region20
      $region19: #{mixed_3b.4} parent=11 // pred_region
        _
      $region20: #{mixed_3b.4} parent=11 // pred_fallthru
        _
    $region12: #{mixed_3b.4} parent=5 // pred_fallthru
      _
    %p152 = scmp.lt.s32.totalorder %s11, 2
    // Predicated region
    $region21: #{mixed_3b.4} parent=5 // pred_check
      %p153 = pneg %p152
    $region22: #{mixed_3b.4} parent=5 // pred_check_branch
      %155 = sbr.rel (%p153) target = $region24
    $region23: #{mixed_3b.4} parent=5 // pred_region
      // Predicated region
      $region25: #{mixed_3b.4} parent=23 // pred_check
        %p156 = pneg %p31
      $region26: #{mixed_3b.4} parent=23 // pred_check_branch
        %158 = sbr.rel (%p156) target = $region28
      $region27: #{mixed_3b.4} parent=23 // pred_region
        %s159 = smul.u32 16, %s11
        %p160 = scmp.lt.s32.totalorder %s159, 31
        %s161 = scalar_select %p160, %s159, 31
        %s162 = smul.addr %s161, 2
        %s163 = smul.addr %s162, 4
        %s164 = scalar_lea.vmem %s0, %s163
        %s165 = smul.u32 16, %s11
      $region28: #{mixed_3b.4} parent=23 // pred_fallthru
        _
    $region24: #{mixed_3b.4} parent=5 // pred_fallthru
      _
    %p166 = scmp.le.s32.totalorder 1, %s11
    %p167 = scmp.lt.s32.totalorder %s11, 3
    %p168 = pnand %p166, %p167
    %p169 = pneg %p168
    // Predicated region
    $region29: #{mixed_3b.4} parent=5 // pred_check
      _
    $region30: #{mixed_3b.4} parent=5 // pred_check_branch
      %171 = sbr.rel (%p168) target = $region32
    $region31: #{mixed_3b.4} parent=5 // pred_region
      %s172 = ssub.s32 %s11, 1
      %s173 = smul.u32 16, %s16
      %p174 = scmp.lt.s32.totalorder %s173, 31
      %s175 = scalar_select %p174, %s173, 31
      %s176 = smul.addr %s175, 2
      %s177 = smul.addr %s176, 4
      %s178 = scalar_lea.vmem %s0, %s177
      %p179 = pneg %p37
      %p180 = pneg %p34
      %p181 = pneg %p58
      %p182 = pneg %p55
      %p183 = pneg %p79
      %p184 = pneg %p76
      %p185 = pneg %p105
      %p186 = pneg %p102
      %s187 = smul.u32 16, %s16
      %p188 = scmp.lt.s32.totalorder %s187, 31
      %s189 = scalar_select %p188, %s187, 31
      %s190 = smul.addr %s189, 4
      %s191 = scalar_lea.vmem %s3, %s190
      %p192 = pneg %p131
      %p193 = pneg %p128
      %s194 = smul.u32 16, %s16
      %p195 = scmp.lt.s32.totalorder %s194, 31
      %s196 = scalar_select %p195, %s194, 31
      %s197 = smul.addr %s196, 8
      %s198 = scalar_lea.vmem %s4, %s197
      %s199 = smul.u32 16, %s16
      %p200 = scmp.lt.s32.totalorder %s199, 31
      %s201 = scalar_select %p200, %s199, 31
      %s202 = smul.addr %s201, 2
      %s203 = smul.addr %s202, 4
      %s204 = scalar_lea.vmem %s0, %s203
      %s205 = smul.u32 16, %s16
      %s206 = smul.u32 16, %s16
      %p207 = scmp.lt.s32.totalorder %s206, 31
      %s208 = scalar_select %p207, %s206, 31
      %s209 = smul.addr %s208, 4
      %s210 = scalar_lea.vmem %s3, %s209
      %s211 = smul.u32 16, %s16
      %s212 = smul.u32 16, %s16
      %p213 = scmp.lt.s32.totalorder %s212, 31
      %s214 = scalar_select %p213, %s212, 31
      %s215 = smul.addr %s214, 8
      %s216 = scalar_lea.vmem %s4, %s215
      %s217 = smul.u32 16, %s16
      %v219 = vld [vmem:[%s204] sm:$0xff]
      %v220 = vld [vmem:[%s204 + $0x8] sm:$0xff]
      %v221 = vld [vmem:[%s204 + $0x10] sm:$0xff]
      %v222 = vld [vmem:[%s204 + $0x18] sm:$0xff]
      %v223 = vld [vmem:[%s204 + $0x20] sm:$0xff]
      %v224 = vld [vmem:[%s204 + $0x28] sm:$0xff]
      %v225 = vld [vmem:[%s204 + $0x30] sm:$0xff]
      %v226 = vld [vmem:[%s204 + $0x38] sm:$0xff]
      %v227 = vld [vmem:[%s204 + $0x40] sm:$0xff]
      %v228 = vld [vmem:[%s204 + $0x48] sm:$0xff]
      %v229 = vld [vmem:[%s204 + $0x50] sm:$0xff]
      %v230 = vld [vmem:[%s204 + $0x58] sm:$0xff]
      %v231 = vld [vmem:[%s204 + $0x60] sm:$0xff]
      %v232 = vld [vmem:[%s204 + $0x68] sm:$0xff]
      %v233 = vld [vmem:[%s204 + $0x70] sm:$0xff]
      %v234 = vld [vmem:[%s204 + $0x78] sm:$0xff]
      %v235 = vld [vmem:[%s1] sm:$0xff]
      %v236 = vld [vmem:[%s1 + $0x8] sm:$0xff]
      %v237 = vld [vmem:[%s1 + $0x10] sm:$0xff]
      %v238 = vld [vmem:[%s1 + $0x18] sm:$0xff]
      %v239 = vld [vmem:[%s1 + $0x20] sm:$0xff]
      %v240 = vld [vmem:[%s1 + $0x28] sm:$0xff]
      %v241 = vld [vmem:[%s1 + $0x30] sm:$0xff]
      %v242 = vld [vmem:[%s1 + $0x38] sm:$0xff]
      %v243 = vld [vmem:[%s1 + $0x40] sm:$0xff]
      %v244 = vld [vmem:[%s1 + $0x48] sm:$0xff]
      %v245 = vld [vmem:[%s1 + $0x50] sm:$0xff]
      %v246 = vld [vmem:[%s1 + $0x58] sm:$0xff]
      %v247 = vld [vmem:[%s1 + $0x60] sm:$0xff]
      %v248 = vld [vmem:[%s1 + $0x68] sm:$0xff]
      %v249 = vld [vmem:[%s1 + $0x70] sm:$0xff]
      %v250 = vld [vmem:[%s1 + $0x78] sm:$0xff]
      %v251 = vld [vmem:[%s1 + $0x80] sm:$0xff]
      %v252 = vld [vmem:[%s1 + $0x88] sm:$0xff]
      %v253 = vld [vmem:[%s1 + $0x90] sm:$0xff]
      %v254 = vld [vmem:[%s1 + $0x98] sm:$0xff]
      %v255 = vld [vmem:[%s1 + $0xa0] sm:$0xff]
      %v256 = vld [vmem:[%s1 + $0xa8] sm:$0xff]
      %v257 = vld [vmem:[%s1 + $0xb0] sm:$0xff]
      %v258 = vld [vmem:[%s1 + $0xb8] sm:$0xff]
      %v259 = vld [vmem:[%s2] sm:$0x3]
      %v261 = vlaneseq
      %v262 = vshrl.u32 %v261, 7
      %v263 = vsub.s32 0, %v262
      %v264 = vrot.slane %v259, %v263
      %v265 = vlaneseq
      %v266 = vshrl.u32 %v265, 7
      %v267 = vsub.s32 1, %v266
      %v268 = vrot.slane %v259, %v267
      %v287 = vunpack.c.l.b16 %v219
      %v288 = vunpack.c.h.b16 %v219
      %v289 = vunpack.c.l.b16 %v220
      %v290 = vunpack.c.h.b16 %v220
      %v291 = vunpack.c.l.b16 %v221
      %v292 = vunpack.c.h.b16 %v221
      %v293 = vunpack.c.l.b16 %v222
      %v294 = vunpack.c.h.b16 %v222
      %v295 = vunpack.c.l.b16 %v223
      %v296 = vunpack.c.h.b16 %v223
      %v297 = vunpack.c.l.b16 %v224
      %v298 = vunpack.c.h.b16 %v224
      %v299 = vunpack.c.l.b16 %v225
      %v300 = vunpack.c.h.b16 %v225
      %v301 = vunpack.c.l.b16 %v226
      %v302 = vunpack.c.h.b16 %v226
      %v303 = vunpack.c.l.b16 %v227
      %v304 = vunpack.c.h.b16 %v227
      %v305 = vunpack.c.l.b16 %v228
      %v306 = vunpack.c.h.b16 %v228
      %v307 = vunpack.c.l.b16 %v229
      %v308 = vunpack.c.h.b16 %v229
      %v309 = vunpack.c.l.b16 %v230
      %v310 = vunpack.c.h.b16 %v230
      %v311 = vunpack.c.l.b16 %v231
      %v312 = vunpack.c.h.b16 %v231
      %v313 = vunpack.c.l.b16 %v232
      %v314 = vunpack.c.h.b16 %v232
      %v315 = vunpack.c.l.b16 %v233
      %v316 = vunpack.c.h.b16 %v233
      %v317 = vunpack.c.l.b16 %v234
      %v318 = vunpack.c.h.b16 %v234
      %v319 = vpack.c.b16 %v289, %v287
      %v320 = vpack.c.b16 %v290, %v288
      %v321 = vpack.c.b16 %v293, %v291
      %v322 = vpack.c.b16 %v294, %v292
      %v323 = vpack.c.b16 %v297, %v295
      %v324 = vpack.c.b16 %v298, %v296
      %v325 = vpack.c.b16 %v301, %v299
      %v326 = vpack.c.b16 %v302, %v300
      %v327 = vpack.c.b16 %v305, %v303
      %v328 = vpack.c.b16 %v306, %v304
      %v329 = vpack.c.b16 %v309, %v307
      %v330 = vpack.c.b16 %v310, %v308
      %v331 = vpack.c.b16 %v313, %v311
      %v332 = vpack.c.b16 %v314, %v312
      %v333 = vpack.c.b16 %v317, %v315
      %v334 = vpack.c.b16 %v318, %v316
      %v367 = vunpack.c.l.b16 %v235
      %v368 = vunpack.c.h.b16 %v235
      %v369 = vunpack.c.l.b16 %v236
      %v370 = vunpack.c.h.b16 %v236
      %v371 = vunpack.c.l.b16 %v237
      %v372 = vunpack.c.h.b16 %v237
      %v373 = vunpack.c.l.b16 %v238
      %v374 = vunpack.c.h.b16 %v238
      %v375 = vunpack.c.l.b16 %v239
      %v376 = vunpack.c.h.b16 %v239
      %v377 = vunpack.c.l.b16 %v240
      %v378 = vunpack.c.h.b16 %v240
      %v379 = vunpack.c.l.b16 %v241
      %v380 = vunpack.c.h.b16 %v241
      %v381 = vunpack.c.l.b16 %v242
      %v382 = vunpack.c.h.b16 %v242
      %v383 = vunpack.c.l.b16 %v243
      %v384 = vunpack.c.h.b16 %v243
      %v385 = vunpack.c.l.b16 %v244
      %v386 = vunpack.c.h.b16 %v244
      %v387 = vunpack.c.l.b16 %v245
      %v388 = vunpack.c.h.b16 %v245
      %v389 = vunpack.c.l.b16 %v246
      %v390 = vunpack.c.h.b16 %v246
      %v391 = vunpack.c.l.b16 %v247
      %v392 = vunpack.c.h.b16 %v247
      %v393 = vunpack.c.l.b16 %v248
      %v394 = vunpack.c.h.b16 %v248
      %v395 = vunpack.c.l.b16 %v249
      %v396 = vunpack.c.h.b16 %v249
      %v397 = vunpack.c.l.b16 %v250
      %v398 = vunpack.c.h.b16 %v250
      %v399 = vunpack.c.l.b16 %v251
      %v400 = vunpack.c.h.b16 %v251
      %v401 = vunpack.c.l.b16 %v252
      %v402 = vunpack.c.h.b16 %v252
      %v403 = vunpack.c.l.b16 %v253
      %v404 = vunpack.c.h.b16 %v253
      %v405 = vunpack.c.l.b16 %v254
      %v406 = vunpack.c.h.b16 %v254
      %v407 = vunpack.c.l.b16 %v255
      %v408 = vunpack.c.h.b16 %v255
      %v409 = vunpack.c.l.b16 %v256
      %v410 = vunpack.c.h.b16 %v256
      %v411 = vunpack.c.l.b16 %v257
      %v412 = vunpack.c.h.b16 %v257
      %v413 = vunpack.c.l.b16 %v258
      %v414 = vunpack.c.h.b16 %v258
      %v415 = vpack.c.b16 %v369, %v367
      %v416 = vpack.c.b16 %v370, %v368
      %v417 = vpack.c.b16 %v373, %v371
      %v418 = vpack.c.b16 %v374, %v372
      %v419 = vpack.c.b16 %v377, %v375
      %v420 = vpack.c.b16 %v378, %v376
      %v421 = vpack.c.b16 %v381, %v379
      %v422 = vpack.c.b16 %v382, %v380
      %v423 = vpack.c.b16 %v385, %v383
      %v424 = vpack.c.b16 %v386, %v384
      %v425 = vpack.c.b16 %v389, %v387
      %v426 = vpack.c.b16 %v390, %v388
      %v427 = vpack.c.b16 %v393, %v391
      %v428 = vpack.c.b16 %v394, %v392
      %v429 = vpack.c.b16 %v397, %v395
      %v430 = vpack.c.b16 %v398, %v396
      %v431 = vpack.c.b16 %v401, %v399
      %v432 = vpack.c.b16 %v402, %v400
      %v433 = vpack.c.b16 %v405, %v403
      %v434 = vpack.c.b16 %v406, %v404
      %v435 = vpack.c.b16 %v409, %v407
      %v436 = vpack.c.b16 %v410, %v408
      %v437 = vpack.c.b16 %v413, %v411
      %v438 = vpack.c.b16 %v414, %v412
      %vm463 = vcmask 523264
      %v465 = vsel %vm463, %v320, 0
      %v468 = vsel %vm463, %v322, 0
      %v471 = vsel %vm463, %v324, 0
      %v474 = vsel %vm463, %v326, 0
      %v477 = vsel %vm463, %v328, 0
      %v480 = vsel %vm463, %v330, 0
      %v483 = vsel %vm463, %v332, 0
      %v486 = vsel %vm463, %v334, 0
      %488 = vmatprep.subr.bf16.mxu0 %v416
      %489 = vmatpush1.bf16.msra.mxu0 %v415
      %490 = vmatprep.subr.bf16.mxu0 %v418
      %491 = vmatpush1.bf16.msra.mxu0 %v417
      %492 = vmatprep.subr.bf16.mxu0 %v420
      %493 = vmatpush1.bf16.msra.mxu0 %v419
      %494 = vmatprep.subr.bf16.mxu0 %v422
      %495 = vmatpush1.bf16.msra.mxu0 %v421
      %496 = vmatprep.subr.bf16.mxu0 %v424
      %497 = vmatpush1.bf16.msra.mxu0 %v423
      %498 = vmatprep.subr.bf16.mxu0 %v426
      %499 = vmatpush1.bf16.msra.mxu0 %v425
      %500 = vmatprep.subr.bf16.mxu0 %v428
      %501 = vmatpush1.bf16.msra.mxu0 %v427
      %502 = vmatprep.subr.bf16.mxu0 %v430
      %503 = vmatpush1.bf16.msra.mxu0 %v429
      %504 = vmatprep.subr.bf16.mxu0 %v432
      %505 = vmatpush1.bf16.msra.mxu0 %v431
      %506 = vmatprep.subr.bf16.mxu0 %v434
      %507 = vmatpush1.bf16.msra.mxu0 %v433
      %508 = vmatprep.subr.bf16.mxu0 %v436
      %509 = vmatpush1.bf16.msra.mxu0 %v435
      %510 = vmatprep.subr.bf16.mxu0 %v438
      %511 = vmatpush1.bf16.msra.mxu0 %v437
      %512 = vmatprep.subr.bf16.mxu0 0
      %513 = vmatpush1.bf16.msra.mxu0 0
      %514 = vmatprep.subr.bf16.mxu0 0
      %515 = vmatpush1.bf16.msra.mxu0 0
      %516 = vmatprep.subr.bf16.mxu0 0
      %517 = vmatpush1.bf16.msra.mxu0 0
      %518 = vmatprep.subr.bf16.mxu0 0
      %519 = vmatpush1.bf16.msra.mxu0 0
      %520 = vmatprep.mubr.bf16.mxu0 %v465
      %521 = vmatmul.mubr.bf16.gmra.mrb[0].mxu0 %v319
      %v522 = vpop.f32.mrb[0].mxu0
      %v523 = vadd.f32 %v264, %v522
      %v524 = vpop.f32.mrb[0].mxu0
      %v525 = vadd.f32 %v268, %v524
      %v526 = vpop.f32.mrb[0].mxu0
      %v527 = vadd.f32 %v264, %v526
      %v528 = vpop.f32.mrb[0].mxu0
      %v529 = vadd.f32 %v268, %v528
      %530 = vmatprep.mubr.bf16.mxu0 %v468
      %531 = vmatmul.mubr.bf16.gmra.mrb[0].mxu0 %v321
      %v532 = vpop.f32.mrb[0].mxu0
      %v533 = vadd.f32 %v264, %v532
      %v534 = vpop.f32.mrb[0].mxu0
      %v535 = vadd.f32 %v268, %v534
      %v536 = vpop.f32.mrb[0].mxu0
      %v537 = vadd.f32 %v264, %v536
      %v538 = vpop.f32.mrb[0].mxu0
      %v539 = vadd.f32 %v268, %v538
      %540 = vmatprep.mubr.bf16.mxu0 %v471
      %541 = vmatmul.mubr.bf16.gmra.mrb[0].mxu0 %v323
      %v542 = vpop.f32.mrb[0].mxu0
      %v543 = vadd.f32 %v264, %v542
      %v544 = vpop.f32.mrb[0].mxu0
      %v545 = vadd.f32 %v268, %v544
      %v546 = vpop.f32.mrb[0].mxu0
      %v547 = vadd.f32 %v264, %v546
      %v548 = vpop.f32.mrb[0].mxu0
      %v549 = vadd.f32 %v268, %v548
      %550 = vmatprep.mubr.bf16.mxu0 %v474
      %551 = vmatmul.mubr.bf16.gmra.mrb[0].mxu0 %v325
      %v552 = vpop.f32.mrb[0].mxu0
      %v553 = vadd.f32 %v264, %v552
      %v554 = vpop.f32.mrb[0].mxu0
      %v555 = vadd.f32 %v268, %v554
      %v556 = vpop.f32.mrb[0].mxu0
      %v557 = vadd.f32 %v264, %v556
      %v558 = vpop.f32.mrb[0].mxu0
      %v559 = vadd.f32 %v268, %v558
      %560 = vmatprep.mubr.bf16.mxu0 %v477
      %561 = vmatmul.mubr.bf16.gmra.mrb[0].mxu0 %v327
      %v562 = vpop.f32.mrb[0].mxu0
      %v563 = vadd.f32 %v264, %v562
      %v564 = vpop.f32.mrb[0].mxu0
      %v565 = vadd.f32 %v268, %v564
      %v566 = vpop.f32.mrb[0].mxu0
      %v567 = vadd.f32 %v264, %v566
      %v568 = vpop.f32.mrb[0].mxu0
      %v569 = vadd.f32 %v268, %v568
      %570 = vmatprep.mubr.bf16.mxu0 %v480
      %571 = vmatmul.mubr.bf16.gmra.mrb[0].mxu0 %v329
      %v572 = vpop.f32.mrb[0].mxu0
      %v573 = vadd.f32 %v264, %v572
      %v574 = vpop.f32.mrb[0].mxu0
      %v575 = vadd.f32 %v268, %v574
      %v576 = vpop.f32.mrb[0].mxu0
      %v577 = vadd.f32 %v264, %v576
      %v578 = vpop.f32.mrb[0].mxu0
      %v579 = vadd.f32 %v268, %v578
      %580 = vmatprep.mubr.bf16.mxu0 %v483
      %581 = vmatmul.mubr.bf16.gmra.mrb[0].mxu0 %v331
      %v582 = vpop.f32.mrb[0].mxu0
      %v583 = vadd.f32 %v264, %v582
      %v584 = vpop.f32.mrb[0].mxu0
      %v585 = vadd.f32 %v268, %v584
      %v586 = vpop.f32.mrb[0].mxu0
      %v587 = vadd.f32 %v264, %v586
      %v588 = vpop.f32.mrb[0].mxu0
      %v589 = vadd.f32 %v268, %v588
      %590 = vmatprep.mubr.bf16.mxu0 %v486
      %591 = vmatmul.mubr.bf16.gmra.mrb[0].mxu0 %v333
      %v592 = vpop.f32.mrb[0].mxu0
      %v593 = vadd.f32 %v264, %v592
      %v594 = vpop.f32.mrb[0].mxu0
      %v595 = vadd.f32 %v268, %v594
      %v596 = vpop.f32.mrb[0].mxu0
      %v597 = vadd.f32 %v264, %v596
      %v598 = vpop.f32.mrb[0].mxu0
      %v599 = vadd.f32 %v268, %v598
      %600 = vdwg.mxu0
      %v601 = vmax.f32 %v523, 0.0
      %v602 = vmax.f32 %v525, 0.0
      %v603 = vmax.f32 %v527, 0.0
      %v604 = vmax.f32 %v529, 0.0
      %v605 = vmax.f32 %v533, 0.0
      %v606 = vmax.f32 %v535, 0.0
      %v607 = vmax.f32 %v537, 0.0
      %v608 = vmax.f32 %v539, 0.0
      %v609 = vmax.f32 %v543, 0.0
      %v610 = vmax.f32 %v545, 0.0
      %v611 = vmax.f32 %v547, 0.0
      %v612 = vmax.f32 %v549, 0.0
      %v613 = vmax.f32 %v553, 0.0
      %v614 = vmax.f32 %v555, 0.0
      %v615 = vmax.f32 %v557, 0.0
      %v616 = vmax.f32 %v559, 0.0
      %v617 = vmax.f32 %v563, 0.0
      %v618 = vmax.f32 %v565, 0.0
      %v619 = vmax.f32 %v567, 0.0
      %v620 = vmax.f32 %v569, 0.0
      %v621 = vmax.f32 %v573, 0.0
      %v622 = vmax.f32 %v575, 0.0
      %v623 = vmax.f32 %v577, 0.0
      %v624 = vmax.f32 %v579, 0.0
      %v625 = vmax.f32 %v583, 0.0
      %v626 = vmax.f32 %v585, 0.0
      %v627 = vmax.f32 %v587, 0.0
      %v628 = vmax.f32 %v589, 0.0
      %v629 = vmax.f32 %v593, 0.0
      %v630 = vmax.f32 %v595, 0.0
      %v631 = vmax.f32 %v597, 0.0
      %v632 = vmax.f32 %v599, 0.0
      %v633 = vpack.c.bf16 %v603, %v601
      %v634 = vpack.c.bf16 %v607, %v605
      %v635 = vpack.c.bf16 %v611, %v609
      %v636 = vpack.c.bf16 %v615, %v613
      %v637 = vpack.c.bf16 %v619, %v617
      %v638 = vpack.c.bf16 %v623, %v621
      %v639 = vpack.c.bf16 %v627, %v625
      %v640 = vpack.c.bf16 %v631, %v629
      %v649 = vunpack.c.l.b16 %v633
      %v650 = vunpack.c.h.b16 %v633
      %v651 = vunpack.c.l.b16 %v634
      %v652 = vunpack.c.h.b16 %v634
      %v653 = vunpack.c.l.b16 %v635
      %v654 = vunpack.c.h.b16 %v635
      %v655 = vunpack.c.l.b16 %v636
      %v656 = vunpack.c.h.b16 %v636
      %v657 = vunpack.c.l.b16 %v637
      %v658 = vunpack.c.h.b16 %v637
      %v659 = vunpack.c.l.b16 %v638
      %v660 = vunpack.c.h.b16 %v638
      %v661 = vunpack.c.l.b16 %v639
      %v662 = vunpack.c.h.b16 %v639
      %v663 = vunpack.c.l.b16 %v640
      %v664 = vunpack.c.h.b16 %v640
      %v665 = vpack.c.b16 %v649, %v649
      %v666 = vpack.c.b16 %v650, %v650
      %v667 = vpack.c.b16 %v651, %v651
      %v668 = vpack.c.b16 %v652, %v652
      %v669 = vpack.c.b16 %v653, %v653
      %v670 = vpack.c.b16 %v654, %v654
      %v671 = vpack.c.b16 %v655, %v655
      %v672 = vpack.c.b16 %v656, %v656
      %v673 = vpack.c.b16 %v657, %v657
      %v674 = vpack.c.b16 %v658, %v658
      %v675 = vpack.c.b16 %v659, %v659
      %v676 = vpack.c.b16 %v660, %v660
      %v677 = vpack.c.b16 %v661, %v661
      %v678 = vpack.c.b16 %v662, %v662
      %v679 = vpack.c.b16 %v663, %v663
      %v680 = vpack.c.b16 %v664, %v664
      %697 = vst [vmem:[%s210] sm:$0xf] %v665
      %698 = vst [vmem:[%s210 + $0x4] sm:$0xf] %v666
      %699 = vst [vmem:[%s210 + $0x8] sm:$0xf] %v667
      %700 = vst [vmem:[%s210 + $0xc] sm:$0xf] %v668
      %701 = vst [vmem:[%s210 + $0x10] sm:$0xf] %v669
      %702 = vst [vmem:[%s210 + $0x14] sm:$0xf] %v670
      %703 = vst [vmem:[%s210 + $0x18] sm:$0xf] %v671
      %704 = vst [vmem:[%s210 + $0x1c] sm:$0xf] %v672
      %705 = vst [vmem:[%s210 + $0x20] sm:$0xf] %v673
      %706 = vst [vmem:[%s210 + $0x24] sm:$0xf] %v674
      %707 = vst [vmem:[%s210 + $0x28] sm:$0xf] %v675
      %708 = vst [vmem:[%s210 + $0x2c] sm:$0xf] %v676
      %709 = vst [vmem:[%s210 + $0x30] sm:$0xf] %v677
      %710 = vst [vmem:[%s210 + $0x34] sm:$0xf] %v678
      %711 = vst [vmem:[%s210 + $0x38] sm:$0xf] %v679
      %712 = vst [vmem:[%s210 + $0x3c] sm:$0xf] %v680
      %713 = vst.msk [vmem:[%s216] sm:$0xff] %vm463, %v602
      %714 = vst.msk [vmem:[%s216 + $0x8] sm:$0xff] %vm463, %v604
      %715 = vst.msk [vmem:[%s216 + $0x10] sm:$0xff] %vm463, %v606
      %716 = vst.msk [vmem:[%s216 + $0x18] sm:$0xff] %vm463, %v608
      %717 = vst.msk [vmem:[%s216 + $0x20] sm:$0xff] %vm463, %v610
      %718 = vst.msk [vmem:[%s216 + $0x28] sm:$0xff] %vm463, %v612
      %719 = vst.msk [vmem:[%s216 + $0x30] sm:$0xff] %vm463, %v614
      %720 = vst.msk [vmem:[%s216 + $0x38] sm:$0xff] %vm463, %v616
      %721 = vst.msk [vmem:[%s216 + $0x40] sm:$0xff] %vm463, %v618
      %722 = vst.msk [vmem:[%s216 + $0x48] sm:$0xff] %vm463, %v620
      %723 = vst.msk [vmem:[%s216 + $0x50] sm:$0xff] %vm463, %v622
      %724 = vst.msk [vmem:[%s216 + $0x58] sm:$0xff] %vm463, %v624
      %725 = vst.msk [vmem:[%s216 + $0x60] sm:$0xff] %vm463, %v626
      %726 = vst.msk [vmem:[%s216 + $0x68] sm:$0xff] %vm463, %v628
      %727 = vst.msk [vmem:[%s216 + $0x70] sm:$0xff] %vm463, %v630
      %728 = vst.msk [vmem:[%s216 + $0x78] sm:$0xff] %vm463, %v632
      %s729 = smul.u32 16, %s16
      %p730 = scmp.lt.s32.totalorder %s729, 31
      %s731 = scalar_select %p730, %s729, 31
      %s732 = smul.addr %s731, 4
      %s733 = scalar_lea.vmem %s3, %s732
      %s734 = smul.u32 16, %s16
      %p735 = scmp.lt.s32.totalorder %s734, 31
      %s736 = scalar_select %p735, %s734, 31
      %s737 = smul.addr %s736, 8
      %s738 = scalar_lea.vmem %s4, %s737
      // Predicated region
      $region33: #{mixed_3b.4} parent=31 // pred_check
        %p739 = pneg %p102
      $region34: #{mixed_3b.4} parent=31 // pred_check_branch
        %741 = sbr.rel (%p739) target = $region36
      $region35: #{mixed_3b.4} parent=31 // pred_region
        %s742 = smul.u32 16, %s16
      $region36: #{mixed_3b.4} parent=31 // pred_fallthru
        _
      // Predicated region
      $region37: #{mixed_3b.4} parent=31 // pred_check
        %p743 = pneg %p128
      $region38: #{mixed_3b.4} parent=31 // pred_check_branch
        %745 = sbr.rel (%p743) target = $region40
      $region39: #{mixed_3b.4} parent=31 // pred_region
        %s746 = smul.u32 16, %s16
      $region40: #{mixed_3b.4} parent=31 // pred_fallthru
        _
    $region32: #{mixed_3b.4} parent=5 // pred_fallthru
      _
    %p747 = scmp.le.s32.totalorder 2, %s11
    // Predicated region
    $region41: #{mixed_3b.4} parent=5 // pred_check
      %p748 = pneg %p747
    $region42: #{mixed_3b.4} parent=5 // pred_check_branch
      %750 = sbr.rel (%p748) target = $region44
    $region43: #{mixed_3b.4} parent=5 // pred_region
      %s751 = ssub.s32 %s11, 2
      // Predicated region
      $region45: #{mixed_3b.4} parent=43 // pred_check
        %p752 = pneg %p108
      $region46: #{mixed_3b.4} parent=43 // pred_check_branch
        %754 = sbr.rel (%p752) target = $region48
      $region47: #{mixed_3b.4} parent=43 // pred_region
        %s755 = smul.u32 16, %s17
        %p756 = scmp.lt.s32.totalorder %s755, 31
        %s757 = scalar_select %p756, %s755, 31
        %s758 = smul.addr %s757, 4
        %s759 = scalar_lea.vmem %s3, %s758
      $region48: #{mixed_3b.4} parent=43 // pred_fallthru
        _
      // Predicated region
      $region49: #{mixed_3b.4} parent=43 // pred_check
        %p760 = pneg %p134
      $region50: #{mixed_3b.4} parent=43 // pred_check_branch
        %762 = sbr.rel (%p760) target = $region52
      $region51: #{mixed_3b.4} parent=43 // pred_region
        %s763 = smul.u32 16, %s17
        %p764 = scmp.lt.s32.totalorder %s763, 31
        %s765 = scalar_select %p764, %s763, 31
        %s766 = smul.addr %s765, 8
        %s767 = scalar_lea.vmem %s4, %s766
      $region52: #{mixed_3b.4} parent=43 // pred_fallthru
        _
    $region44: #{mixed_3b.4} parent=5 // pred_fallthru
      _
  $region6: #{mixed_3b.4} parent=0 // loop_footer
    %s15 = sadd.s32 1, %s11
  $region7: #{mixed_3b.4} parent=0 // loop_footer_branch
    %10 = sbr.rel target = $region3
  $region8: #{mixed_3b.4} parent=0 // loop_exit
    _

// kernel: mixed_3b.5
$region0: #{mixed_3b.5}
  #allocation0 [shape = 'u32[]', space=smem, size = 0x4, offset = 0x4, fixed_abs, tag = 'smem constant byte address 0x4 - core index']
  #allocation1 [shape = 'u32[144,128]{1,0:T(1,128)}', space=vmem, size = 0x12000, scoped, tag = 'internal scratch']
  %s0 = inlined_call_operand.vmem [shape: bf16[4,10,10,128], index: 0, kind: input, shape index: {}]
  %s1 = inlined_call_operand.vmem [shape: bf16[9,128,256], index: 1, kind: input, shape index: {}]
  %s2 = inlined_call_operand.vmem [shape: f32[1,256], index: 2, kind: input, shape index: {}]
  %s3 = inlined_call_operand.vmem [shape: bf16[4,8,8,256], index: 3, kind: output, shape index: {}]
  %s4 = sld [smem:[#allocation0]]
  $region45: #{mixed_3b.5} parent=0
    _
  %s6 = ssub.s32 1, %s4
  %s7 = scalar_select 0, %s6, %s4
  loop: start=0, step=1, limit=6
  $region2: #{mixed_3b.5} parent=0 // loop_pre_header
    _
  $region3: #{mixed_3b.5} parent=0 // loop_header
    %s9 = sphi 0, %s13
    %p10 = scmp.ge.s32.totalorder %s9, 6
    %s19 = sphi 0, %s21
    %s22 = sphi 0, %s19
    %s23 = sphi 0, %s22
    %s39 = sphi 0, %s23
    %s43 = sphi 0, %s43
    %s45 = sphi 0, %s43
    %s46 = sphi 0, %s45
    %s60 = sphi 0, %s46
    %s64 = sphi 0, %s64
    %s66 = sphi 0, %s64
    %s67 = sphi 0, %s66
    %s81 = sphi 0, %s67
    %s87 = sphi 0, %s89
    %s90 = sphi 0, %s87
    %s91 = sphi 0, %s90
    %s107 = sphi 0, %s91
  $region4: #{mixed_3b.5} parent=0 // loop_header_branch
    %12 = sbr.rel (%p10) target = $region8
  $region5: #{mixed_3b.5} parent=0 // loop_body
    %s14 = ssub.s32 %s9, 1
    %s15 = ssub.s32 %s9, 2
    %s16 = sadd.s32 %s9, 1
    %s17 = ssub.s32 %s9, %s16
    %p18 = scmp.eq.s32.totalorder %s17, 0
    %s20 = sadd.s32 %s19, 1
    %s21 = scalar_select %p18, %s19, %s20
    %p24 = pneg %p18
    %p25 = scmp.eq.s32.totalorder %s9, 3
    %p26 = por %p24, %p25
    %p27 = scmp.ne.s32.totalorder %s19, %s22
    %p28 = scmp.eq.s32.totalorder %s9, 0
    %p29 = por %p27, %p28
    %p30 = scmp.ne.s32.totalorder %s19, %s22
    %p31 = scmp.eq.s32.totalorder %s14, 3
    %p32 = por %p30, %p31
    %p33 = scmp.ne.s32.totalorder %s22, %s23
    %p34 = scmp.eq.s32.totalorder %s14, 0
    %p35 = por %p33, %p34
    %p36 = scmp.ne.s32.totalorder %s22, %s23
    %p37 = scmp.eq.s32.totalorder %s15, 3
    %p38 = por %p36, %p37
    %p40 = scmp.ne.s32.totalorder %s23, %s39
    %p41 = scmp.eq.s32.totalorder %s15, 0
    %p42 = por %p40, %p41
    %s44 = sadd.s32 %s43, 1
    %p47 = scmp.eq.s32.totalorder %s9, 3
    %p48 = scmp.ne.s32.totalorder %s43, %s45
    %p49 = scmp.eq.s32.totalorder %s9, 0
    %p50 = por %p48, %p49
    %p51 = scmp.ne.s32.totalorder %s43, %s45
    %p52 = scmp.eq.s32.totalorder %s14, 3
    %p53 = por %p51, %p52
    %p54 = scmp.ne.s32.totalorder %s45, %s46
    %p55 = scmp.eq.s32.totalorder %s14, 0
    %p56 = por %p54, %p55
    %p57 = scmp.ne.s32.totalorder %s45, %s46
    %p58 = scmp.eq.s32.totalorder %s15, 3
    %p59 = por %p57, %p58
    %p61 = scmp.ne.s32.totalorder %s46, %s60
    %p62 = scmp.eq.s32.totalorder %s15, 0
    %p63 = por %p61, %p62
    %s65 = sadd.s32 %s64, 1
    %p68 = scmp.eq.s32.totalorder %s9, 3
    %p69 = scmp.ne.s32.totalorder %s64, %s66
    %p70 = scmp.eq.s32.totalorder %s9, 0
    %p71 = por %p69, %p70
    %p72 = scmp.ne.s32.totalorder %s64, %s66
    %p73 = scmp.eq.s32.totalorder %s14, 3
    %p74 = por %p72, %p73
    %p75 = scmp.ne.s32.totalorder %s66, %s67
    %p76 = scmp.eq.s32.totalorder %s14, 0
    %p77 = por %p75, %p76
    %p78 = scmp.ne.s32.totalorder %s66, %s67
    %p79 = scmp.eq.s32.totalorder %s15, 3
    %p80 = por %p78, %p79
    %p82 = scmp.ne.s32.totalorder %s67, %s81
    %p83 = scmp.eq.s32.totalorder %s15, 0
    %p84 = por %p82, %p83
    %s85 = ssub.s32 %s9, %s16
    %p86 = scmp.eq.s32.totalorder %s85, 0
    %s88 = sadd.s32 %s87, 1
    %s89 = scalar_select %p86, %s87, %s88
    %p92 = pneg %p86
    %p93 = scmp.eq.s32.totalorder %s9, 3
    %p94 = por %p92, %p93
    %p95 = scmp.ne.s32.totalorder %s87, %s90
    %p96 = scmp.eq.s32.totalorder %s9, 0
    %p97 = por %p95, %p96
    %p98 = scmp.ne.s32.totalorder %s87, %s90
    %p99 = scmp.eq.s32.totalorder %s14, 3
    %p100 = por %p98, %p99
    %p101 = scmp.ne.s32.totalorder %s90, %s91
    %p102 = scmp.eq.s32.totalorder %s14, 0
    %p103 = por %p101, %p102
    %p104 = scmp.ne.s32.totalorder %s90, %s91
    %p105 = scmp.eq.s32.totalorder %s15, 3
    %p106 = por %p104, %p105
    %p108 = scmp.ne.s32.totalorder %s91, %s107
    %p109 = scmp.eq.s32.totalorder %s15, 0
    %p110 = por %p108, %p109
    %p111 = scmp.le.s32.totalorder 1, %s9
    %p112 = scmp.lt.s32.totalorder %s9, 5
    %p113 = pnand %p111, %p112
    %p114 = pneg %p113
    // Predicated region
    $region9: #{mixed_3b.5} parent=5 // pred_check
      _
    $region10: #{mixed_3b.5} parent=5 // pred_check_branch
      %116 = sbr.rel (%p113) target = $region12
    $region11: #{mixed_3b.5} parent=5 // pred_region
      %s117 = ssub.s32 %s9, 1
      // Predicated region
      $region13: #{mixed_3b.5} parent=11 // pred_check
        %p118 = pneg %p56
      $region14: #{mixed_3b.5} parent=11 // pred_check_branch
        %120 = sbr.rel (%p118) target = $region16
      $region15: #{mixed_3b.5} parent=11 // pred_region
        _
      $region16: #{mixed_3b.5} parent=11 // pred_fallthru
        _
      // Predicated region
      $region17: #{mixed_3b.5} parent=11 // pred_check
        %p121 = pneg %p77
      $region18: #{mixed_3b.5} parent=11 // pred_check_branch
        %123 = sbr.rel (%p121) target = $region20
      $region19: #{mixed_3b.5} parent=11 // pred_region
        _
      $region20: #{mixed_3b.5} parent=11 // pred_fallthru
        _
    $region12: #{mixed_3b.5} parent=5 // pred_fallthru
      _
    %p124 = scmp.lt.s32.totalorder %s9, 4
    // Predicated region
    $region21: #{mixed_3b.5} parent=5 // pred_check
      %p125 = pneg %p124
    $region22: #{mixed_3b.5} parent=5 // pred_check_branch
      %127 = sbr.rel (%p125) target = $region24
    $region23: #{mixed_3b.5} parent=5 // pred_region
      // Predicated region
      $region25: #{mixed_3b.5} parent=23 // pred_check
        %p128 = pneg %p29
      $region26: #{mixed_3b.5} parent=23 // pred_check_branch
        %130 = sbr.rel (%p128) target = $region28
      $region27: #{mixed_3b.5} parent=23 // pred_region
        %p131 = scmp.lt.s32.totalorder %s9, 3
        %s132 = scalar_select %p131, %s9, 3
        %s133 = smul.addr %s132, 20
        %s134 = smul.addr %s133, 4
        %s135 = scalar_lea.vmem %s0, %s134
      $region28: #{mixed_3b.5} parent=23 // pred_fallthru
        _
    $region24: #{mixed_3b.5} parent=5 // pred_fallthru
      _
    %p136 = scmp.le.s32.totalorder 1, %s9
    %p137 = scmp.lt.s32.totalorder %s9, 5
    %p138 = pnand %p136, %p137
    %p139 = pneg %p138
    // Predicated region
    $region29: #{mixed_3b.5} parent=5 // pred_check
      _
    $region30: #{mixed_3b.5} parent=5 // pred_check_branch
      %141 = sbr.rel (%p138) target = $region32
    $region31: #{mixed_3b.5} parent=5 // pred_region
      %s142 = ssub.s32 %s9, 1
      %p143 = scmp.lt.s32.totalorder %s14, 3
      %s144 = scalar_select %p143, %s14, 3
      %s145 = smul.addr %s144, 20
      %s146 = smul.addr %s145, 4
      %s147 = scalar_lea.vmem %s0, %s146
      %p148 = pneg %p35
      %p149 = pneg %p32
      %p150 = pneg %p56
      %p151 = pneg %p53
      %p152 = pneg %p77
      %p153 = pneg %p74
      %p154 = pneg %p103
      %p155 = pneg %p100
      %p156 = scmp.lt.s32.totalorder %s14, 3
      %s157 = scalar_select %p156, %s14, 3
      %s158 = smul.addr %s157, 16
      %s159 = smul.addr %s158, 4
      %s160 = scalar_lea.vmem %s3, %s159
      %p161 = scmp.lt.s32.totalorder %s14, 3
      %s162 = scalar_select %p161, %s14, 3
      %s163 = smul.addr %s162, 20
      %s164 = smul.addr %s163, 4
      %s165 = scalar_lea.vmem %s0, %s164
      %p166 = scmp.lt.s32.totalorder %s14, 3
      %s167 = scalar_select %p166, %s14, 3
      %s168 = smul.addr %s167, 16
      %s169 = smul.addr %s168, 4
      %s170 = scalar_lea.vmem %s3, %s169
      %v172 = vld [vmem:[%s165] sm:$0xf]
      %v173 = vld [vmem:[%s165 + $0x4] sm:$0x1]
      %v174 = vld [vmem:[%s165 + $0x8] sm:$0xf]
      %v175 = vld [vmem:[%s165 + $0xc] sm:$0x1]
      %v176 = vld [vmem:[%s165 + $0x10] sm:$0xf]
      %v177 = vld [vmem:[%s165 + $0x14] sm:$0x1]
      %v178 = vld [vmem:[%s165 + $0x18] sm:$0xf]
      %v179 = vld [vmem:[%s165 + $0x1c] sm:$0x1]
      %v180 = vld [vmem:[%s165 + $0x20] sm:$0xf]
      %v181 = vld [vmem:[%s165 + $0x24] sm:$0x1]
      %v182 = vld [vmem:[%s165 + $0x28] sm:$0xf]
      %v183 = vld [vmem:[%s165 + $0x2c] sm:$0x1]
      %v184 = vld [vmem:[%s165 + $0x30] sm:$0xf]
      %v185 = vld [vmem:[%s165 + $0x34] sm:$0x1]
      %v186 = vld [vmem:[%s165 + $0x38] sm:$0xf]
      %v187 = vld [vmem:[%s165 + $0x3c] sm:$0x1]
      %v188 = vld [vmem:[%s165 + $0x40] sm:$0xf]
      %v189 = vld [vmem:[%s165 + $0x44] sm:$0x1]
      %v190 = vld [vmem:[%s165 + $0x48] sm:$0xf]
      %v191 = vld [vmem:[%s165 + $0x4c] sm:$0x1]
      %v192 = vld [vmem:[%s1] sm:$0xff]
      %v193 = vld [vmem:[%s1 + $0x8] sm:$0xff]
      %v194 = vld [vmem:[%s1 + $0x10] sm:$0xff]
      %v195 = vld [vmem:[%s1 + $0x18] sm:$0xff]
      %v196 = vld [vmem:[%s1 + $0x20] sm:$0xff]
      %v197 = vld [vmem:[%s1 + $0x28] sm:$0xff]
      %v198 = vld [vmem:[%s1 + $0x30] sm:$0xff]
      %v199 = vld [vmem:[%s1 + $0x38] sm:$0xff]
      %v200 = vld [vmem:[%s1 + $0x40] sm:$0xff]
      %v201 = vld [vmem:[%s1 + $0x48] sm:$0xff]
      %v202 = vld [vmem:[%s1 + $0x50] sm:$0xff]
      %v203 = vld [vmem:[%s1 + $0x58] sm:$0xff]
      %v204 = vld [vmem:[%s1 + $0x60] sm:$0xff]
      %v205 = vld [vmem:[%s1 + $0x68] sm:$0xff]
      %v206 = vld [vmem:[%s1 + $0x70] sm:$0xff]
      %v207 = vld [vmem:[%s1 + $0x78] sm:$0xff]
      %vm208 = vsmask.f32 3328
      %vm209 = vsmask.f32 7440
      %vm210 = vmor %vm208, %vm209
      %v212 = vshrl.u32 %v172, 16
      %v214 = vrot.slane %v212, 4
      %v215 = vshll.u32 %v172, 16
      %v217 = vrot.slane %v215, 5
      %v218 = vor.u32 %v214, %v217
      %v219 = vrot.slane %v218, 4
      %v221 = vshll.u32 %v173, 16
      %v223 = vrot.slane %v221, 5
      %v224 = vsel %vm210, %v219, %v223
      %v226 = vshrl.u32 %v174, 16
      %v228 = vrot.slane %v226, 4
      %v229 = vshll.u32 %v174, 16
      %v231 = vrot.slane %v229, 5
      %v232 = vor.u32 %v228, %v231
      %v233 = vrot.slane %v232, 4
      %v235 = vshll.u32 %v175, 16
      %v237 = vrot.slane %v235, 5
      %v238 = vsel %vm210, %v233, %v237
      %v240 = vshrl.u32 %v176, 16
      %v242 = vrot.slane %v240, 4
      %v243 = vshll.u32 %v176, 16
      %v245 = vrot.slane %v243, 5
      %v246 = vor.u32 %v242, %v245
      %v247 = vrot.slane %v246, 4
      %v249 = vshll.u32 %v177, 16
      %v251 = vrot.slane %v249, 5
      %v252 = vsel %vm210, %v247, %v251
      %v254 = vshrl.u32 %v178, 16
      %v256 = vrot.slane %v254, 4
      %v257 = vshll.u32 %v178, 16
      %v259 = vrot.slane %v257, 5
      %v260 = vor.u32 %v256, %v259
      %v261 = vrot.slane %v260, 4
      %v263 = vshll.u32 %v179, 16
      %v265 = vrot.slane %v263, 5
      %v266 = vsel %vm210, %v261, %v265
      %v268 = vshrl.u32 %v180, 16
      %v270 = vrot.slane %v268, 4
      %v271 = vshll.u32 %v180, 16
      %v273 = vrot.slane %v271, 5
      %v274 = vor.u32 %v270, %v273
      %v275 = vrot.slane %v274, 4
      %v277 = vshll.u32 %v181, 16
      %v279 = vrot.slane %v277, 5
      %v280 = vsel %vm210, %v275, %v279
      %v282 = vshrl.u32 %v182, 16
      %v284 = vrot.slane %v282, 4
      %v285 = vshll.u32 %v182, 16
      %v287 = vrot.slane %v285, 5
      %v288 = vor.u32 %v284, %v287
      %v289 = vrot.slane %v288, 4
      %v291 = vshll.u32 %v183, 16
      %v293 = vrot.slane %v291, 5
      %v294 = vsel %vm210, %v289, %v293
      %v296 = vshrl.u32 %v184, 16
      %v298 = vrot.slane %v296, 4
      %v299 = vshll.u32 %v184, 16
      %v301 = vrot.slane %v299, 5
      %v302 = vor.u32 %v298, %v301
      %v303 = vrot.slane %v302, 4
      %v305 = vshll.u32 %v185, 16
      %v307 = vrot.slane %v305, 5
      %v308 = vsel %vm210, %v303, %v307
      %v310 = vshrl.u32 %v186, 16
      %v312 = vrot.slane %v310, 4
      %v313 = vshll.u32 %v186, 16
      %v315 = vrot.slane %v313, 5
      %v316 = vor.u32 %v312, %v315
      %v317 = vrot.slane %v316, 4
      %v319 = vshll.u32 %v187, 16
      %v321 = vrot.slane %v319, 5
      %v322 = vsel %vm210, %v317, %v321
      %s323 = scalar_lea.vmem %s1, 128
      %v324 = vld [vmem:[%s323] sm:$0xff]
      %v325 = vld [vmem:[%s323 + $0x8] sm:$0xff]
      %v326 = vld [vmem:[%s323 + $0x10] sm:$0xff]
      %v327 = vld [vmem:[%s323 + $0x18] sm:$0xff]
      %v328 = vld [vmem:[%s323 + $0x20] sm:$0xff]
      %v329 = vld [vmem:[%s323 + $0x28] sm:$0xff]
      %v330 = vld [vmem:[%s323 + $0x30] sm:$0xff]
      %v331 = vld [vmem:[%s323 + $0x38] sm:$0xff]
      %v332 = vld [vmem:[%s323 + $0x40] sm:$0xff]
      %v333 = vld [vmem:[%s323 + $0x48] sm:$0xff]
      %v334 = vld [vmem:[%s323 + $0x50] sm:$0xff]
      %v335 = vld [vmem:[%s323 + $0x58] sm:$0xff]
      %v336 = vld [vmem:[%s323 + $0x60] sm:$0xff]
      %v337 = vld [vmem:[%s323 + $0x68] sm:$0xff]
      %v338 = vld [vmem:[%s323 + $0x70] sm:$0xff]
      %v339 = vld [vmem:[%s323 + $0x78] sm:$0xff]
      %v340 = vunpack.c.l.b16 %v224
      %v341 = vunpack.c.l.b16 %v238
      %v342 = vunpack.c.l.b16 %v252
      %v343 = vunpack.c.l.b16 %v266
      %v344 = vunpack.c.l.b16 %v280
      %v345 = vunpack.c.l.b16 %v294
      %v346 = vunpack.c.l.b16 %v308
      %v347 = vunpack.c.l.b16 %v322
      %v348 = vpack.c.b16 %v341, %v340
      %v349 = vpack.c.b16 %v343, %v342
      %v350 = vpack.c.b16 %v345, %v344
      %v351 = vpack.c.b16 %v347, %v346
      %v372 = vunpack.c.l.b16 %v324
      %v373 = vunpack.c.h.b16 %v324
      %v374 = vunpack.c.l.b16 %v325
      %v375 = vunpack.c.h.b16 %v325
      %v376 = vunpack.c.l.b16 %v326
      %v377 = vunpack.c.h.b16 %v326
      %v378 = vunpack.c.l.b16 %v327
      %v379 = vunpack.c.h.b16 %v327
      %v380 = vunpack.c.l.b16 %v328
      %v381 = vunpack.c.h.b16 %v328
      %v382 = vunpack.c.l.b16 %v329
      %v383 = vunpack.c.h.b16 %v329
      %v384 = vunpack.c.l.b16 %v330
      %v385 = vunpack.c.h.b16 %v330
      %v386 = vunpack.c.l.b16 %v331
      %v387 = vunpack.c.h.b16 %v331
      %v388 = vunpack.c.l.b16 %v332
      %v389 = vunpack.c.h.b16 %v332
      %v390 = vunpack.c.l.b16 %v333
      %v391 = vunpack.c.h.b16 %v333
      %v392 = vunpack.c.l.b16 %v334
      %v393 = vunpack.c.h.b16 %v334
      %v394 = vunpack.c.l.b16 %v335
      %v395 = vunpack.c.h.b16 %v335
      %v396 = vunpack.c.l.b16 %v336
      %v397 = vunpack.c.h.b16 %v336
      %v398 = vunpack.c.l.b16 %v337
      %v399 = vunpack.c.h.b16 %v337
      %v400 = vunpack.c.l.b16 %v338
      %v401 = vunpack.c.h.b16 %v338
      %v402 = vunpack.c.l.b16 %v339
      %v403 = vunpack.c.h.b16 %v339
      %v404 = vpack.c.b16 %v374, %v372
      %v405 = vpack.c.b16 %v375, %v373
      %v406 = vpack.c.b16 %v378, %v376
      %v407 = vpack.c.b16 %v379, %v377
      %v408 = vpack.c.b16 %v382, %v380
      %v409 = vpack.c.b16 %v383, %v381
      %v410 = vpack.c.b16 %v386, %v384
      %v411 = vpack.c.b16 %v387, %v385
      %v412 = vpack.c.b16 %v390, %v388
      %v413 = vpack.c.b16 %v391, %v389
      %v414 = vpack.c.b16 %v394, %v392
      %v415 = vpack.c.b16 %v395, %v393
      %v416 = vpack.c.b16 %v398, %v396
      %v417 = vpack.c.b16 %v399, %v397
      %v418 = vpack.c.b16 %v402, %v400
      %v419 = vpack.c.b16 %v403, %v401
      %436 = vmatprep.subr.bf16.mxu0 %v405
      %437 = vmatpush1.bf16.msra.mxu0 %v404
      %438 = vmatprep.subr.bf16.mxu0 %v407
      %439 = vmatpush1.bf16.msra.mxu0 %v406
      %440 = vmatprep.subr.bf16.mxu0 %v409
      %441 = vmatpush1.bf16.msra.mxu0 %v408
      %442 = vmatprep.subr.bf16.mxu0 %v411
      %443 = vmatpush1.bf16.msra.mxu0 %v410
      %444 = vmatprep.subr.bf16.mxu0 %v413
      %445 = vmatpush1.bf16.msra.mxu0 %v412
      %446 = vmatprep.subr.bf16.mxu0 %v415
      %447 = vmatpush1.bf16.msra.mxu0 %v414
      %448 = vmatprep.subr.bf16.mxu0 %v417
      %449 = vmatpush1.bf16.msra.mxu0 %v416
      %450 = vmatprep.subr.bf16.mxu0 %v419
      %451 = vmatpush1.bf16.msra.mxu0 %v418
      %452 = vmatprep.subr.bf16.mxu0 0
      %453 = vmatpush1.bf16.msra.mxu0 0
      %454 = vmatprep.subr.bf16.mxu0 0
      %455 = vmatpush1.bf16.msra.mxu0 0
      %456 = vmatprep.subr.bf16.mxu0 0
      %457 = vmatpush1.bf16.msra.mxu0 0
      %458 = vmatprep.subr.bf16.mxu0 0
      %459 = vmatpush1.bf16.msra.mxu0 0
      %460 = vmatprep.subr.bf16.mxu0 0
      %461 = vmatpush1.bf16.msra.mxu0 0
      %462 = vmatprep.subr.bf16.mxu0 0
      %463 = vmatpush1.bf16.msra.mxu0 0
      %464 = vmatprep.subr.bf16.mxu0 0
      %465 = vmatpush1.bf16.msra.mxu0 0
      %466 = vmatprep.subr.bf16.mxu0 0
      %467 = vmatpush1.bf16.msra.mxu0 0
      %468 = vmatprep.mubr.bf16.mxu0 0
      %469 = vmatmul.mubr.bf16.gmra.mrb[0].mxu0 %v348
      %v470 = vpop.f32.mrb[0].mxu0
      %v471 = vadd.f32 0.0, %v470
      %v472 = vpop.f32.mrb[0].mxu0
      %v473 = vadd.f32 0.0, %v472
      %v474 = vpop.f32.mrb[0].mxu0
      %v475 = vadd.f32 0.0, %v474
      %v476 = vpop.f32.mrb[0].mxu0
      %v477 = vadd.f32 0.0, %v476
      %478 = vmatprep.mubr.bf16.mxu0 0
      %479 = vmatmul.mubr.bf16.gmra.mrb[0].mxu0 %v349
      %v480 = vpop.f32.mrb[0].mxu0
      %v481 = vadd.f32 0.0, %v480
      %v482 = vpop.f32.mrb[0].mxu0
      %v483 = vadd.f32 0.0, %v482
      %v484 = vpop.f32.mrb[0].mxu0
      %v485 = vadd.f32 0.0, %v484
      %v486 = vpop.f32.mrb[0].mxu0
      %v487 = vadd.f32 0.0, %v486
      %488 = vmatprep.mubr.bf16.mxu0 0
      %489 = vmatmul.mubr.bf16.gmra.mrb[0].mxu0 %v350
      %v490 = vpop.f32.mrb[0].mxu0
      %v491 = vadd.f32 0.0, %v490
      %v492 = vpop.f32.mrb[0].mxu0
      %v493 = vadd.f32 0.0, %v492
      %v494 = vpop.f32.mrb[0].mxu0
      %v495 = vadd.f32 0.0, %v494
      %v496 = vpop.f32.mrb[0].mxu0
      %v497 = vadd.f32 0.0, %v496
      %498 = vmatprep.mubr.bf16.mxu0 0
      %499 = vmatmul.mubr.bf16.gmra.mrb[0].mxu0 %v351
      %v500 = vpop.f32.mrb[0].mxu0
      %v501 = vadd.f32 0.0, %v500
      %v502 = vpop.f32.mrb[0].mxu0
      %v503 = vadd.f32 0.0, %v502
      %v504 = vpop.f32.mrb[0].mxu0
      %v505 = vadd.f32 0.0, %v504
      %v506 = vpop.f32.mrb[0].mxu0
      %v507 = vadd.f32 0.0, %v506
      %508 = vdwg.mxu0
      %v517 = vunpack.c.l.b16 %v172
      %v518 = vunpack.c.l.b16 %v174
      %v519 = vunpack.c.l.b16 %v176
      %v520 = vunpack.c.l.b16 %v178
      %v521 = vunpack.c.l.b16 %v180
      %v522 = vunpack.c.l.b16 %v182
      %v523 = vunpack.c.l.b16 %v184
      %v524 = vunpack.c.l.b16 %v186
      %v525 = vpack.c.b16 %v518, %v517
      %v526 = vpack.c.b16 %v520, %v519
      %v527 = vpack.c.b16 %v522, %v521
      %v528 = vpack.c.b16 %v524, %v523
      %v549 = vunpack.c.l.b16 %v192
      %v550 = vunpack.c.h.b16 %v192
      %v551 = vunpack.c.l.b16 %v193
      %v552 = vunpack.c.h.b16 %v193
      %v553 = vunpack.c.l.b16 %v194
      %v554 = vunpack.c.h.b16 %v194
      %v555 = vunpack.c.l.b16 %v195
      %v556 = vunpack.c.h.b16 %v195
      %v557 = vunpack.c.l.b16 %v196
      %v558 = vunpack.c.h.b16 %v196
      %v559 = vunpack.c.l.b16 %v197
      %v560 = vunpack.c.h.b16 %v197
      %v561 = vunpack.c.l.b16 %v198
      %v562 = vunpack.c.h.b16 %v198
      %v563 = vunpack.c.l.b16 %v199
      %v564 = vunpack.c.h.b16 %v199
      %v565 = vunpack.c.l.b16 %v200
      %v566 = vunpack.c.h.b16 %v200
      %v567 = vunpack.c.l.b16 %v201
      %v568 = vunpack.c.h.b16 %v201
      %v569 = vunpack.c.l.b16 %v202
      %v570 = vunpack.c.h.b16 %v202
      %v571 = vunpack.c.l.b16 %v203
      %v572 = vunpack.c.h.b16 %v203
      %v573 = vunpack.c.l.b16 %v204
      %v574 = vunpack.c.h.b16 %v204
      %v575 = vunpack.c.l.b16 %v205
      %v576 = vunpack.c.h.b16 %v205
      %v577 = vunpack.c.l.b16 %v206
      %v578 = vunpack.c.h.b16 %v206
      %v579 = vunpack.c.l.b16 %v207
      %v580 = vunpack.c.h.b16 %v207
      %v581 = vpack.c.b16 %v551, %v549
      %v582 = vpack.c.b16 %v552, %v550
      %v583 = vpack.c.b16 %v555, %v553
      %v584 = vpack.c.b16 %v556, %v554
      %v585 = vpack.c.b16 %v559, %v557
      %v586 = vpack.c.b16 %v560, %v558
      %v587 = vpack.c.b16 %v563, %v561
      %v588 = vpack.c.b16 %v564, %v562
      %v589 = vpack.c.b16 %v567, %v565
      %v590 = vpack.c.b16 %v568, %v566
      %v591 = vpack.c.b16 %v571, %v569
      %v592 = vpack.c.b16 %v572, %v570
      %v593 = vpack.c.b16 %v575, %v573
      %v594 = vpack.c.b16 %v576, %v574
      %v595 = vpack.c.b16 %v579, %v577
      %v596 = vpack.c.b16 %v580, %v578
      %613 = vmatprep.subr.bf16.mxu0 %v582
      %614 = vmatpush1.bf16.msra.mxu0 %v581
      %615 = vmatprep.subr.bf16.mxu0 %v584
      %616 = vmatpush1.bf16.msra.mxu0 %v583
      %617 = vmatprep.subr.bf16.mxu0 %v586
      %618 = vmatpush1.bf16.msra.mxu0 %v585
      %619 = vmatprep.subr.bf16.mxu0 %v588
      %620 = vmatpush1.bf16.msra.mxu0 %v587
      %621 = vmatprep.subr.bf16.mxu0 %v590
      %622 = vmatpush1.bf16.msra.mxu0 %v589
      %623 = vmatprep.subr.bf16.mxu0 %v592
      %624 = vmatpush1.bf16.msra.mxu0 %v591
      %625 = vmatprep.subr.bf16.mxu0 %v594
      %626 = vmatpush1.bf16.msra.mxu0 %v593
      %627 = vmatprep.subr.bf16.mxu0 %v596
      %628 = vmatpush1.bf16.msra.mxu0 %v595
      %629 = vmatprep.subr.bf16.mxu0 0
      %630 = vmatpush1.bf16.msra.mxu0 0
      %631 = vmatprep.subr.bf16.mxu0 0
      %632 = vmatpush1.bf16.msra.mxu0 0
      %633 = vmatprep.subr.bf16.mxu0 0
      %634 = vmatpush1.bf16.msra.mxu0 0
      %635 = vmatprep.subr.bf16.mxu0 0
      %636 = vmatpush1.bf16.msra.mxu0 0
      %637 = vmatprep.subr.bf16.mxu0 0
      %638 = vmatpush1.bf16.msra.mxu0 0
      %639 = vmatprep.subr.bf16.mxu0 0
      %640 = vmatpush1.bf16.msra.mxu0 0
      %641 = vmatprep.subr.bf16.mxu0 0
      %642 = vmatpush1.bf16.msra.mxu0 0
      %643 = vmatprep.subr.bf16.mxu0 0
      %644 = vmatpush1.bf16.msra.mxu0 0
      %645 = vmatprep.mubr.bf16.mxu0 0
      %646 = vmatmul.mubr.bf16.gmra.mrb[0].mxu0 %v525
      %v647 = vpop.f32.mrb[0].mxu0
      %v648 = vadd.f32 %v471, %v647
      %v649 = vpop.f32.mrb[0].mxu0
      %v650 = vadd.f32 %v473, %v649
      %v651 = vpop.f32.mrb[0].mxu0
      %v652 = vadd.f32 %v475, %v651
      %v653 = vpop.f32.mrb[0].mxu0
      %v654 = vadd.f32 %v477, %v653
      %655 = vmatprep.mubr.bf16.mxu0 0
      %656 = vmatmul.mubr.bf16.gmra.mrb[0].mxu0 %v526
      %v657 = vpop.f32.mrb[0].mxu0
      %v658 = vadd.f32 %v481, %v657
      %v659 = vpop.f32.mrb[0].mxu0
      %v660 = vadd.f32 %v483, %v659
      %v661 = vpop.f32.mrb[0].mxu0
      %v662 = vadd.f32 %v485, %v661
      %v663 = vpop.f32.mrb[0].mxu0
      %v664 = vadd.f32 %v487, %v663
      %665 = vmatprep.mubr.bf16.mxu0 0
      %666 = vmatmul.mubr.bf16.gmra.mrb[0].mxu0 %v527
      %v667 = vpop.f32.mrb[0].mxu0
      %v668 = vadd.f32 %v491, %v667
      %v669 = vpop.f32.mrb[0].mxu0
      %v670 = vadd.f32 %v493, %v669
      %v671 = vpop.f32.mrb[0].mxu0
      %v672 = vadd.f32 %v495, %v671
      %v673 = vpop.f32.mrb[0].mxu0
      %v674 = vadd.f32 %v497, %v673
      %675 = vmatprep.mubr.bf16.mxu0 0
      %676 = vmatmul.mubr.bf16.gmra.mrb[0].mxu0 %v528
      %v677 = vpop.f32.mrb[0].mxu0
      %v678 = vadd.f32 %v501, %v677
      %v679 = vpop.f32.mrb[0].mxu0
      %v680 = vadd.f32 %v503, %v679
      %v681 = vpop.f32.mrb[0].mxu0
      %v682 = vadd.f32 %v505, %v681
      %v683 = vpop.f32.mrb[0].mxu0
      %v684 = vadd.f32 %v507, %v683
      %685 = vdwg.mxu0
      %vm694 = vcmask 1042432
      %vm695 = vcmask 1046532
      %vm696 = vmor %vm694, %vm695
      %v697 = vrot.slane %v172, 5
      %v698 = vrot.slane %v697, 4
      %v699 = vrot.slane %v173, 5
      %v700 = vsel %vm696, %v698, %v699
      %v701 = vrot.slane %v174, 5
      %v702 = vrot.slane %v701, 4
      %v703 = vrot.slane %v175, 5
      %v704 = vsel %vm696, %v702, %v703
      %v705 = vrot.slane %v176, 5
      %v706 = vrot.slane %v705, 4
      %v707 = vrot.slane %v177, 5
      %v708 = vsel %vm696, %v706, %v707
      %v709 = vrot.slane %v178, 5
      %v710 = vrot.slane %v709, 4
      %v711 = vrot.slane %v179, 5
      %v712 = vsel %vm696, %v710, %v711
      %v713 = vrot.slane %v180, 5
      %v714 = vrot.slane %v713, 4
      %v715 = vrot.slane %v181, 5
      %v716 = vsel %vm696, %v714, %v715
      %v717 = vrot.slane %v182, 5
      %v718 = vrot.slane %v717, 4
      %v719 = vrot.slane %v183, 5
      %v720 = vsel %vm696, %v718, %v719
      %v721 = vrot.slane %v184, 5
      %v722 = vrot.slane %v721, 4
      %v723 = vrot.slane %v185, 5
      %v724 = vsel %vm696, %v722, %v723
      %v725 = vrot.slane %v186, 5
      %v726 = vrot.slane %v725, 4
      %v727 = vrot.slane %v187, 5
      %v728 = vsel %vm696, %v726, %v727
      %s729 = scalar_lea.vmem %s1, 256
      %v730 = vld [vmem:[%s729] sm:$0xff]
      %v731 = vld [vmem:[%s729 + $0x8] sm:$0xff]
      %v732 = vld [vmem:[%s729 + $0x10] sm:$0xff]
      %v733 = vld [vmem:[%s729 + $0x18] sm:$0xff]
      %v734 = vld [vmem:[%s729 + $0x20] sm:$0xff]
      %v735 = vld [vmem:[%s729 + $0x28] sm:$0xff]
      %v736 = vld [vmem:[%s729 + $0x30] sm:$0xff]
      %v737 = vld [vmem:[%s729 + $0x38] sm:$0xff]
      %v738 = vld [vmem:[%s729 + $0x40] sm:$0xff]
      %v739 = vld [vmem:[%s729 + $0x48] sm:$0xff]
      %v740 = vld [vmem:[%s729 + $0x50] sm:$0xff]
      %v741 = vld [vmem:[%s729 + $0x58] sm:$0xff]
      %v742 = vld [vmem:[%s729 + $0x60] sm:$0xff]
      %v743 = vld [vmem:[%s729 + $0x68] sm:$0xff]
      %v744 = vld [vmem:[%s729 + $0x70] sm:$0xff]
      %v745 = vld [vmem:[%s729 + $0x78] sm:$0xff]
      %v746 = vunpack.c.l.b16 %v700
      %v747 = vunpack.c.l.b16 %v704
      %v748 = vunpack.c.l.b16 %v708
      %v749 = vunpack.c.l.b16 %v712
      %v750 = vunpack.c.l.b16 %v716
      %v751 = vunpack.c.l.b16 %v720
      %v752 = vunpack.c.l.b16 %v724
      %v753 = vunpack.c.l.b16 %v728
      %v754 = vpack.c.b16 %v747, %v746
      %v755 = vpack.c.b16 %v749, %v748
      %v756 = vpack.c.b16 %v751, %v750
      %v757 = vpack.c.b16 %v753, %v752
      %v778 = vunpack.c.l.b16 %v730
      %v779 = vunpack.c.h.b16 %v730
      %v780 = vunpack.c.l.b16 %v731
      %v781 = vunpack.c.h.b16 %v731
      %v782 = vunpack.c.l.b16 %v732
      %v783 = vunpack.c.h.b16 %v732
      %v784 = vunpack.c.l.b16 %v733
      %v785 = vunpack.c.h.b16 %v733
      %v786 = vunpack.c.l.b16 %v734
      %v787 = vunpack.c.h.b16 %v734
      %v788 = vunpack.c.l.b16 %v735
      %v789 = vunpack.c.h.b16 %v735
      %v790 = vunpack.c.l.b16 %v736
      %v791 = vunpack.c.h.b16 %v736
      %v792 = vunpack.c.l.b16 %v737
      %v793 = vunpack.c.h.b16 %v737
      %v794 = vunpack.c.l.b16 %v738
      %v795 = vunpack.c.h.b16 %v738
      %v796 = vunpack.c.l.b16 %v739
      %v797 = vunpack.c.h.b16 %v739
      %v798 = vunpack.c.l.b16 %v740
      %v799 = vunpack.c.h.b16 %v740
      %v800 = vunpack.c.l.b16 %v741
      %v801 = vunpack.c.h.b16 %v741
      %v802 = vunpack.c.l.b16 %v742
      %v803 = vunpack.c.h.b16 %v742
      %v804 = vunpack.c.l.b16 %v743
      %v805 = vunpack.c.h.b16 %v743
      %v806 = vunpack.c.l.b16 %v744
      %v807 = vunpack.c.h.b16 %v744
      %v808 = vunpack.c.l.b16 %v745
      %v809 = vunpack.c.h.b16 %v745
      %v810 = vpack.c.b16 %v780, %v778
      %v811 = vpack.c.b16 %v781, %v779
      %v812 = vpack.c.b16 %v784, %v782
      %v813 = vpack.c.b16 %v785, %v783
      %v814 = vpack.c.b16 %v788, %v786
      %v815 = vpack.c.b16 %v789, %v787
      %v816 = vpack.c.b16 %v792, %v790
      %v817 = vpack.c.b16 %v793, %v791
      %v818 = vpack.c.b16 %v796, %v794
      %v819 = vpack.c.b16 %v797, %v795
      %v820 = vpack.c.b16 %v800, %v798
      %v821 = vpack.c.b16 %v801, %v799
      %v822 = vpack.c.b16 %v804, %v802
      %v823 = vpack.c.b16 %v805, %v803
      %v824 = vpack.c.b16 %v808, %v806
      %v825 = vpack.c.b16 %v809, %v807
      %842 = vmatprep.subr.bf16.mxu0 %v811
      %843 = vmatpush1.bf16.msra.mxu0 %v810
      %844 = vmatprep.subr.bf16.mxu0 %v813
      %845 = vmatpush1.bf16.msra.mxu0 %v812
      %846 = vmatprep.subr.bf16.mxu0 %v815
      %847 = vmatpush1.bf16.msra.mxu0 %v814
      %848 = vmatprep.subr.bf16.mxu0 %v817
      %849 = vmatpush1.bf16.msra.mxu0 %v816
      %850 = vmatprep.subr.bf16.mxu0 %v819
      %851 = vmatpush1.bf16.msra.mxu0 %v818
      %852 = vmatprep.subr.bf16.mxu0 %v821
      %853 = vmatpush1.bf16.msra.mxu0 %v820
      %854 = vmatprep.subr.bf16.mxu0 %v823
      %855 = vmatpush1.bf16.msra.mxu0 %v822
      %856 = vmatprep.subr.bf16.mxu0 %v825
      %857 = vmatpush1.bf16.msra.mxu0 %v824
      %858 = vmatprep.subr.bf16.mxu0 0
      %859 = vmatpush1.bf16.msra.mxu0 0
      %860 = vmatprep.subr.bf16.mxu0 0
      %861 = vmatpush1.bf16.msra.mxu0 0
      %862 = vmatprep.subr.bf16.mxu0 0
      %863 = vmatpush1.bf16.msra.mxu0 0
      %864 = vmatprep.subr.bf16.mxu0 0
      %865 = vmatpush1.bf16.msra.mxu0 0
      %866 = vmatprep.subr.bf16.mxu0 0
      %867 = vmatpush1.bf16.msra.mxu0 0
      %868 = vmatprep.subr.bf16.mxu0 0
      %869 = vmatpush1.bf16.msra.mxu0 0
      %870 = vmatprep.subr.bf16.mxu0 0
      %871 = vmatpush1.bf16.msra.mxu0 0
      %872 = vmatprep.subr.bf16.mxu0 0
      %873 = vmatpush1.bf16.msra.mxu0 0
      %874 = vmatprep.mubr.bf16.mxu0 0
      %875 = vmatmul.mubr.bf16.gmra.mrb[0].mxu0 %v754
      %v876 = vpop.f32.mrb[0].mxu0
      %v877 = vadd.f32 0.0, %v876
      %v878 = vpop.f32.mrb[0].mxu0
      %v879 = vadd.f32 0.0, %v878
      %v880 = vpop.f32.mrb[0].mxu0
      %v881 = vadd.f32 0.0, %v880
      %v882 = vpop.f32.mrb[0].mxu0
      %v883 = vadd.f32 0.0, %v882
      %884 = vmatprep.mubr.bf16.mxu0 0
      %885 = vmatmul.mubr.bf16.gmra.mrb[0].mxu0 %v755
      %v886 = vpop.f32.mrb[0].mxu0
      %v887 = vadd.f32 0.0, %v886
      %v888 = vpop.f32.mrb[0].mxu0
      %v889 = vadd.f32 0.0, %v888
      %v890 = vpop.f32.mrb[0].mxu0
      %v891 = vadd.f32 0.0, %v890
      %v892 = vpop.f32.mrb[0].mxu0
      %v893 = vadd.f32 0.0, %v892
      %894 = vmatprep.mubr.bf16.mxu0 0
      %895 = vmatmul.mubr.bf16.gmra.mrb[0].mxu0 %v756
      %v896 = vpop.f32.mrb[0].mxu0
      %v897 = vadd.f32 0.0, %v896
      %v898 = vpop.f32.mrb[0].mxu0
      %v899 = vadd.f32 0.0, %v898
      %v900 = vpop.f32.mrb[0].mxu0
      %v901 = vadd.f32 0.0, %v900
      %v902 = vpop.f32.mrb[0].mxu0
      %v903 = vadd.f32 0.0, %v902
      %904 = vmatprep.mubr.bf16.mxu0 0
      %905 = vmatmul.mubr.bf16.gmra.mrb[0].mxu0 %v757
      %v906 = vpop.f32.mrb[0].mxu0
      %v907 = vadd.f32 0.0, %v906
      %v908 = vpop.f32.mrb[0].mxu0
      %v909 = vadd.f32 0.0, %v908
      %v910 = vpop.f32.mrb[0].mxu0
      %v911 = vadd.f32 0.0, %v910
      %v912 = vpop.f32.mrb[0].mxu0
      %v913 = vadd.f32 0.0, %v912
      %914 = vdwg.mxu0
      %v915 = vadd.f32 %v648, %v877
      %v916 = vadd.f32 %v650, %v879
      %v917 = vadd.f32 %v652, %v881
      %v918 = vadd.f32 %v654, %v883
      %v919 = vadd.f32 %v658, %v887
      %v920 = vadd.f32 %v660, %v889
      %v921 = vadd.f32 %v662, %v891
      %v922 = vadd.f32 %v664, %v893
      %v923 = vadd.f32 %v668, %v897
      %v924 = vadd.f32 %v670, %v899
      %v925 = vadd.f32 %v672, %v901
      %v926 = vadd.f32 %v674, %v903
      %v927 = vadd.f32 %v678, %v907
      %v928 = vadd.f32 %v680, %v909
      %v929 = vadd.f32 %v682, %v911
      %v930 = vadd.f32 %v684, %v913
      %s931 = scalar_lea.vmem %s1, 384
      %v932 = vld [vmem:[%s931] sm:$0xff]
      %v933 = vld [vmem:[%s931 + $0x8] sm:$0xff]
      %v934 = vld [vmem:[%s931 + $0x10] sm:$0xff]
      %v935 = vld [vmem:[%s931 + $0x18] sm:$0xff]
      %v936 = vld [vmem:[%s931 + $0x20] sm:$0xff]
      %v937 = vld [vmem:[%s931 + $0x28] sm:$0xff]
      %v938 = vld [vmem:[%s931 + $0x30] sm:$0xff]
      %v939 = vld [vmem:[%s931 + $0x38] sm:$0xff]
      %v940 = vld [vmem:[%s931 + $0x40] sm:$0xff]
      %v941 = vld [vmem:[%s931 + $0x48] sm:$0xff]
      %v942 = vld [vmem:[%s931 + $0x50] sm:$0xff]
      %v943 = vld [vmem:[%s931 + $0x58] sm:$0xff]
      %v944 = vld [vmem:[%s931 + $0x60] sm:$0xff]
      %v945 = vld [vmem:[%s931 + $0x68] sm:$0xff]
      %v946 = vld [vmem:[%s931 + $0x70] sm:$0xff]
      %v947 = vld [vmem:[%s931 + $0x78] sm:$0xff]
      %v949 = vunpack.c.l.b16 %v188
      %v950 = vpack.c.b16 %v519, %v518
      %v951 = vpack.c.b16 %v521, %v520
      %v952 = vpack.c.b16 %v523, %v522
      %v953 = vpack.c.b16 %v949, %v524
      %v974 = vunpack.c.l.b16 %v932
      %v975 = vunpack.c.h.b16 %v932
      %v976 = vunpack.c.l.b16 %v933
      %v977 = vunpack.c.h.b16 %v933
      %v978 = vunpack.c.l.b16 %v934
      %v979 = vunpack.c.h.b16 %v934
      %v980 = vunpack.c.l.b16 %v935
      %v981 = vunpack.c.h.b16 %v935
      %v982 = vunpack.c.l.b16 %v936
      %v983 = vunpack.c.h.b16 %v936
      %v984 = vunpack.c.l.b16 %v937
      %v985 = vunpack.c.h.b16 %v937
      %v986 = vunpack.c.l.b16 %v938
      %v987 = vunpack.c.h.b16 %v938
      %v988 = vunpack.c.l.b16 %v939
      %v989 = vunpack.c.h.b16 %v939
      %v990 = vunpack.c.l.b16 %v940
      %v991 = vunpack.c.h.b16 %v940
      %v992 = vunpack.c.l.b16 %v941
      %v993 = vunpack.c.h.b16 %v941
      %v994 = vunpack.c.l.b16 %v942
      %v995 = vunpack.c.h.b16 %v942
      %v996 = vunpack.c.l.b16 %v943
      %v997 = vunpack.c.h.b16 %v943
      %v998 = vunpack.c.l.b16 %v944
      %v999 = vunpack.c.h.b16 %v944
      %v1000 = vunpack.c.l.b16 %v945
      %v1001 = vunpack.c.h.b16 %v945
      %v1002 = vunpack.c.l.b16 %v946
      %v1003 = vunpack.c.h.b16 %v946
      %v1004 = vunpack.c.l.b16 %v947
      %v1005 = vunpack.c.h.b16 %v947
      %v1006 = vpack.c.b16 %v976, %v974
      %v1007 = vpack.c.b16 %v977, %v975
      %v1008 = vpack.c.b16 %v980, %v978
      %v1009 = vpack.c.b16 %v981, %v979
      %v1010 = vpack.c.b16 %v984, %v982
      %v1011 = vpack.c.b16 %v985, %v983
      %v1012 = vpack.c.b16 %v988, %v986
      %v1013 = vpack.c.b16 %v989, %v987
      %v1014 = vpack.c.b16 %v992, %v990
      %v1015 = vpack.c.b16 %v993, %v991
      %v1016 = vpack.c.b16 %v996, %v994
      %v1017 = vpack.c.b16 %v997, %v995
      %v1018 = vpack.c.b16 %v1000, %v998
      %v1019 = vpack.c.b16 %v1001, %v999
      %v1020 = vpack.c.b16 %v1004, %v1002
      %v1021 = vpack.c.b16 %v1005, %v1003
      %1038 = vmatprep.subr.bf16.mxu0 %v1007
      %1039 = vmatpush1.bf16.msra.mxu0 %v1006
      %1040 = vmatprep.subr.bf16.mxu0 %v1009
      %1041 = vmatpush1.bf16.msra.mxu0 %v1008
      %1042 = vmatprep.subr.bf16.mxu0 %v1011
      %1043 = vmatpush1.bf16.msra.mxu0 %v1010
      %1044 = vmatprep.subr.bf16.mxu0 %v1013
      %1045 = vmatpush1.bf16.msra.mxu0 %v1012
      %1046 = vmatprep.subr.bf16.mxu0 %v1015
      %1047 = vmatpush1.bf16.msra.mxu0 %v1014
      %1048 = vmatprep.subr.bf16.mxu0 %v1017
      %1049 = vmatpush1.bf16.msra.mxu0 %v1016
      %1050 = vmatprep.subr.bf16.mxu0 %v1019
      %1051 = vmatpush1.bf16.msra.mxu0 %v1018
      %1052 = vmatprep.subr.bf16.mxu0 %v1021
      %1053 = vmatpush1.bf16.msra.mxu0 %v1020
      %1054 = vmatprep.subr.bf16.mxu0 0
      %1055 = vmatpush1.bf16.msra.mxu0 0
      %1056 = vmatprep.subr.bf16.mxu0 0
      %1057 = vmatpush1.bf16.msra.mxu0 0
      %1058 = vmatprep.subr.bf16.mxu0 0
      %1059 = vmatpush1.bf16.msra.mxu0 0
      %1060 = vmatprep.subr.bf16.mxu0 0
      %1061 = vmatpush1.bf16.msra.mxu0 0
      %1062 = vmatprep.subr.bf16.mxu0 0
      %1063 = vmatpush1.bf16.msra.mxu0 0
      %1064 = vmatprep.subr.bf16.mxu0 0
      %1065 = vmatpush1.bf16.msra.mxu0 0
      %1066 = vmatprep.subr.bf16.mxu0 0
      %1067 = vmatpush1.bf16.msra.mxu0 0
      %1068 = vmatprep.subr.bf16.mxu0 0
      %1069 = vmatpush1.bf16.msra.mxu0 0
      %1070 = vmatprep.mubr.bf16.mxu0 0
      %1071 = vmatmul.mubr.bf16.gmra.mrb[0].mxu0 %v950
      %v1072 = vpop.f32.mrb[0].mxu0
      %v1073 = vadd.f32 0.0, %v1072
      %v1074 = vpop.f32.mrb[0].mxu0
      %v1075 = vadd.f32 0.0, %v1074
      %v1076 = vpop.f32.mrb[0].mxu0
      %v1077 = vadd.f32 0.0, %v1076
      %v1078 = vpop.f32.mrb[0].mxu0
      %v1079 = vadd.f32 0.0, %v1078
      %1080 = vmatprep.mubr.bf16.mxu0 0
      %1081 = vmatmul.mubr.bf16.gmra.mrb[0].mxu0 %v951
      %v1082 = vpop.f32.mrb[0].mxu0
      %v1083 = vadd.f32 0.0, %v1082
      %v1084 = vpop.f32.mrb[0].mxu0
      %v1085 = vadd.f32 0.0, %v1084
      %v1086 = vpop.f32.mrb[0].mxu0
      %v1087 = vadd.f32 0.0, %v1086
      %v1088 = vpop.f32.mrb[0].mxu0
      %v1089 = vadd.f32 0.0, %v1088
      %1090 = vmatprep.mubr.bf16.mxu0 0
      %1091 = vmatmul.mubr.bf16.gmra.mrb[0].mxu0 %v952
      %v1092 = vpop.f32.mrb[0].mxu0
      %v1093 = vadd.f32 0.0, %v1092
      %v1094 = vpop.f32.mrb[0].mxu0
      %v1095 = vadd.f32 0.0, %v1094
      %v1096 = vpop.f32.mrb[0].mxu0
      %v1097 = vadd.f32 0.0, %v1096
      %v1098 = vpop.f32.mrb[0].mxu0
      %v1099 = vadd.f32 0.0, %v1098
      %1100 = vmatprep.mubr.bf16.mxu0 0
      %1101 = vmatmul.mubr.bf16.gmra.mrb[0].mxu0 %v953
      %v1102 = vpop.f32.mrb[0].mxu0
      %v1103 = vadd.f32 0.0, %v1102
      %v1104 = vpop.f32.mrb[0].mxu0
      %v1105 = vadd.f32 0.0, %v1104
      %v1106 = vpop.f32.mrb[0].mxu0
      %v1107 = vadd.f32 0.0, %v1106
      %v1108 = vpop.f32.mrb[0].mxu0
      %v1109 = vadd.f32 0.0, %v1108
      %1110 = vdwg.mxu0
      %v1111 = vadd.f32 %v915, %v1073
      %v1112 = vadd.f32 %v916, %v1075
      %v1113 = vadd.f32 %v917, %v1077
      %v1114 = vadd.f32 %v918, %v1079
      %v1115 = vadd.f32 %v919, %v1083
      %v1116 = vadd.f32 %v920, %v1085
      %v1117 = vadd.f32 %v921, %v1087
      %v1118 = vadd.f32 %v922, %v1089
      %v1119 = vadd.f32 %v923, %v1093
      %v1120 = vadd.f32 %v924, %v1095
      %v1121 = vadd.f32 %v925, %v1097
      %v1122 = vadd.f32 %v926, %v1099
      %v1123 = vadd.f32 %v927, %v1103
      %v1124 = vadd.f32 %v928, %v1105
      %v1125 = vadd.f32 %v929, %v1107
      %v1126 = vadd.f32 %v930, %v1109
      %v1128 = vshrl.u32 %v188, 16
      %v1130 = vrot.slane %v1128, 4
      %v1131 = vshll.u32 %v188, 16
      %v1133 = vrot.slane %v1131, 5
      %v1134 = vor.u32 %v1130, %v1133
      %v1135 = vrot.slane %v1134, 4
      %v1137 = vshll.u32 %v189, 16
      %v1139 = vrot.slane %v1137, 5
      %v1140 = vsel %vm210, %v1135, %v1139
      %s1141 = scalar_lea.vmem %s1, 512
      %v1142 = vld [vmem:[%s1141] sm:$0xff]
      %v1143 = vld [vmem:[%s1141 + $0x8] sm:$0xff]
      %v1144 = vld [vmem:[%s1141 + $0x10] sm:$0xff]
      %v1145 = vld [vmem:[%s1141 + $0x18] sm:$0xff]
      %v1146 = vld [vmem:[%s1141 + $0x20] sm:$0xff]
      %v1147 = vld [vmem:[%s1141 + $0x28] sm:$0xff]
      %v1148 = vld [vmem:[%s1141 + $0x30] sm:$0xff]
      %v1149 = vld [vmem:[%s1141 + $0x38] sm:$0xff]
      %v1150 = vld [vmem:[%s1141 + $0x40] sm:$0xff]
      %v1151 = vld [vmem:[%s1141 + $0x48] sm:$0xff]
      %v1152 = vld [vmem:[%s1141 + $0x50] sm:$0xff]
      %v1153 = vld [vmem:[%s1141 + $0x58] sm:$0xff]
      %v1154 = vld [vmem:[%s1141 + $0x60] sm:$0xff]
      %v1155 = vld [vmem:[%s1141 + $0x68] sm:$0xff]
      %v1156 = vld [vmem:[%s1141 + $0x70] sm:$0xff]
      %v1157 = vld [vmem:[%s1141 + $0x78] sm:$0xff]
      %v1158 = vunpack.c.l.b16 %v1140
      %v1159 = vpack.c.b16 %v342, %v341
      %v1160 = vpack.c.b16 %v344, %v343
      %v1161 = vpack.c.b16 %v346, %v345
      %v1162 = vpack.c.b16 %v1158, %v347
      %v1183 = vunpack.c.l.b16 %v1142
      %v1184 = vunpack.c.h.b16 %v1142
      %v1185 = vunpack.c.l.b16 %v1143
      %v1186 = vunpack.c.h.b16 %v1143
      %v1187 = vunpack.c.l.b16 %v1144
      %v1188 = vunpack.c.h.b16 %v1144
      %v1189 = vunpack.c.l.b16 %v1145
      %v1190 = vunpack.c.h.b16 %v1145
      %v1191 = vunpack.c.l.b16 %v1146
      %v1192 = vunpack.c.h.b16 %v1146
      %v1193 = vunpack.c.l.b16 %v1147
      %v1194 = vunpack.c.h.b16 %v1147
      %v1195 = vunpack.c.l.b16 %v1148
      %v1196 = vunpack.c.h.b16 %v1148
      %v1197 = vunpack.c.l.b16 %v1149
      %v1198 = vunpack.c.h.b16 %v1149
      %v1199 = vunpack.c.l.b16 %v1150
      %v1200 = vunpack.c.h.b16 %v1150
      %v1201 = vunpack.c.l.b16 %v1151
      %v1202 = vunpack.c.h.b16 %v1151
      %v1203 = vunpack.c.l.b16 %v1152
      %v1204 = vunpack.c.h.b16 %v1152
      %v1205 = vunpack.c.l.b16 %v1153
      %v1206 = vunpack.c.h.b16 %v1153
      %v1207 = vunpack.c.l.b16 %v1154
      %v1208 = vunpack.c.h.b16 %v1154
      %v1209 = vunpack.c.l.b16 %v1155
      %v1210 = vunpack.c.h.b16 %v1155
      %v1211 = vunpack.c.l.b16 %v1156
      %v1212 = vunpack.c.h.b16 %v1156
      %v1213 = vunpack.c.l.b16 %v1157
      %v1214 = vunpack.c.h.b16 %v1157
      %v1215 = vpack.c.b16 %v1185, %v1183
      %v1216 = vpack.c.b16 %v1186, %v1184
      %v1217 = vpack.c.b16 %v1189, %v1187
      %v1218 = vpack.c.b16 %v1190, %v1188
      %v1219 = vpack.c.b16 %v1193, %v1191
      %v1220 = vpack.c.b16 %v1194, %v1192
      %v1221 = vpack.c.b16 %v1197, %v1195
      %v1222 = vpack.c.b16 %v1198, %v1196
      %v1223 = vpack.c.b16 %v1201, %v1199
      %v1224 = vpack.c.b16 %v1202, %v1200
      %v1225 = vpack.c.b16 %v1205, %v1203
      %v1226 = vpack.c.b16 %v1206, %v1204
      %v1227 = vpack.c.b16 %v1209, %v1207
      %v1228 = vpack.c.b16 %v1210, %v1208
      %v1229 = vpack.c.b16 %v1213, %v1211
      %v1230 = vpack.c.b16 %v1214, %v1212
      %1247 = vmatprep.subr.bf16.mxu0 %v1216
      %1248 = vmatpush1.bf16.msra.mxu0 %v1215
      %1249 = vmatprep.subr.bf16.mxu0 %v1218
      %1250 = vmatpush1.bf16.msra.mxu0 %v1217
      %1251 = vmatprep.subr.bf16.mxu0 %v1220
      %1252 = vmatpush1.bf16.msra.mxu0 %v1219
      %1253 = vmatprep.subr.bf16.mxu0 %v1222
      %1254 = vmatpush1.bf16.msra.mxu0 %v1221
      %1255 = vmatprep.subr.bf16.mxu0 %v1224
      %1256 = vmatpush1.bf16.msra.mxu0 %v1223
      %1257 = vmatprep.subr.bf16.mxu0 %v1226
      %1258 = vmatpush1.bf16.msra.mxu0 %v1225
      %1259 = vmatprep.subr.bf16.mxu0 %v1228
      %1260 = vmatpush1.bf16.msra.mxu0 %v1227
      %1261 = vmatprep.subr.bf16.mxu0 %v1230
      %1262 = vmatpush1.bf16.msra.mxu0 %v1229
      %1263 = vmatprep.subr.bf16.mxu0 0
      %1264 = vmatpush1.bf16.msra.mxu0 0
      %1265 = vmatprep.subr.bf16.mxu0 0
      %1266 = vmatpush1.bf16.msra.mxu0 0
      %1267 = vmatprep.subr.bf16.mxu0 0
      %1268 = vmatpush1.bf16.msra.mxu0 0
      %1269 = vmatprep.subr.bf16.mxu0 0
      %1270 = vmatpush1.bf16.msra.mxu0 0
      %1271 = vmatprep.subr.bf16.mxu0 0
      %1272 = vmatpush1.bf16.msra.mxu0 0
      %1273 = vmatprep.subr.bf16.mxu0 0
      %1274 = vmatpush1.bf16.msra.mxu0 0
      %1275 = vmatprep.subr.bf16.mxu0 0
      %1276 = vmatpush1.bf16.msra.mxu0 0
      %1277 = vmatprep.subr.bf16.mxu0 0
      %1278 = vmatpush1.bf16.msra.mxu0 0
      %1279 = vmatprep.mubr.bf16.mxu0 0
      %1280 = vmatmul.mubr.bf16.gmra.mrb[0].mxu0 %v1159
      %v1281 = vpop.f32.mrb[0].mxu0
      %v1282 = vadd.f32 0.0, %v1281
      %v1283 = vpop.f32.mrb[0].mxu0
      %v1284 = vadd.f32 0.0, %v1283
      %v1285 = vpop.f32.mrb[0].mxu0
      %v1286 = vadd.f32 0.0, %v1285
      %v1287 = vpop.f32.mrb[0].mxu0
      %v1288 = vadd.f32 0.0, %v1287
      %1289 = vmatprep.mubr.bf16.mxu0 0
      %1290 = vmatmul.mubr.bf16.gmra.mrb[0].mxu0 %v1160
      %v1291 = vpop.f32.mrb[0].mxu0
      %v1292 = vadd.f32 0.0, %v1291
      %v1293 = vpop.f32.mrb[0].mxu0
      %v1294 = vadd.f32 0.0, %v1293
      %v1295 = vpop.f32.mrb[0].mxu0
      %v1296 = vadd.f32 0.0, %v1295
      %v1297 = vpop.f32.mrb[0].mxu0
      %v1298 = vadd.f32 0.0, %v1297
      %1299 = vmatprep.mubr.bf16.mxu0 0
      %1300 = vmatmul.mubr.bf16.gmra.mrb[0].mxu0 %v1161
      %v1301 = vpop.f32.mrb[0].mxu0
      %v1302 = vadd.f32 0.0, %v1301
      %v1303 = vpop.f32.mrb[0].mxu0
      %v1304 = vadd.f32 0.0, %v1303
      %v1305 = vpop.f32.mrb[0].mxu0
      %v1306 = vadd.f32 0.0, %v1305
      %v1307 = vpop.f32.mrb[0].mxu0
      %v1308 = vadd.f32 0.0, %v1307
      %1309 = vmatprep.mubr.bf16.mxu0 0
      %1310 = vmatmul.mubr.bf16.gmra.mrb[0].mxu0 %v1162
      %v1311 = vpop.f32.mrb[0].mxu0
      %v1312 = vadd.f32 0.0, %v1311
      %v1313 = vpop.f32.mrb[0].mxu0
      %v1314 = vadd.f32 0.0, %v1313
      %v1315 = vpop.f32.mrb[0].mxu0
      %v1316 = vadd.f32 0.0, %v1315
      %v1317 = vpop.f32.mrb[0].mxu0
      %v1318 = vadd.f32 0.0, %v1317
      %1319 = vdwg.mxu0
      %v1320 = vadd.f32 %v1111, %v1282
      %v1321 = vadd.f32 %v1112, %v1284
      %v1322 = vadd.f32 %v1113, %v1286
      %v1323 = vadd.f32 %v1114, %v1288
      %v1324 = vadd.f32 %v1115, %v1292
      %v1325 = vadd.f32 %v1116, %v1294
      %v1326 = vadd.f32 %v1117, %v1296
      %v1327 = vadd.f32 %v1118, %v1298
      %v1328 = vadd.f32 %v1119, %v1302
      %v1329 = vadd.f32 %v1120, %v1304
      %v1330 = vadd.f32 %v1121, %v1306
      %v1331 = vadd.f32 %v1122, %v1308
      %v1332 = vadd.f32 %v1123, %v1312
      %v1333 = vadd.f32 %v1124, %v1314
      %v1334 = vadd.f32 %v1125, %v1316
      %v1335 = vadd.f32 %v1126, %v1318
      %v1337 = vrot.slane %v188, 5
      %v1338 = vrot.slane %v1337, 4
      %v1339 = vrot.slane %v189, 5
      %v1340 = vsel %vm696, %v1338, %v1339
      %s1341 = scalar_lea.vmem %s1, 640
      %v1342 = vld [vmem:[%s1341] sm:$0xff]
      %v1343 = vld [vmem:[%s1341 + $0x8] sm:$0xff]
      %v1344 = vld [vmem:[%s1341 + $0x10] sm:$0xff]
      %v1345 = vld [vmem:[%s1341 + $0x18] sm:$0xff]
      %v1346 = vld [vmem:[%s1341 + $0x20] sm:$0xff]
      %v1347 = vld [vmem:[%s1341 + $0x28] sm:$0xff]
      %v1348 = vld [vmem:[%s1341 + $0x30] sm:$0xff]
      %v1349 = vld [vmem:[%s1341 + $0x38] sm:$0xff]
      %v1350 = vld [vmem:[%s1341 + $0x40] sm:$0xff]
      %v1351 = vld [vmem:[%s1341 + $0x48] sm:$0xff]
      %v1352 = vld [vmem:[%s1341 + $0x50] sm:$0xff]
      %v1353 = vld [vmem:[%s1341 + $0x58] sm:$0xff]
      %v1354 = vld [vmem:[%s1341 + $0x60] sm:$0xff]
      %v1355 = vld [vmem:[%s1341 + $0x68] sm:$0xff]
      %v1356 = vld [vmem:[%s1341 + $0x70] sm:$0xff]
      %v1357 = vld [vmem:[%s1341 + $0x78] sm:$0xff]
      %v1358 = vunpack.c.l.b16 %v1340
      %v1359 = vpack.c.b16 %v748, %v747
      %v1360 = vpack.c.b16 %v750, %v749
      %v1361 = vpack.c.b16 %v752, %v751
      %v1362 = vpack.c.b16 %v1358, %v753
      %v1383 = vunpack.c.l.b16 %v1342
      %v1384 = vunpack.c.h.b16 %v1342
      %v1385 = vunpack.c.l.b16 %v1343
      %v1386 = vunpack.c.h.b16 %v1343
      %v1387 = vunpack.c.l.b16 %v1344
      %v1388 = vunpack.c.h.b16 %v1344
      %v1389 = vunpack.c.l.b16 %v1345
      %v1390 = vunpack.c.h.b16 %v1345
      %v1391 = vunpack.c.l.b16 %v1346
      %v1392 = vunpack.c.h.b16 %v1346
      %v1393 = vunpack.c.l.b16 %v1347
      %v1394 = vunpack.c.h.b16 %v1347
      %v1395 = vunpack.c.l.b16 %v1348
      %v1396 = vunpack.c.h.b16 %v1348
      %v1397 = vunpack.c.l.b16 %v1349
      %v1398 = vunpack.c.h.b16 %v1349
      %v1399 = vunpack.c.l.b16 %v1350
      %v1400 = vunpack.c.h.b16 %v1350
      %v1401 = vunpack.c.l.b16 %v1351
      %v1402 = vunpack.c.h.b16 %v1351
      %v1403 = vunpack.c.l.b16 %v1352
      %v1404 = vunpack.c.h.b16 %v1352
      %v1405 = vunpack.c.l.b16 %v1353
      %v1406 = vunpack.c.h.b16 %v1353
      %v1407 = vunpack.c.l.b16 %v1354
      %v1408 = vunpack.c.h.b16 %v1354
      %v1409 = vunpack.c.l.b16 %v1355
      %v1410 = vunpack.c.h.b16 %v1355
      %v1411 = vunpack.c.l.b16 %v1356
      %v1412 = vunpack.c.h.b16 %v1356
      %v1413 = vunpack.c.l.b16 %v1357
      %v1414 = vunpack.c.h.b16 %v1357
      %v1415 = vpack.c.b16 %v1385, %v1383
      %v1416 = vpack.c.b16 %v1386, %v1384
      %v1417 = vpack.c.b16 %v1389, %v1387
      %v1418 = vpack.c.b16 %v1390, %v1388
      %v1419 = vpack.c.b16 %v1393, %v1391
      %v1420 = vpack.c.b16 %v1394, %v1392
      %v1421 = vpack.c.b16 %v1397, %v1395
      %v1422 = vpack.c.b16 %v1398, %v1396
      %v1423 = vpack.c.b16 %v1401, %v1399
      %v1424 = vpack.c.b16 %v1402, %v1400
      %v1425 = vpack.c.b16 %v1405, %v1403
      %v1426 = vpack.c.b16 %v1406, %v1404
      %v1427 = vpack.c.b16 %v1409, %v1407
      %v1428 = vpack.c.b16 %v1410, %v1408
      %v1429 = vpack.c.b16 %v1413, %v1411
      %v1430 = vpack.c.b16 %v1414, %v1412
      %1447 = vmatprep.subr.bf16.mxu0 %v1416
      %1448 = vmatpush1.bf16.msra.mxu0 %v1415
      %1449 = vmatprep.subr.bf16.mxu0 %v1418
      %1450 = vmatpush1.bf16.msra.mxu0 %v1417
      %1451 = vmatprep.subr.bf16.mxu0 %v1420
      %1452 = vmatpush1.bf16.msra.mxu0 %v1419
      %1453 = vmatprep.subr.bf16.mxu0 %v1422
      %1454 = vmatpush1.bf16.msra.mxu0 %v1421
      %1455 = vmatprep.subr.bf16.mxu0 %v1424
      %1456 = vmatpush1.bf16.msra.mxu0 %v1423
      %1457 = vmatprep.subr.bf16.mxu0 %v1426
      %1458 = vmatpush1.bf16.msra.mxu0 %v1425
      %1459 = vmatprep.subr.bf16.mxu0 %v1428
      %1460 = vmatpush1.bf16.msra.mxu0 %v1427
      %1461 = vmatprep.subr.bf16.mxu0 %v1430
      %1462 = vmatpush1.bf16.msra.mxu0 %v1429
      %1463 = vmatprep.subr.bf16.mxu0 0
      %1464 = vmatpush1.bf16.msra.mxu0 0
      %1465 = vmatprep.subr.bf16.mxu0 0
      %1466 = vmatpush1.bf16.msra.mxu0 0
      %1467 = vmatprep.subr.bf16.mxu0 0
      %1468 = vmatpush1.bf16.msra.mxu0 0
      %1469 = vmatprep.subr.bf16.mxu0 0
      %1470 = vmatpush1.bf16.msra.mxu0 0
      %1471 = vmatprep.subr.bf16.mxu0 0
      %1472 = vmatpush1.bf16.msra.mxu0 0
      %1473 = vmatprep.subr.bf16.mxu0 0
      %1474 = vmatpush1.bf16.msra.mxu0 0
      %1475 = vmatprep.subr.bf16.mxu0 0
      %1476 = vmatpush1.bf16.msra.mxu0 0
      %1477 = vmatprep.subr.bf16.mxu0 0
      %1478 = vmatpush1.bf16.msra.mxu0 0
      %1479 = vmatprep.mubr.bf16.mxu0 0
      %1480 = vmatmul.mubr.bf16.gmra.mrb[0].mxu0 %v1359
      %v1481 = vpop.f32.mrb[0].mxu0
      %v1482 = vadd.f32 0.0, %v1481
      %v1483 = vpop.f32.mrb[0].mxu0
      %v1484 = vadd.f32 0.0, %v1483
      %v1485 = vpop.f32.mrb[0].mxu0
      %v1486 = vadd.f32 0.0, %v1485
      %v1487 = vpop.f32.mrb[0].mxu0
      %v1488 = vadd.f32 0.0, %v1487
      %1489 = vmatprep.mubr.bf16.mxu0 0
      %1490 = vmatmul.mubr.bf16.gmra.mrb[0].mxu0 %v1360
      %v1491 = vpop.f32.mrb[0].mxu0
      %v1492 = vadd.f32 0.0, %v1491
      %v1493 = vpop.f32.mrb[0].mxu0
      %v1494 = vadd.f32 0.0, %v1493
      %v1495 = vpop.f32.mrb[0].mxu0
      %v1496 = vadd.f32 0.0, %v1495
      %v1497 = vpop.f32.mrb[0].mxu0
      %v1498 = vadd.f32 0.0, %v1497
      %1499 = vmatprep.mubr.bf16.mxu0 0
      %1500 = vmatmul.mubr.bf16.gmra.mrb[0].mxu0 %v1361
      %v1501 = vpop.f32.mrb[0].mxu0
      %v1502 = vadd.f32 0.0, %v1501
      %v1503 = vpop.f32.mrb[0].mxu0
      %v1504 = vadd.f32 0.0, %v1503
      %v1505 = vpop.f32.mrb[0].mxu0
      %v1506 = vadd.f32 0.0, %v1505
      %v1507 = vpop.f32.mrb[0].mxu0
      %v1508 = vadd.f32 0.0, %v1507
      %1509 = vmatprep.mubr.bf16.mxu0 0
      %1510 = vmatmul.mubr.bf16.gmra.mrb[0].mxu0 %v1362
      %v1511 = vpop.f32.mrb[0].mxu0
      %v1512 = vadd.f32 0.0, %v1511
      %v1513 = vpop.f32.mrb[0].mxu0
      %v1514 = vadd.f32 0.0, %v1513
      %v1515 = vpop.f32.mrb[0].mxu0
      %v1516 = vadd.f32 0.0, %v1515
      %v1517 = vpop.f32.mrb[0].mxu0
      %v1518 = vadd.f32 0.0, %v1517
      %1519 = vdwg.mxu0
      %v1520 = vadd.f32 %v1320, %v1482
      %v1521 = vadd.f32 %v1321, %v1484
      %v1522 = vadd.f32 %v1322, %v1486
      %v1523 = vadd.f32 %v1323, %v1488
      %v1524 = vadd.f32 %v1324, %v1492
      %v1525 = vadd.f32 %v1325, %v1494
      %v1526 = vadd.f32 %v1326, %v1496
      %v1527 = vadd.f32 %v1327, %v1498
      %v1528 = vadd.f32 %v1328, %v1502
      %v1529 = vadd.f32 %v1329, %v1504
      %v1530 = vadd.f32 %v1330, %v1506
      %v1531 = vadd.f32 %v1331, %v1508
      %v1532 = vadd.f32 %v1332, %v1512
      %v1533 = vadd.f32 %v1333, %v1514
      %v1534 = vadd.f32 %v1334, %v1516
      %v1535 = vadd.f32 %v1335, %v1518
      %s1536 = scalar_lea.vmem %s1, 768
      %v1537 = vld [vmem:[%s1536] sm:$0xff]
      %v1538 = vld [vmem:[%s1536 + $0x8] sm:$0xff]
      %v1539 = vld [vmem:[%s1536 + $0x10] sm:$0xff]
      %v1540 = vld [vmem:[%s1536 + $0x18] sm:$0xff]
      %v1541 = vld [vmem:[%s1536 + $0x20] sm:$0xff]
      %v1542 = vld [vmem:[%s1536 + $0x28] sm:$0xff]
      %v1543 = vld [vmem:[%s1536 + $0x30] sm:$0xff]
      %v1544 = vld [vmem:[%s1536 + $0x38] sm:$0xff]
      %v1545 = vld [vmem:[%s1536 + $0x40] sm:$0xff]
      %v1546 = vld [vmem:[%s1536 + $0x48] sm:$0xff]
      %v1547 = vld [vmem:[%s1536 + $0x50] sm:$0xff]
      %v1548 = vld [vmem:[%s1536 + $0x58] sm:$0xff]
      %v1549 = vld [vmem:[%s1536 + $0x60] sm:$0xff]
      %v1550 = vld [vmem:[%s1536 + $0x68] sm:$0xff]
      %v1551 = vld [vmem:[%s1536 + $0x70] sm:$0xff]
      %v1552 = vld [vmem:[%s1536 + $0x78] sm:$0xff]
      %v1554 = vunpack.c.l.b16 %v190
      %v1555 = vpack.c.b16 %v1554, %v949
      %v1573 = vunpack.c.l.b16 %v1537
      %v1574 = vunpack.c.h.b16 %v1537
      %v1575 = vunpack.c.l.b16 %v1538
      %v1576 = vunpack.c.h.b16 %v1538
      %v1577 = vunpack.c.l.b16 %v1539
      %v1578 = vunpack.c.h.b16 %v1539
      %v1579 = vunpack.c.l.b16 %v1540
      %v1580 = vunpack.c.h.b16 %v1540
      %v1581 = vunpack.c.l.b16 %v1541
      %v1582 = vunpack.c.h.b16 %v1541
      %v1583 = vunpack.c.l.b16 %v1542
      %v1584 = vunpack.c.h.b16 %v1542
      %v1585 = vunpack.c.l.b16 %v1543
      %v1586 = vunpack.c.h.b16 %v1543
      %v1587 = vunpack.c.l.b16 %v1544
      %v1588 = vunpack.c.h.b16 %v1544
      %v1589 = vunpack.c.l.b16 %v1545
      %v1590 = vunpack.c.h.b16 %v1545
      %v1591 = vunpack.c.l.b16 %v1546
      %v1592 = vunpack.c.h.b16 %v1546
      %v1593 = vunpack.c.l.b16 %v1547
      %v1594 = vunpack.c.h.b16 %v1547
      %v1595 = vunpack.c.l.b16 %v1548
      %v1596 = vunpack.c.h.b16 %v1548
      %v1597 = vunpack.c.l.b16 %v1549
      %v1598 = vunpack.c.h.b16 %v1549
      %v1599 = vunpack.c.l.b16 %v1550
      %v1600 = vunpack.c.h.b16 %v1550
      %v1601 = vunpack.c.l.b16 %v1551
      %v1602 = vunpack.c.h.b16 %v1551
      %v1603 = vunpack.c.l.b16 %v1552
      %v1604 = vunpack.c.h.b16 %v1552
      %v1605 = vpack.c.b16 %v1575, %v1573
      %v1606 = vpack.c.b16 %v1576, %v1574
      %v1607 = vpack.c.b16 %v1579, %v1577
      %v1608 = vpack.c.b16 %v1580, %v1578
      %v1609 = vpack.c.b16 %v1583, %v1581
      %v1610 = vpack.c.b16 %v1584, %v1582
      %v1611 = vpack.c.b16 %v1587, %v1585
      %v1612 = vpack.c.b16 %v1588, %v1586
      %v1613 = vpack.c.b16 %v1591, %v1589
      %v1614 = vpack.c.b16 %v1592, %v1590
      %v1615 = vpack.c.b16 %v1595, %v1593
      %v1616 = vpack.c.b16 %v1596, %v1594
      %v1617 = vpack.c.b16 %v1599, %v1597
      %v1618 = vpack.c.b16 %v1600, %v1598
      %v1619 = vpack.c.b16 %v1603, %v1601
      %v1620 = vpack.c.b16 %v1604, %v1602
      %1637 = vmatprep.subr.bf16.mxu0 %v1606
      %1638 = vmatpush1.bf16.msra.mxu0 %v1605
      %1639 = vmatprep.subr.bf16.mxu0 %v1608
      %1640 = vmatpush1.bf16.msra.mxu0 %v1607
      %1641 = vmatprep.subr.bf16.mxu0 %v1610
      %1642 = vmatpush1.bf16.msra.mxu0 %v1609
      %1643 = vmatprep.subr.bf16.mxu0 %v1612
      %1644 = vmatpush1.bf16.msra.mxu0 %v1611
      %1645 = vmatprep.subr.bf16.mxu0 %v1614
      %1646 = vmatpush1.bf16.msra.mxu0 %v1613
      %1647 = vmatprep.subr.bf16.mxu0 %v1616
      %1648 = vmatpush1.bf16.msra.mxu0 %v1615
      %1649 = vmatprep.subr.bf16.mxu0 %v1618
      %1650 = vmatpush1.bf16.msra.mxu0 %v1617
      %1651 = vmatprep.subr.bf16.mxu0 %v1620
      %1652 = vmatpush1.bf16.msra.mxu0 %v1619
      %1653 = vmatprep.subr.bf16.mxu0 0
      %1654 = vmatpush1.bf16.msra.mxu0 0
      %1655 = vmatprep.subr.bf16.mxu0 0
      %1656 = vmatpush1.bf16.msra.mxu0 0
      %1657 = vmatprep.subr.bf16.mxu0 0
      %1658 = vmatpush1.bf16.msra.mxu0 0
      %1659 = vmatprep.subr.bf16.mxu0 0
      %1660 = vmatpush1.bf16.msra.mxu0 0
      %1661 = vmatprep.subr.bf16.mxu0 0
      %1662 = vmatpush1.bf16.msra.mxu0 0
      %1663 = vmatprep.subr.bf16.mxu0 0
      %1664 = vmatpush1.bf16.msra.mxu0 0
      %1665 = vmatprep.subr.bf16.mxu0 0
      %1666 = vmatpush1.bf16.msra.mxu0 0
      %1667 = vmatprep.subr.bf16.mxu0 0
      %1668 = vmatpush1.bf16.msra.mxu0 0
      %1669 = vmatprep.mubr.bf16.mxu0 0
      %1670 = vmatmul.mubr.bf16.gmra.mrb[0].mxu0 %v526
      %v1671 = vpop.f32.mrb[0].mxu0
      %v1672 = vadd.f32 0.0, %v1671
      %v1673 = vpop.f32.mrb[0].mxu0
      %v1674 = vadd.f32 0.0, %v1673
      %v1675 = vpop.f32.mrb[0].mxu0
      %v1676 = vadd.f32 0.0, %v1675
      %v1677 = vpop.f32.mrb[0].mxu0
      %v1678 = vadd.f32 0.0, %v1677
      %1679 = vmatprep.mubr.bf16.mxu0 0
      %1680 = vmatmul.mubr.bf16.gmra.mrb[0].mxu0 %v527
      %v1681 = vpop.f32.mrb[0].mxu0
      %v1682 = vadd.f32 0.0, %v1681
      %v1683 = vpop.f32.mrb[0].mxu0
      %v1684 = vadd.f32 0.0, %v1683
      %v1685 = vpop.f32.mrb[0].mxu0
      %v1686 = vadd.f32 0.0, %v1685
      %v1687 = vpop.f32.mrb[0].mxu0
      %v1688 = vadd.f32 0.0, %v1687
      %1689 = vmatprep.mubr.bf16.mxu0 0
      %1690 = vmatmul.mubr.bf16.gmra.mrb[0].mxu0 %v528
      %v1691 = vpop.f32.mrb[0].mxu0
      %v1692 = vadd.f32 0.0, %v1691
      %v1693 = vpop.f32.mrb[0].mxu0
      %v1694 = vadd.f32 0.0, %v1693
      %v1695 = vpop.f32.mrb[0].mxu0
      %v1696 = vadd.f32 0.0, %v1695
      %v1697 = vpop.f32.mrb[0].mxu0
      %v1698 = vadd.f32 0.0, %v1697
      %1699 = vmatprep.mubr.bf16.mxu0 0
      %1700 = vmatmul.mubr.bf16.gmra.mrb[0].mxu0 %v1555
      %v1701 = vpop.f32.mrb[0].mxu0
      %v1702 = vadd.f32 0.0, %v1701
      %v1703 = vpop.f32.mrb[0].mxu0
      %v1704 = vadd.f32 0.0, %v1703
      %v1705 = vpop.f32.mrb[0].mxu0
      %v1706 = vadd.f32 0.0, %v1705
      %v1707 = vpop.f32.mrb[0].mxu0
      %v1708 = vadd.f32 0.0, %v1707
      %1709 = vdwg.mxu0
      %v1710 = vadd.f32 %v1520, %v1672
      %v1711 = vadd.f32 %v1521, %v1674
      %v1712 = vadd.f32 %v1522, %v1676
      %v1713 = vadd.f32 %v1523, %v1678
      %v1714 = vadd.f32 %v1524, %v1682
      %v1715 = vadd.f32 %v1525, %v1684
      %v1716 = vadd.f32 %v1526, %v1686
      %v1717 = vadd.f32 %v1527, %v1688
      %v1718 = vadd.f32 %v1528, %v1692
      %v1719 = vadd.f32 %v1529, %v1694
      %v1720 = vadd.f32 %v1530, %v1696
      %v1721 = vadd.f32 %v1531, %v1698
      %v1722 = vadd.f32 %v1532, %v1702
      %v1723 = vadd.f32 %v1533, %v1704
      %v1724 = vadd.f32 %v1534, %v1706
      %v1725 = vadd.f32 %v1535, %v1708
      %v1727 = vshrl.u32 %v190, 16
      %v1729 = vrot.slane %v1727, 4
      %v1730 = vshll.u32 %v190, 16
      %v1732 = vrot.slane %v1730, 5
      %v1733 = vor.u32 %v1729, %v1732
      %v1734 = vrot.slane %v1733, 4
      %v1736 = vshll.u32 %v191, 16
      %v1738 = vrot.slane %v1736, 5
      %v1739 = vsel %vm210, %v1734, %v1738
      %s1740 = scalar_lea.vmem %s1, 896
      %v1741 = vld [vmem:[%s1740] sm:$0xff]
      %v1742 = vld [vmem:[%s1740 + $0x8] sm:$0xff]
      %v1743 = vld [vmem:[%s1740 + $0x10] sm:$0xff]
      %v1744 = vld [vmem:[%s1740 + $0x18] sm:$0xff]
      %v1745 = vld [vmem:[%s1740 + $0x20] sm:$0xff]
      %v1746 = vld [vmem:[%s1740 + $0x28] sm:$0xff]
      %v1747 = vld [vmem:[%s1740 + $0x30] sm:$0xff]
      %v1748 = vld [vmem:[%s1740 + $0x38] sm:$0xff]
      %v1749 = vld [vmem:[%s1740 + $0x40] sm:$0xff]
      %v1750 = vld [vmem:[%s1740 + $0x48] sm:$0xff]
      %v1751 = vld [vmem:[%s1740 + $0x50] sm:$0xff]
      %v1752 = vld [vmem:[%s1740 + $0x58] sm:$0xff]
      %v1753 = vld [vmem:[%s1740 + $0x60] sm:$0xff]
      %v1754 = vld [vmem:[%s1740 + $0x68] sm:$0xff]
      %v1755 = vld [vmem:[%s1740 + $0x70] sm:$0xff]
      %v1756 = vld [vmem:[%s1740 + $0x78] sm:$0xff]
      %v1757 = vunpack.c.l.b16 %v1739
      %v1758 = vpack.c.b16 %v1757, %v1158
      %v1776 = vunpack.c.l.b16 %v1741
      %v1777 = vunpack.c.h.b16 %v1741
      %v1778 = vunpack.c.l.b16 %v1742
      %v1779 = vunpack.c.h.b16 %v1742
      %v1780 = vunpack.c.l.b16 %v1743
      %v1781 = vunpack.c.h.b16 %v1743
      %v1782 = vunpack.c.l.b16 %v1744
      %v1783 = vunpack.c.h.b16 %v1744
      %v1784 = vunpack.c.l.b16 %v1745
      %v1785 = vunpack.c.h.b16 %v1745
      %v1786 = vunpack.c.l.b16 %v1746
      %v1787 = vunpack.c.h.b16 %v1746
      %v1788 = vunpack.c.l.b16 %v1747
      %v1789 = vunpack.c.h.b16 %v1747
      %v1790 = vunpack.c.l.b16 %v1748
      %v1791 = vunpack.c.h.b16 %v1748
      %v1792 = vunpack.c.l.b16 %v1749
      %v1793 = vunpack.c.h.b16 %v1749
      %v1794 = vunpack.c.l.b16 %v1750
      %v1795 = vunpack.c.h.b16 %v1750
      %v1796 = vunpack.c.l.b16 %v1751
      %v1797 = vunpack.c.h.b16 %v1751
      %v1798 = vunpack.c.l.b16 %v1752
      %v1799 = vunpack.c.h.b16 %v1752
      %v1800 = vunpack.c.l.b16 %v1753
      %v1801 = vunpack.c.h.b16 %v1753
      %v1802 = vunpack.c.l.b16 %v1754
      %v1803 = vunpack.c.h.b16 %v1754
      %v1804 = vunpack.c.l.b16 %v1755
      %v1805 = vunpack.c.h.b16 %v1755
      %v1806 = vunpack.c.l.b16 %v1756
      %v1807 = vunpack.c.h.b16 %v1756
      %v1808 = vpack.c.b16 %v1778, %v1776
      %v1809 = vpack.c.b16 %v1779, %v1777
      %v1810 = vpack.c.b16 %v1782, %v1780
      %v1811 = vpack.c.b16 %v1783, %v1781
      %v1812 = vpack.c.b16 %v1786, %v1784
      %v1813 = vpack.c.b16 %v1787, %v1785
      %v1814 = vpack.c.b16 %v1790, %v1788
      %v1815 = vpack.c.b16 %v1791, %v1789
      %v1816 = vpack.c.b16 %v1794, %v1792
      %v1817 = vpack.c.b16 %v1795, %v1793
      %v1818 = vpack.c.b16 %v1798, %v1796
      %v1819 = vpack.c.b16 %v1799, %v1797
      %v1820 = vpack.c.b16 %v1802, %v1800
      %v1821 = vpack.c.b16 %v1803, %v1801
      %v1822 = vpack.c.b16 %v1806, %v1804
      %v1823 = vpack.c.b16 %v1807, %v1805
      %1840 = vmatprep.subr.bf16.mxu0 %v1809
      %1841 = vmatpush1.bf16.msra.mxu0 %v1808
      %1842 = vmatprep.subr.bf16.mxu0 %v1811
      %1843 = vmatpush1.bf16.msra.mxu0 %v1810
      %1844 = vmatprep.subr.bf16.mxu0 %v1813
      %1845 = vmatpush1.bf16.msra.mxu0 %v1812
      %1846 = vmatprep.subr.bf16.mxu0 %v1815
      %1847 = vmatpush1.bf16.msra.mxu0 %v1814
      %1848 = vmatprep.subr.bf16.mxu0 %v1817
      %1849 = vmatpush1.bf16.msra.mxu0 %v1816
      %1850 = vmatprep.subr.bf16.mxu0 %v1819
      %1851 = vmatpush1.bf16.msra.mxu0 %v1818
      %1852 = vmatprep.subr.bf16.mxu0 %v1821
      %1853 = vmatpush1.bf16.msra.mxu0 %v1820
      %1854 = vmatprep.subr.bf16.mxu0 %v1823
      %1855 = vmatpush1.bf16.msra.mxu0 %v1822
      %1856 = vmatprep.subr.bf16.mxu0 0
      %1857 = vmatpush1.bf16.msra.mxu0 0
      %1858 = vmatprep.subr.bf16.mxu0 0
      %1859 = vmatpush1.bf16.msra.mxu0 0
      %1860 = vmatprep.subr.bf16.mxu0 0
      %1861 = vmatpush1.bf16.msra.mxu0 0
      %1862 = vmatprep.subr.bf16.mxu0 0
      %1863 = vmatpush1.bf16.msra.mxu0 0
      %1864 = vmatprep.subr.bf16.mxu0 0
      %1865 = vmatpush1.bf16.msra.mxu0 0
      %1866 = vmatprep.subr.bf16.mxu0 0
      %1867 = vmatpush1.bf16.msra.mxu0 0
      %1868 = vmatprep.subr.bf16.mxu0 0
      %1869 = vmatpush1.bf16.msra.mxu0 0
      %1870 = vmatprep.subr.bf16.mxu0 0
      %1871 = vmatpush1.bf16.msra.mxu0 0
      %1872 = vmatprep.mubr.bf16.mxu0 0
      %1873 = vmatmul.mubr.bf16.gmra.mrb[0].mxu0 %v349
      %v1874 = vpop.f32.mrb[0].mxu0
      %v1875 = vadd.f32 0.0, %v1874
      %v1876 = vpop.f32.mrb[0].mxu0
      %v1877 = vadd.f32 0.0, %v1876
      %v1878 = vpop.f32.mrb[0].mxu0
      %v1879 = vadd.f32 0.0, %v1878
      %v1880 = vpop.f32.mrb[0].mxu0
      %v1881 = vadd.f32 0.0, %v1880
      %1882 = vmatprep.mubr.bf16.mxu0 0
      %1883 = vmatmul.mubr.bf16.gmra.mrb[0].mxu0 %v350
      %v1884 = vpop.f32.mrb[0].mxu0
      %v1885 = vadd.f32 0.0, %v1884
      %v1886 = vpop.f32.mrb[0].mxu0
      %v1887 = vadd.f32 0.0, %v1886
      %v1888 = vpop.f32.mrb[0].mxu0
      %v1889 = vadd.f32 0.0, %v1888
      %v1890 = vpop.f32.mrb[0].mxu0
      %v1891 = vadd.f32 0.0, %v1890
      %1892 = vmatprep.mubr.bf16.mxu0 0
      %1893 = vmatmul.mubr.bf16.gmra.mrb[0].mxu0 %v351
      %v1894 = vpop.f32.mrb[0].mxu0
      %v1895 = vadd.f32 0.0, %v1894
      %v1896 = vpop.f32.mrb[0].mxu0
      %v1897 = vadd.f32 0.0, %v1896
      %v1898 = vpop.f32.mrb[0].mxu0
      %v1899 = vadd.f32 0.0, %v1898
      %v1900 = vpop.f32.mrb[0].mxu0
      %v1901 = vadd.f32 0.0, %v1900
      %1902 = vmatprep.mubr.bf16.mxu0 0
      %1903 = vmatmul.mubr.bf16.gmra.mrb[0].mxu0 %v1758
      %v1904 = vpop.f32.mrb[0].mxu0
      %v1905 = vadd.f32 0.0, %v1904
      %v1906 = vpop.f32.mrb[0].mxu0
      %v1907 = vadd.f32 0.0, %v1906
      %v1908 = vpop.f32.mrb[0].mxu0
      %v1909 = vadd.f32 0.0, %v1908
      %v1910 = vpop.f32.mrb[0].mxu0
      %v1911 = vadd.f32 0.0, %v1910
      %1912 = vdwg.mxu0
      %v1913 = vadd.f32 %v1710, %v1875
      %v1914 = vadd.f32 %v1711, %v1877
      %v1915 = vadd.f32 %v1712, %v1879
      %v1916 = vadd.f32 %v1713, %v1881
      %v1917 = vadd.f32 %v1714, %v1885
      %v1918 = vadd.f32 %v1715, %v1887
      %v1919 = vadd.f32 %v1716, %v1889
      %v1920 = vadd.f32 %v1717, %v1891
      %v1921 = vadd.f32 %v1718, %v1895
      %v1922 = vadd.f32 %v1719, %v1897
      %v1923 = vadd.f32 %v1720, %v1899
      %v1924 = vadd.f32 %v1721, %v1901
      %v1925 = vadd.f32 %v1722, %v1905
      %v1926 = vadd.f32 %v1723, %v1907
      %v1927 = vadd.f32 %v1724, %v1909
      %v1928 = vadd.f32 %v1725, %v1911
      %v1930 = vrot.slane %v190, 5
      %v1931 = vrot.slane %v1930, 4
      %v1932 = vrot.slane %v191, 5
      %v1933 = vsel %vm696, %v1931, %v1932
      %s1934 = scalar_lea.vmem %s1, 1024
      %v1935 = vld [vmem:[%s1934] sm:$0xff]
      %v1936 = vld [vmem:[%s1934 + $0x8] sm:$0xff]
      %v1937 = vld [vmem:[%s1934 + $0x10] sm:$0xff]
      %v1938 = vld [vmem:[%s1934 + $0x18] sm:$0xff]
      %v1939 = vld [vmem:[%s1934 + $0x20] sm:$0xff]
      %v1940 = vld [vmem:[%s1934 + $0x28] sm:$0xff]
      %v1941 = vld [vmem:[%s1934 + $0x30] sm:$0xff]
      %v1942 = vld [vmem:[%s1934 + $0x38] sm:$0xff]
      %v1943 = vld [vmem:[%s1934 + $0x40] sm:$0xff]
      %v1944 = vld [vmem:[%s1934 + $0x48] sm:$0xff]
      %v1945 = vld [vmem:[%s1934 + $0x50] sm:$0xff]
      %v1946 = vld [vmem:[%s1934 + $0x58] sm:$0xff]
      %v1947 = vld [vmem:[%s1934 + $0x60] sm:$0xff]
      %v1948 = vld [vmem:[%s1934 + $0x68] sm:$0xff]
      %v1949 = vld [vmem:[%s1934 + $0x70] sm:$0xff]
      %v1950 = vld [vmem:[%s1934 + $0x78] sm:$0xff]
      %v1951 = vunpack.c.l.b16 %v1933
      %v1952 = vpack.c.b16 %v1951, %v1358
      %v1970 = vunpack.c.l.b16 %v1935
      %v1971 = vunpack.c.h.b16 %v1935
      %v1972 = vunpack.c.l.b16 %v1936
      %v1973 = vunpack.c.h.b16 %v1936
      %v1974 = vunpack.c.l.b16 %v1937
      %v1975 = vunpack.c.h.b16 %v1937
      %v1976 = vunpack.c.l.b16 %v1938
      %v1977 = vunpack.c.h.b16 %v1938
      %v1978 = vunpack.c.l.b16 %v1939
      %v1979 = vunpack.c.h.b16 %v1939
      %v1980 = vunpack.c.l.b16 %v1940
      %v1981 = vunpack.c.h.b16 %v1940
      %v1982 = vunpack.c.l.b16 %v1941
      %v1983 = vunpack.c.h.b16 %v1941
      %v1984 = vunpack.c.l.b16 %v1942
      %v1985 = vunpack.c.h.b16 %v1942
      %v1986 = vunpack.c.l.b16 %v1943
      %v1987 = vunpack.c.h.b16 %v1943
      %v1988 = vunpack.c.l.b16 %v1944
      %v1989 = vunpack.c.h.b16 %v1944
      %v1990 = vunpack.c.l.b16 %v1945
      %v1991 = vunpack.c.h.b16 %v1945
      %v1992 = vunpack.c.l.b16 %v1946
      %v1993 = vunpack.c.h.b16 %v1946
      %v1994 = vunpack.c.l.b16 %v1947
      %v1995 = vunpack.c.h.b16 %v1947
      %v1996 = vunpack.c.l.b16 %v1948
      %v1997 = vunpack.c.h.b16 %v1948
      %v1998 = vunpack.c.l.b16 %v1949
      %v1999 = vunpack.c.h.b16 %v1949
      %v2000 = vunpack.c.l.b16 %v1950
      %v2001 = vunpack.c.h.b16 %v1950
      %v2002 = vpack.c.b16 %v1972, %v1970
      %v2003 = vpack.c.b16 %v1973, %v1971
      %v2004 = vpack.c.b16 %v1976, %v1974
      %v2005 = vpack.c.b16 %v1977, %v1975
      %v2006 = vpack.c.b16 %v1980, %v1978
      %v2007 = vpack.c.b16 %v1981, %v1979
      %v2008 = vpack.c.b16 %v1984, %v1982
      %v2009 = vpack.c.b16 %v1985, %v1983
      %v2010 = vpack.c.b16 %v1988, %v1986
      %v2011 = vpack.c.b16 %v1989, %v1987
      %v2012 = vpack.c.b16 %v1992, %v1990
      %v2013 = vpack.c.b16 %v1993, %v1991
      %v2014 = vpack.c.b16 %v1996, %v1994
      %v2015 = vpack.c.b16 %v1997, %v1995
      %v2016 = vpack.c.b16 %v2000, %v1998
      %v2017 = vpack.c.b16 %v2001, %v1999
      %2034 = vmatprep.subr.bf16.mxu0 %v2003
      %2035 = vmatpush1.bf16.msra.mxu0 %v2002
      %2036 = vmatprep.subr.bf16.mxu0 %v2005
      %2037 = vmatpush1.bf16.msra.mxu0 %v2004
      %2038 = vmatprep.subr.bf16.mxu0 %v2007
      %2039 = vmatpush1.bf16.msra.mxu0 %v2006
      %2040 = vmatprep.subr.bf16.mxu0 %v2009
      %2041 = vmatpush1.bf16.msra.mxu0 %v2008
      %2042 = vmatprep.subr.bf16.mxu0 %v2011
      %2043 = vmatpush1.bf16.msra.mxu0 %v2010
      %2044 = vmatprep.subr.bf16.mxu0 %v2013
      %2045 = vmatpush1.bf16.msra.mxu0 %v2012
      %2046 = vmatprep.subr.bf16.mxu0 %v2015
      %2047 = vmatpush1.bf16.msra.mxu0 %v2014
      %2048 = vmatprep.subr.bf16.mxu0 %v2017
      %2049 = vmatpush1.bf16.msra.mxu0 %v2016
      %2050 = vmatprep.subr.bf16.mxu0 0
      %2051 = vmatpush1.bf16.msra.mxu0 0
      %2052 = vmatprep.subr.bf16.mxu0 0
      %2053 = vmatpush1.bf16.msra.mxu0 0
      %2054 = vmatprep.subr.bf16.mxu0 0
      %2055 = vmatpush1.bf16.msra.mxu0 0
      %2056 = vmatprep.subr.bf16.mxu0 0
      %2057 = vmatpush1.bf16.msra.mxu0 0
      %2058 = vmatprep.subr.bf16.mxu0 0
      %2059 = vmatpush1.bf16.msra.mxu0 0
      %2060 = vmatprep.subr.bf16.mxu0 0
      %2061 = vmatpush1.bf16.msra.mxu0 0
      %2062 = vmatprep.subr.bf16.mxu0 0
      %2063 = vmatpush1.bf16.msra.mxu0 0
      %2064 = vmatprep.subr.bf16.mxu0 0
      %2065 = vmatpush1.bf16.msra.mxu0 0
      %2066 = vmatprep.mubr.bf16.mxu0 0
      %2067 = vmatmul.mubr.bf16.gmra.mrb[0].mxu0 %v755
      %v2068 = vpop.f32.mrb[0].mxu0
      %v2069 = vadd.f32 0.0, %v2068
      %v2070 = vpop.f32.mrb[0].mxu0
      %v2071 = vadd.f32 0.0, %v2070
      %v2072 = vpop.f32.mrb[0].mxu0
      %v2073 = vadd.f32 0.0, %v2072
      %v2074 = vpop.f32.mrb[0].mxu0
      %v2075 = vadd.f32 0.0, %v2074
      %2076 = vmatprep.mubr.bf16.mxu0 0
      %2077 = vmatmul.mubr.bf16.gmra.mrb[0].mxu0 %v756
      %v2078 = vpop.f32.mrb[0].mxu0
      %v2079 = vadd.f32 0.0, %v2078
      %v2080 = vpop.f32.mrb[0].mxu0
      %v2081 = vadd.f32 0.0, %v2080
      %v2082 = vpop.f32.mrb[0].mxu0
      %v2083 = vadd.f32 0.0, %v2082
      %v2084 = vpop.f32.mrb[0].mxu0
      %v2085 = vadd.f32 0.0, %v2084
      %2086 = vmatprep.mubr.bf16.mxu0 0
      %2087 = vmatmul.mubr.bf16.gmra.mrb[0].mxu0 %v757
      %v2088 = vpop.f32.mrb[0].mxu0
      %v2089 = vadd.f32 0.0, %v2088
      %v2090 = vpop.f32.mrb[0].mxu0
      %v2091 = vadd.f32 0.0, %v2090
      %v2092 = vpop.f32.mrb[0].mxu0
      %v2093 = vadd.f32 0.0, %v2092
      %v2094 = vpop.f32.mrb[0].mxu0
      %v2095 = vadd.f32 0.0, %v2094
      %2096 = vmatprep.mubr.bf16.mxu0 0
      %2097 = vmatmul.mubr.bf16.gmra.mrb[0].mxu0 %v1952
      %v2098 = vpop.f32.mrb[0].mxu0
      %v2099 = vadd.f32 0.0, %v2098
      %v2100 = vpop.f32.mrb[0].mxu0
      %v2101 = vadd.f32 0.0, %v2100
      %v2102 = vpop.f32.mrb[0].mxu0
      %v2103 = vadd.f32 0.0, %v2102
      %v2104 = vpop.f32.mrb[0].mxu0
      %v2105 = vadd.f32 0.0, %v2104
      %2106 = vdwg.mxu0
      %v2107 = vadd.f32 %v1913, %v2069
      %v2108 = vadd.f32 %v1914, %v2071
      %v2109 = vadd.f32 %v1915, %v2073
      %v2110 = vadd.f32 %v1916, %v2075
      %v2111 = vadd.f32 %v1917, %v2079
      %v2112 = vadd.f32 %v1918, %v2081
      %v2113 = vadd.f32 %v1919, %v2083
      %v2114 = vadd.f32 %v1920, %v2085
      %v2115 = vadd.f32 %v1921, %v2089
      %v2116 = vadd.f32 %v1922, %v2091
      %v2117 = vadd.f32 %v1923, %v2093
      %v2118 = vadd.f32 %v1924, %v2095
      %v2119 = vadd.f32 %v1925, %v2099
      %v2120 = vadd.f32 %v1926, %v2101
      %v2121 = vadd.f32 %v1927, %v2103
      %v2122 = vadd.f32 %v1928, %v2105
      %v2123 = vld [vmem:[%s2] sm:$0x3]
      %v2125 = vlaneseq
      %v2126 = vshrl.u32 %v2125, 7
      %v2127 = vsub.s32 0, %v2126
      %v2128 = vrot.slane %v2123, %v2127
      %v2129 = vlaneseq
      %v2130 = vshrl.u32 %v2129, 7
      %v2131 = vsub.s32 1, %v2130
      %v2132 = vrot.slane %v2123, %v2131
      %v2135 = vadd.f32 %v2107, %v2128
      %v2136 = vadd.f32 %v2108, %v2132
      %v2137 = vadd.f32 %v2109, %v2128
      %v2138 = vadd.f32 %v2110, %v2132
      %v2139 = vadd.f32 %v2111, %v2128
      %v2140 = vadd.f32 %v2112, %v2132
      %v2141 = vadd.f32 %v2113, %v2128
      %v2142 = vadd.f32 %v2114, %v2132
      %v2143 = vadd.f32 %v2115, %v2128
      %v2144 = vadd.f32 %v2116, %v2132
      %v2145 = vadd.f32 %v2117, %v2128
      %v2146 = vadd.f32 %v2118, %v2132
      %v2147 = vadd.f32 %v2119, %v2128
      %v2148 = vadd.f32 %v2120, %v2132
      %v2149 = vadd.f32 %v2121, %v2128
      %v2150 = vadd.f32 %v2122, %v2132
      %v2151 = vmax.f32 %v2135, 0.0
      %v2152 = vmax.f32 %v2136, 0.0
      %v2153 = vmax.f32 %v2137, 0.0
      %v2154 = vmax.f32 %v2138, 0.0
      %v2155 = vmax.f32 %v2139, 0.0
      %v2156 = vmax.f32 %v2140, 0.0
      %v2157 = vmax.f32 %v2141, 0.0
      %v2158 = vmax.f32 %v2142, 0.0
      %v2159 = vmax.f32 %v2143, 0.0
      %v2160 = vmax.f32 %v2144, 0.0
      %v2161 = vmax.f32 %v2145, 0.0
      %v2162 = vmax.f32 %v2146, 0.0
      %v2163 = vmax.f32 %v2147, 0.0
      %v2164 = vmax.f32 %v2148, 0.0
      %v2165 = vmax.f32 %v2149, 0.0
      %v2166 = vmax.f32 %v2150, 0.0
      %v2167 = vpack.c.bf16 %v2151, %v2151
      %v2168 = vpack.c.bf16 %v2152, %v2152
      %v2169 = vpack.c.bf16 %v2153, %v2153
      %v2170 = vpack.c.bf16 %v2154, %v2154
      %v2171 = vpack.c.bf16 %v2155, %v2155
      %v2172 = vpack.c.bf16 %v2156, %v2156
      %v2173 = vpack.c.bf16 %v2157, %v2157
      %v2174 = vpack.c.bf16 %v2158, %v2158
      %v2175 = vpack.c.bf16 %v2159, %v2159
      %v2176 = vpack.c.bf16 %v2160, %v2160
      %v2177 = vpack.c.bf16 %v2161, %v2161
      %v2178 = vpack.c.bf16 %v2162, %v2162
      %v2179 = vpack.c.bf16 %v2163, %v2163
      %v2180 = vpack.c.bf16 %v2164, %v2164
      %v2181 = vpack.c.bf16 %v2165, %v2165
      %v2182 = vpack.c.bf16 %v2166, %v2166
      %v2199 = vunpack.c.l.b16 %v2167
      %v2200 = vunpack.c.l.b16 %v2168
      %v2201 = vunpack.c.l.b16 %v2169
      %v2202 = vunpack.c.l.b16 %v2170
      %v2203 = vunpack.c.l.b16 %v2171
      %v2204 = vunpack.c.l.b16 %v2172
      %v2205 = vunpack.c.l.b16 %v2173
      %v2206 = vunpack.c.l.b16 %v2174
      %v2207 = vunpack.c.l.b16 %v2175
      %v2208 = vunpack.c.l.b16 %v2176
      %v2209 = vunpack.c.l.b16 %v2177
      %v2210 = vunpack.c.l.b16 %v2178
      %v2211 = vunpack.c.l.b16 %v2179
      %v2212 = vunpack.c.l.b16 %v2180
      %v2213 = vunpack.c.l.b16 %v2181
      %v2214 = vunpack.c.l.b16 %v2182
      %v2215 = vpack.c.b16 %v2200, %v2199
      %v2216 = vpack.c.b16 %v2202, %v2201
      %v2217 = vpack.c.b16 %v2204, %v2203
      %v2218 = vpack.c.b16 %v2206, %v2205
      %v2219 = vpack.c.b16 %v2208, %v2207
      %v2220 = vpack.c.b16 %v2210, %v2209
      %v2221 = vpack.c.b16 %v2212, %v2211
      %v2222 = vpack.c.b16 %v2214, %v2213
      %2231 = vst [vmem:[%s170] sm:$0xff] %v2215
      %2232 = vst [vmem:[%s170 + $0x8] sm:$0xff] %v2216
      %2233 = vst [vmem:[%s170 + $0x10] sm:$0xff] %v2217
      %2234 = vst [vmem:[%s170 + $0x18] sm:$0xff] %v2218
      %2235 = vst [vmem:[%s170 + $0x20] sm:$0xff] %v2219
      %2236 = vst [vmem:[%s170 + $0x28] sm:$0xff] %v2220
      %2237 = vst [vmem:[%s170 + $0x30] sm:$0xff] %v2221
      %2238 = vst [vmem:[%s170 + $0x38] sm:$0xff] %v2222
      %p2239 = scmp.lt.s32.totalorder %s14, 3
      %s2240 = scalar_select %p2239, %s14, 3
      %s2241 = smul.addr %s2240, 16
      %s2242 = smul.addr %s2241, 4
      %s2243 = scalar_lea.vmem %s3, %s2242
      // Predicated region
      $region33: #{mixed_3b.5} parent=31 // pred_check
        %p2244 = pneg %p100
      $region34: #{mixed_3b.5} parent=31 // pred_check_branch
        %2246 = sbr.rel (%p2244) target = $region36
      $region35: #{mixed_3b.5} parent=31 // pred_region
        _
      $region36: #{mixed_3b.5} parent=31 // pred_fallthru
        _
    $region32: #{mixed_3b.5} parent=5 // pred_fallthru
      _
    %p2247 = scmp.le.s32.totalorder 2, %s9
    // Predicated region
    $region37: #{mixed_3b.5} parent=5 // pred_check
      %p2248 = pneg %p2247
    $region38: #{mixed_3b.5} parent=5 // pred_check_branch
      %2250 = sbr.rel (%p2248) target = $region40
    $region39: #{mixed_3b.5} parent=5 // pred_region
      %s2251 = ssub.s32 %s9, 2
      // Predicated region
      $region41: #{mixed_3b.5} parent=39 // pred_check
        %p2252 = pneg %p106
      $region42: #{mixed_3b.5} parent=39 // pred_check_branch
        %2254 = sbr.rel (%p2252) target = $region44
      $region43: #{mixed_3b.5} parent=39 // pred_region
        %p2255 = scmp.lt.s32.totalorder %s15, 3
        %s2256 = scalar_select %p2255, %s15, 3
        %s2257 = smul.addr %s2256, 16
        %s2258 = smul.addr %s2257, 4
        %s2259 = scalar_lea.vmem %s3, %s2258
      $region44: #{mixed_3b.5} parent=39 // pred_fallthru
        _
    $region40: #{mixed_3b.5} parent=5 // pred_fallthru
      _
  $region6: #{mixed_3b.5} parent=0 // loop_footer
    %s13 = sadd.s32 1, %s9
  $region7: #{mixed_3b.5} parent=0 // loop_footer_branch
    %8 = sbr.rel target = $region3
  $region8: #{mixed_3b.5} parent=0 // loop_exit
    _

// kernel: mixed_3b.7
$region0: #{mixed_3b.7}
  #allocation0 [shape = 'u32[]', space=smem, size = 0x4, offset = 0x4, fixed_abs, tag = 'smem constant byte address 0x4 - core index']
  #allocation1 [shape = 'u32[144,128]{1,0:T(1,128)}', space=vmem, size = 0x12000, scoped, tag = 'internal scratch']
  #allocation7 [shape = 's32[]', space=sflag, size = 0x4, offset = 0, fixed_abs, tag = 'sflag constant byte address 0x0 - dummy sync flag']
  %s0 = inlined_call_operand.vmem [shape: bf16[1,6,8,8,256], index: 0, kind: input, shape index: {}]
  %s1 = inlined_call_operand.vmem [shape: f32[1,4,8,8,64], index: 1, kind: input, shape index: {}]
  %s2 = inlined_call_operand.vmem [shape: f32[1,4,8,8,32], index: 2, kind: input, shape index: {}]
  %s3 = inlined_call_operand.vmem [shape: bf16[3,256,160], index: 3, kind: input, shape index: {}]
  %s4 = inlined_call_operand.vmem [shape: f32[1,160], index: 4, kind: input, shape index: {}]
  %s5 = inlined_call_operand.hbm [shape: f32[1,4,8,8,256], index: 5, kind: output, shape index: {}]
  %s6 = sld [smem:[#allocation0]]
  $region167: #{mixed_3b.7} parent=0
    _
  %s8 = ssub.s32 1, %s6
  %s9 = scalar_select 0, %s8, %s6
  $region1: #{mixed_3b.7} parent=0
    #allocation2 [shape = 'u8[98304]{0}', space=vmem, size = 0x18000, scoped, tag = 'input window, operand 0']
    #allocation3 [shape = 'u8[65536]{0}', space=vmem, size = 0x10000, scoped, tag = 'input window, operand 1']
    #allocation4 [shape = 'u8[65536]{0}', space=vmem, size = 0x10000, scoped, tag = 'input window, operand 2']
    #allocation5 [shape = 'u8[131072]{0}', space=vmem, size = 0x20000, scoped, tag = 'output window, operand 0']
    #allocation6 [shape = 's32[2]{0}', space=sflag, size = 0x8, scoped, tag = 'scoped memory for mixed_3b.7']
    %10 = vsyncpa [#allocation6], 0
    %s11 = scalar_lea.sflag [#allocation6], 1
    %12 = vsyncpa %s11, 0
    loop: start=0, step=1, limit=6
    $region2: #{mixed_3b.7} parent=1 // loop_pre_header
      _
    $region3: #{mixed_3b.7} parent=1 // loop_header
      %s14 = sphi 0, %s18
      %p15 = scmp.ge.s32.totalorder %s14, 6
      %s21 = sphi 0, %s33
      %s22 = sphi 0, %s29
      %s23 = sphi 0, %s21
      %s24 = sphi 0, %s22
      %s25 = sphi 0, %s23
      %s26 = sphi 0, %s24
      %s38 = sphi 0, %s40
      %s41 = sphi 0, %s38
      %s42 = sphi 0, %s41
      %s58 = sphi 0, %s42
      %s66 = sphi 0, %s68
      %s69 = sphi 0, %s66
      %s70 = sphi 0, %s69
      %s86 = sphi 0, %s70
      %s94 = sphi 0, %s96
      %s97 = sphi 0, %s94
      %s98 = sphi 0, %s97
      %s114 = sphi 0, %s98
      %s118 = sphi 0, %s118
      %s120 = sphi 0, %s118
      %s121 = sphi 0, %s120
      %s135 = sphi 0, %s121
      %s139 = sphi 0, %s139
      %s141 = sphi 0, %s139
      %s142 = sphi 0, %s141
      %s156 = sphi 0, %s142
      %s164 = sphi 0, %s166
      %s167 = sphi 0, %s164
      %s168 = sphi 0, %s167
      %s184 = sphi 0, %s168
    $region4: #{mixed_3b.7} parent=1 // loop_header_branch
      %17 = sbr.rel (%p15) target = $region8
    $region5: #{mixed_3b.7} parent=1 // loop_body
      %s19 = ssub.s32 %s14, 1
      %s20 = ssub.s32 %s14, 2
      %s27 = sadd.s32 1, %s22
      %p28 = scmp.ge.s32.totalorder %s27, 4
      %s29 = scalar_select %p28, 0, %s27
      %s30 = sadd.s32 1, %s21
      %s31 = scalar_select %p28, %s30, %s21
      %p32 = scmp.ge.s32.totalorder %s31, 1
      %s33 = scalar_select %p32, 0, %s31
      %s34 = ssub.s32 %s21, %s33
      %s35 = ssub.s32 %s22, %s29
      %s36 = sor.u32 %s34, %s35
      %p37 = scmp.eq.s32.totalorder %s36, 0
      %s39 = sadd.s32 %s38, 1
      %s40 = scalar_select %p37, %s38, %s39
      %p43 = pneg %p37
      %p44 = scmp.eq.s32.totalorder %s14, 3
      %p45 = por %p43, %p44
      %p46 = scmp.ne.s32.totalorder %s38, %s41
      %p47 = scmp.eq.s32.totalorder %s14, 0
      %p48 = por %p46, %p47
      %p49 = scmp.ne.s32.totalorder %s38, %s41
      %p50 = scmp.eq.s32.totalorder %s19, 3
      %p51 = por %p49, %p50
      %p52 = scmp.ne.s32.totalorder %s41, %s42
      %p53 = scmp.eq.s32.totalorder %s19, 0
      %p54 = por %p52, %p53
      %p55 = scmp.ne.s32.totalorder %s41, %s42
      %p56 = scmp.eq.s32.totalorder %s20, 3
      %p57 = por %p55, %p56
      %p59 = scmp.ne.s32.totalorder %s42, %s58
      %p60 = scmp.eq.s32.totalorder %s20, 0
      %p61 = por %p59, %p60
      %s62 = ssub.s32 %s21, %s33
      %s63 = ssub.s32 %s22, %s29
      %s64 = sor.u32 %s62, %s63
      %p65 = scmp.eq.s32.totalorder %s64, 0
      %s67 = sadd.s32 %s66, 1
      %s68 = scalar_select %p65, %s66, %s67
      %p71 = pneg %p65
      %p72 = scmp.eq.s32.totalorder %s14, 3
      %p73 = por %p71, %p72
      %p74 = scmp.ne.s32.totalorder %s66, %s69
      %p75 = scmp.eq.s32.totalorder %s14, 0
      %p76 = por %p74, %p75
      %p77 = scmp.ne.s32.totalorder %s66, %s69
      %p78 = scmp.eq.s32.totalorder %s19, 3
      %p79 = por %p77, %p78
      %p80 = scmp.ne.s32.totalorder %s69, %s70
      %p81 = scmp.eq.s32.totalorder %s19, 0
      %p82 = por %p80, %p81
      %p83 = scmp.ne.s32.totalorder %s69, %s70
      %p84 = scmp.eq.s32.totalorder %s20, 3
      %p85 = por %p83, %p84
      %p87 = scmp.ne.s32.totalorder %s70, %s86
      %p88 = scmp.eq.s32.totalorder %s20, 0
      %p89 = por %p87, %p88
      %s90 = ssub.s32 %s21, %s33
      %s91 = ssub.s32 %s22, %s29
      %s92 = sor.u32 %s90, %s91
      %p93 = scmp.eq.s32.totalorder %s92, 0
      %s95 = sadd.s32 %s94, 1
      %s96 = scalar_select %p93, %s94, %s95
      %p99 = pneg %p93
      %p100 = scmp.eq.s32.totalorder %s14, 3
      %p101 = por %p99, %p100
      %p102 = scmp.ne.s32.totalorder %s94, %s97
      %p103 = scmp.eq.s32.totalorder %s14, 0
      %p104 = por %p102, %p103
      %p105 = scmp.ne.s32.totalorder %s94, %s97
      %p106 = scmp.eq.s32.totalorder %s19, 3
      %p107 = por %p105, %p106
      %p108 = scmp.ne.s32.totalorder %s97, %s98
      %p109 = scmp.eq.s32.totalorder %s19, 0
      %p110 = por %p108, %p109
      %p111 = scmp.ne.s32.totalorder %s97, %s98
      %p112 = scmp.eq.s32.totalorder %s20, 3
      %p113 = por %p111, %p112
      %p115 = scmp.ne.s32.totalorder %s98, %s114
      %p116 = scmp.eq.s32.totalorder %s20, 0
      %p117 = por %p115, %p116
      %s119 = sadd.s32 %s118, 1
      %p122 = scmp.eq.s32.totalorder %s14, 3
      %p123 = scmp.ne.s32.totalorder %s118, %s120
      %p124 = scmp.eq.s32.totalorder %s14, 0
      %p125 = por %p123, %p124
      %p126 = scmp.ne.s32.totalorder %s118, %s120
      %p127 = scmp.eq.s32.totalorder %s19, 3
      %p128 = por %p126, %p127
      %p129 = scmp.ne.s32.totalorder %s120, %s121
      %p130 = scmp.eq.s32.totalorder %s19, 0
      %p131 = por %p129, %p130
      %p132 = scmp.ne.s32.totalorder %s120, %s121
      %p133 = scmp.eq.s32.totalorder %s20, 3
      %p134 = por %p132, %p133
      %p136 = scmp.ne.s32.totalorder %s121, %s135
      %p137 = scmp.eq.s32.totalorder %s20, 0
      %p138 = por %p136, %p137
      %s140 = sadd.s32 %s139, 1
      %p143 = scmp.eq.s32.totalorder %s14, 3
      %p144 = scmp.ne.s32.totalorder %s139, %s141
      %p145 = scmp.eq.s32.totalorder %s14, 0
      %p146 = por %p144, %p145
      %p147 = scmp.ne.s32.totalorder %s139, %s141
      %p148 = scmp.eq.s32.totalorder %s19, 3
      %p149 = por %p147, %p148
      %p150 = scmp.ne.s32.totalorder %s141, %s142
      %p151 = scmp.eq.s32.totalorder %s19, 0
      %p152 = por %p150, %p151
      %p153 = scmp.ne.s32.totalorder %s141, %s142
      %p154 = scmp.eq.s32.totalorder %s20, 3
      %p155 = por %p153, %p154
      %p157 = scmp.ne.s32.totalorder %s142, %s156
      %p158 = scmp.eq.s32.totalorder %s20, 0
      %p159 = por %p157, %p158
      %s160 = ssub.s32 %s21, %s33
      %s161 = ssub.s32 %s22, %s29
      %s162 = sor.u32 %s160, %s161
      %p163 = scmp.eq.s32.totalorder %s162, 0
      %s165 = sadd.s32 %s164, 1
      %s166 = scalar_select %p163, %s164, %s165
      %p169 = pneg %p163
      %p170 = scmp.eq.s32.totalorder %s14, 3
      %p171 = por %p169, %p170
      %p172 = scmp.ne.s32.totalorder %s164, %s167
      %p173 = scmp.eq.s32.totalorder %s14, 0
      %p174 = por %p172, %p173
      %p175 = scmp.ne.s32.totalorder %s164, %s167
      %p176 = scmp.eq.s32.totalorder %s19, 3
      %p177 = por %p175, %p176
      %p178 = scmp.ne.s32.totalorder %s167, %s168
      %p179 = scmp.eq.s32.totalorder %s19, 0
      %p180 = por %p178, %p179
      %p181 = scmp.ne.s32.totalorder %s167, %s168
      %p182 = scmp.eq.s32.totalorder %s20, 3
      %p183 = por %p181, %p182
      %p185 = scmp.ne.s32.totalorder %s168, %s184
      %p186 = scmp.eq.s32.totalorder %s20, 0
      %p187 = por %p185, %p186
      %p188 = scmp.le.s32.totalorder 1, %s14
      %p189 = scmp.lt.s32.totalorder %s14, 5
      %p190 = pnand %p188, %p189
      %p191 = pneg %p190
      // Predicated region
      $region9: #{mixed_3b.7} parent=5 // pred_check
        _
      $region10: #{mixed_3b.7} parent=5 // pred_check_branch
        %193 = sbr.rel (%p190) target = $region12
      $region11: #{mixed_3b.7} parent=5 // pred_region
        %s194 = ssub.s32 %s14, 1
        // Predicated region
        $region13: #{mixed_3b.7} parent=11 // pred_check
          %p195 = pneg %p131
        $region14: #{mixed_3b.7} parent=11 // pred_check_branch
          %197 = sbr.rel (%p195) target = $region16
        $region15: #{mixed_3b.7} parent=11 // pred_region
          _
        $region16: #{mixed_3b.7} parent=11 // pred_fallthru
          _
        // Predicated region
        $region17: #{mixed_3b.7} parent=11 // pred_check
          %p198 = pneg %p152
        $region18: #{mixed_3b.7} parent=11 // pred_check_branch
          %200 = sbr.rel (%p198) target = $region20
        $region19: #{mixed_3b.7} parent=11 // pred_region
          _
        $region20: #{mixed_3b.7} parent=11 // pred_fallthru
          _
      $region12: #{mixed_3b.7} parent=5 // pred_fallthru
        _
      %p201 = scmp.lt.s32.totalorder %s14, 4
      // Predicated region
      $region21: #{mixed_3b.7} parent=5 // pred_check
        %p202 = pneg %p201
      $region22: #{mixed_3b.7} parent=5 // pred_check_branch
        %204 = sbr.rel (%p202) target = $region24
      $region23: #{mixed_3b.7} parent=5 // pred_region
        // Predicated region
        $region25: #{mixed_3b.7} parent=23 // pred_check
          %p205 = pneg %p48
        $region26: #{mixed_3b.7} parent=23 // pred_check_branch
          %207 = sbr.rel (%p205) target = $region28
        $region27: #{mixed_3b.7} parent=23 // pred_region
          %s208 = sand.u32 %s38, 1
          %s209 = sand.u32 %s38, 1
          %s210 = smul.addr %s209, 96
          %s211 = scalar_lea.vmem [#allocation2], %s210
          %s212 = smul.u32 2, %s22
          %s213 = smul.addr %s212, 2
          %s214 = smul.addr %s21, 96
          %s215 = sadd.s32 %s213, %s214
          %s216 = smul.addr %s215, 4
          %s217 = scalar_lea.vmem %s0, %s216
          // Predicated region
          $region29: #{mixed_3b.7} parent=27 // pred_check
            _
          $region30: #{mixed_3b.7} parent=27 // pred_check_branch
            %219 = sbr.rel (0) target = $region32
          $region31: #{mixed_3b.7} parent=27 // pred_region
            // Predicated region
            $region33: #{mixed_3b.7} parent=31 // pred_check
              _
            $region34: #{mixed_3b.7} parent=31 // pred_check_branch
              %221 = sbr.rel (0) target = $region36
            $region35: #{mixed_3b.7} parent=31 // pred_region
              // Predicated region
              $region48: #{mixed_3b.7} parent=35 // pred_check
                _
              $region49: #{mixed_3b.7} parent=35 // pred_check_branch
                %258 = sbr.rel (0) target = $region51
              $region50: #{mixed_3b.7} parent=35 // pred_region
                loop: start=0, step=1, limit=1
                $region52: #{mixed_3b.7} parent=50 // loop_pre_header
                  _
                $region53: #{mixed_3b.7} parent=50 // loop_header
                  %s260 = sphi 0, %s264
                  %p261 = scmp.ge.s32.totalorder %s260, 1
                  %s265 = sphi %s217, %s217
                  %s266 = sphi %s211, %s211
                $region54: #{mixed_3b.7} parent=50 // loop_header_branch
                  %263 = sbr.rel (%p261) target = $region58
                $region55: #{mixed_3b.7} parent=50 // loop_body
                  %v267 = vld [vmem:[%s265] sm:$0xff]
                  %268 = vst [vmem:[%s266] sm:$0xff] %v267
                  %v269 = vld [vmem:[%s265 + $0x8] sm:$0xff]
                  %270 = vst [vmem:[%s266 + $0x8] sm:$0xff] %v269
                  %v271 = vld [vmem:[%s265 + $0x40] sm:$0xff]
                  %272 = vst [vmem:[%s266 + $0x10] sm:$0xff] %v271
                  %v273 = vld [vmem:[%s265 + $0x48] sm:$0xff]
                  %274 = vst [vmem:[%s266 + $0x18] sm:$0xff] %v273
                  %v275 = vld [vmem:[%s265 + $0x80] sm:$0xff]
                  %276 = vst [vmem:[%s266 + $0x20] sm:$0xff] %v275
                  %v277 = vld [vmem:[%s265 + $0x88] sm:$0xff]
                  %278 = vst [vmem:[%s266 + $0x28] sm:$0xff] %v277
                  %v279 = vld [vmem:[%s265 + $0xc0] sm:$0xff]
                  %280 = vst [vmem:[%s266 + $0x30] sm:$0xff] %v279
                  %v281 = vld [vmem:[%s265 + $0xc8] sm:$0xff]
                  %282 = vst [vmem:[%s266 + $0x38] sm:$0xff] %v281
                  %v283 = vld [vmem:[%s265 + $0x100] sm:$0xff]
                  %284 = vst [vmem:[%s266 + $0x40] sm:$0xff] %v283
                  %v285 = vld [vmem:[%s265 + $0x108] sm:$0xff]
                  %286 = vst [vmem:[%s266 + $0x48] sm:$0xff] %v285
                  %v287 = vld [vmem:[%s265 + $0x140] sm:$0xff]
                  %288 = vst [vmem:[%s266 + $0x50] sm:$0xff] %v287
                  %v289 = vld [vmem:[%s265 + $0x148] sm:$0xff]
                  %290 = vst [vmem:[%s266 + $0x58] sm:$0xff] %v289
                $region56: #{mixed_3b.7} parent=50 // loop_footer
                  %s264 = sadd.s32 1, %s260
                $region57: #{mixed_3b.7} parent=50 // loop_footer_branch
                  %259 = sbr.rel target = $region53
                $region58: #{mixed_3b.7} parent=50 // loop_exit
                  _
              $region51: #{mixed_3b.7} parent=35 // pred_fallthru
                _
              // Predicated region
              $region59: #{mixed_3b.7} parent=35 // pred_check
                _
              $region60: #{mixed_3b.7} parent=35 // pred_check_branch
                %292 = sbr.rel target = $region62
              $region61: #{mixed_3b.7} parent=35 // pred_region
                _
              $region62: #{mixed_3b.7} parent=35 // pred_fallthru
                _
            $region36: #{mixed_3b.7} parent=31 // pred_fallthru
              _
            // Predicated region
            $region37: #{mixed_3b.7} parent=31 // pred_check
              _
            $region38: #{mixed_3b.7} parent=31 // pred_check_branch
              %223 = sbr.rel target = $region40
            $region39: #{mixed_3b.7} parent=31 // pred_region
              loop: start=0, step=1, limit=1
              $region41: #{mixed_3b.7} parent=39 // loop_pre_header
                _
              $region42: #{mixed_3b.7} parent=39 // loop_header
                %s226 = sphi 0, %s230
                %p227 = scmp.ge.s32.totalorder %s226, 1
                %s231 = sphi %s217, %s217
                %s232 = sphi %s211, %s211
              $region43: #{mixed_3b.7} parent=39 // loop_header_branch
                %229 = sbr.rel (%p227) target = $region47
              $region44: #{mixed_3b.7} parent=39 // loop_body
                %v233 = vld [vmem:[%s231] sm:$0xff]
                %234 = vst [vmem:[%s232] sm:$0xff] %v233
                %v235 = vld [vmem:[%s231 + $0x8] sm:$0xff]
                %236 = vst [vmem:[%s232 + $0x8] sm:$0xff] %v235
                %v237 = vld [vmem:[%s231 + $0x40] sm:$0xff]
                %238 = vst [vmem:[%s232 + $0x10] sm:$0xff] %v237
                %v239 = vld [vmem:[%s231 + $0x48] sm:$0xff]
                %240 = vst [vmem:[%s232 + $0x18] sm:$0xff] %v239
                %v241 = vld [vmem:[%s231 + $0x80] sm:$0xff]
                %242 = vst [vmem:[%s232 + $0x20] sm:$0xff] %v241
                %v243 = vld [vmem:[%s231 + $0x88] sm:$0xff]
                %244 = vst [vmem:[%s232 + $0x28] sm:$0xff] %v243
                %v245 = vld [vmem:[%s231 + $0xc0] sm:$0xff]
                %246 = vst [vmem:[%s232 + $0x30] sm:$0xff] %v245
                %v247 = vld [vmem:[%s231 + $0xc8] sm:$0xff]
                %248 = vst [vmem:[%s232 + $0x38] sm:$0xff] %v247
                %v249 = vld [vmem:[%s231 + $0x100] sm:$0xff]
                %250 = vst [vmem:[%s232 + $0x40] sm:$0xff] %v249
                %v251 = vld [vmem:[%s231 + $0x108] sm:$0xff]
                %252 = vst [vmem:[%s232 + $0x48] sm:$0xff] %v251
                %v253 = vld [vmem:[%s231 + $0x140] sm:$0xff]
                %254 = vst [vmem:[%s232 + $0x50] sm:$0xff] %v253
                %v255 = vld [vmem:[%s231 + $0x148] sm:$0xff]
                %256 = vst [vmem:[%s232 + $0x58] sm:$0xff] %v255
              $region45: #{mixed_3b.7} parent=39 // loop_footer
                %s230 = sadd.s32 1, %s226
              $region46: #{mixed_3b.7} parent=39 // loop_footer_branch
                %225 = sbr.rel target = $region42
              $region47: #{mixed_3b.7} parent=39 // loop_exit
                _
            $region40: #{mixed_3b.7} parent=31 // pred_fallthru
              _
          $region32: #{mixed_3b.7} parent=27 // pred_fallthru
            _
          %293 = vnop
        $region28: #{mixed_3b.7} parent=23 // pred_fallthru
          _
        // Predicated region
        $region63: #{mixed_3b.7} parent=23 // pred_check
          %p294 = pneg %p76
        $region64: #{mixed_3b.7} parent=23 // pred_check_branch
          %296 = sbr.rel (%p294) target = $region66
        $region65: #{mixed_3b.7} parent=23 // pred_region
          %s297 = sand.u32 %s66, 1
          %s298 = sand.u32 %s66, 1
          %s299 = smul.addr %s298, 64
          %s300 = scalar_lea.vmem [#allocation3], %s299
          %s301 = smul.u32 2, %s22
          %s302 = smul.addr %s21, 32
          %s303 = sadd.s32 %s301, %s302
          %s304 = smul.addr %s303, 8
          %s305 = scalar_lea.vmem %s1, %s304
          // Predicated region
          $region67: #{mixed_3b.7} parent=65 // pred_check
            _
          $region68: #{mixed_3b.7} parent=65 // pred_check_branch
            %307 = sbr.rel (0) target = $region70
          $region69: #{mixed_3b.7} parent=65 // pred_region
            // Predicated region
            $region71: #{mixed_3b.7} parent=69 // pred_check
              _
            $region72: #{mixed_3b.7} parent=69 // pred_check_branch
              %309 = sbr.rel (0) target = $region74
            $region73: #{mixed_3b.7} parent=69 // pred_region
              // Predicated region
              $region86: #{mixed_3b.7} parent=73 // pred_check
                _
              $region87: #{mixed_3b.7} parent=73 // pred_check_branch
                %338 = sbr.rel (0) target = $region89
              $region88: #{mixed_3b.7} parent=73 // pred_region
                loop: start=0, step=1, limit=1
                $region90: #{mixed_3b.7} parent=88 // loop_pre_header
                  _
                $region91: #{mixed_3b.7} parent=88 // loop_header
                  %s340 = sphi 0, %s344
                  %p341 = scmp.ge.s32.totalorder %s340, 1
                  %s345 = sphi %s305, %s305
                  %s346 = sphi %s300, %s300
                $region92: #{mixed_3b.7} parent=88 // loop_header_branch
                  %343 = sbr.rel (%p341) target = $region96
                $region93: #{mixed_3b.7} parent=88 // loop_body
                  %v347 = vld [vmem:[%s345] sm:$0xff]
                  %348 = vst [vmem:[%s346] sm:$0xff] %v347
                  %v349 = vld [vmem:[%s345 + $0x8] sm:$0xff]
                  %350 = vst [vmem:[%s346 + $0x8] sm:$0xff] %v349
                  %v351 = vld [vmem:[%s345 + $0x40] sm:$0xff]
                  %352 = vst [vmem:[%s346 + $0x10] sm:$0xff] %v351
                  %v353 = vld [vmem:[%s345 + $0x48] sm:$0xff]
                  %354 = vst [vmem:[%s346 + $0x18] sm:$0xff] %v353
                  %v355 = vld [vmem:[%s345 + $0x80] sm:$0xff]
                  %356 = vst [vmem:[%s346 + $0x20] sm:$0xff] %v355
                  %v357 = vld [vmem:[%s345 + $0x88] sm:$0xff]
                  %358 = vst [vmem:[%s346 + $0x28] sm:$0xff] %v357
                  %v359 = vld [vmem:[%s345 + $0xc0] sm:$0xff]
                  %360 = vst [vmem:[%s346 + $0x30] sm:$0xff] %v359
                  %v361 = vld [vmem:[%s345 + $0xc8] sm:$0xff]
                  %362 = vst [vmem:[%s346 + $0x38] sm:$0xff] %v361
                $region94: #{mixed_3b.7} parent=88 // loop_footer
                  %s344 = sadd.s32 1, %s340
                $region95: #{mixed_3b.7} parent=88 // loop_footer_branch
                  %339 = sbr.rel target = $region91
                $region96: #{mixed_3b.7} parent=88 // loop_exit
                  _
              $region89: #{mixed_3b.7} parent=73 // pred_fallthru
                _
              // Predicated region
              $region97: #{mixed_3b.7} parent=73 // pred_check
                _
              $region98: #{mixed_3b.7} parent=73 // pred_check_branch
                %364 = sbr.rel target = $region100
              $region99: #{mixed_3b.7} parent=73 // pred_region
                _
              $region100: #{mixed_3b.7} parent=73 // pred_fallthru
                _
            $region74: #{mixed_3b.7} parent=69 // pred_fallthru
              _
            // Predicated region
            $region75: #{mixed_3b.7} parent=69 // pred_check
              _
            $region76: #{mixed_3b.7} parent=69 // pred_check_branch
              %311 = sbr.rel target = $region78
            $region77: #{mixed_3b.7} parent=69 // pred_region
              loop: start=0, step=1, limit=1
              $region79: #{mixed_3b.7} parent=77 // loop_pre_header
                _
              $region80: #{mixed_3b.7} parent=77 // loop_header
                %s314 = sphi 0, %s318
                %p315 = scmp.ge.s32.totalorder %s314, 1
                %s319 = sphi %s305, %s305
                %s320 = sphi %s300, %s300
              $region81: #{mixed_3b.7} parent=77 // loop_header_branch
                %317 = sbr.rel (%p315) target = $region85
              $region82: #{mixed_3b.7} parent=77 // loop_body
                %v321 = vld [vmem:[%s319] sm:$0xff]
                %322 = vst [vmem:[%s320] sm:$0xff] %v321
                %v323 = vld [vmem:[%s319 + $0x8] sm:$0xff]
                %324 = vst [vmem:[%s320 + $0x8] sm:$0xff] %v323
                %v325 = vld [vmem:[%s319 + $0x40] sm:$0xff]
                %326 = vst [vmem:[%s320 + $0x10] sm:$0xff] %v325
                %v327 = vld [vmem:[%s319 + $0x48] sm:$0xff]
                %328 = vst [vmem:[%s320 + $0x18] sm:$0xff] %v327
                %v329 = vld [vmem:[%s319 + $0x80] sm:$0xff]
                %330 = vst [vmem:[%s320 + $0x20] sm:$0xff] %v329
                %v331 = vld [vmem:[%s319 + $0x88] sm:$0xff]
                %332 = vst [vmem:[%s320 + $0x28] sm:$0xff] %v331
                %v333 = vld [vmem:[%s319 + $0xc0] sm:$0xff]
                %334 = vst [vmem:[%s320 + $0x30] sm:$0xff] %v333
                %v335 = vld [vmem:[%s319 + $0xc8] sm:$0xff]
                %336 = vst [vmem:[%s320 + $0x38] sm:$0xff] %v335
              $region83: #{mixed_3b.7} parent=77 // loop_footer
                %s318 = sadd.s32 1, %s314
              $region84: #{mixed_3b.7} parent=77 // loop_footer_branch
                %313 = sbr.rel target = $region80
              $region85: #{mixed_3b.7} parent=77 // loop_exit
                _
            $region78: #{mixed_3b.7} parent=69 // pred_fallthru
              _
          $region70: #{mixed_3b.7} parent=65 // pred_fallthru
            _
          %365 = vnop
        $region66: #{mixed_3b.7} parent=23 // pred_fallthru
          _
        // Predicated region
        $region101: #{mixed_3b.7} parent=23 // pred_check
          %p366 = pneg %p104
        $region102: #{mixed_3b.7} parent=23 // pred_check_branch
          %368 = sbr.rel (%p366) target = $region104
        $region103: #{mixed_3b.7} parent=23 // pred_region
          %s369 = sand.u32 %s94, 1
          %s370 = sand.u32 %s94, 1
          %s371 = smul.addr %s370, 64
          %s372 = scalar_lea.vmem [#allocation4], %s371
          %s373 = smul.u32 2, %s22
          %s374 = smul.addr %s21, 32
          %s375 = sadd.s32 %s373, %s374
          %s376 = smul.addr %s375, 8
          %s377 = scalar_lea.vmem %s2, %s376
          // Predicated region
          $region105: #{mixed_3b.7} parent=103 // pred_check
            _
          $region106: #{mixed_3b.7} parent=103 // pred_check_branch
            %379 = sbr.rel (0) target = $region108
          $region107: #{mixed_3b.7} parent=103 // pred_region
            // Predicated region
            $region109: #{mixed_3b.7} parent=107 // pred_check
              _
            $region110: #{mixed_3b.7} parent=107 // pred_check_branch
              %381 = sbr.rel (0) target = $region112
            $region111: #{mixed_3b.7} parent=107 // pred_region
              // Predicated region
              $region124: #{mixed_3b.7} parent=111 // pred_check
                _
              $region125: #{mixed_3b.7} parent=111 // pred_check_branch
                %410 = sbr.rel (0) target = $region127
              $region126: #{mixed_3b.7} parent=111 // pred_region
                loop: start=0, step=1, limit=1
                $region128: #{mixed_3b.7} parent=126 // loop_pre_header
                  _
                $region129: #{mixed_3b.7} parent=126 // loop_header
                  %s412 = sphi 0, %s416
                  %p413 = scmp.ge.s32.totalorder %s412, 1
                  %s417 = sphi %s377, %s377
                  %s418 = sphi %s372, %s372
                $region130: #{mixed_3b.7} parent=126 // loop_header_branch
                  %415 = sbr.rel (%p413) target = $region134
                $region131: #{mixed_3b.7} parent=126 // loop_body
                  %v419 = vld [vmem:[%s417] sm:$0xff]
                  %420 = vst [vmem:[%s418] sm:$0xff] %v419
                  %v421 = vld [vmem:[%s417 + $0x8] sm:$0xff]
                  %422 = vst [vmem:[%s418 + $0x8] sm:$0xff] %v421
                  %v423 = vld [vmem:[%s417 + $0x40] sm:$0xff]
                  %424 = vst [vmem:[%s418 + $0x10] sm:$0xff] %v423
                  %v425 = vld [vmem:[%s417 + $0x48] sm:$0xff]
                  %426 = vst [vmem:[%s418 + $0x18] sm:$0xff] %v425
                  %v427 = vld [vmem:[%s417 + $0x80] sm:$0xff]
                  %428 = vst [vmem:[%s418 + $0x20] sm:$0xff] %v427
                  %v429 = vld [vmem:[%s417 + $0x88] sm:$0xff]
                  %430 = vst [vmem:[%s418 + $0x28] sm:$0xff] %v429
                  %v431 = vld [vmem:[%s417 + $0xc0] sm:$0xff]
                  %432 = vst [vmem:[%s418 + $0x30] sm:$0xff] %v431
                  %v433 = vld [vmem:[%s417 + $0xc8] sm:$0xff]
                  %434 = vst [vmem:[%s418 + $0x38] sm:$0xff] %v433
                $region132: #{mixed_3b.7} parent=126 // loop_footer
                  %s416 = sadd.s32 1, %s412
                $region133: #{mixed_3b.7} parent=126 // loop_footer_branch
                  %411 = sbr.rel target = $region129
                $region134: #{mixed_3b.7} parent=126 // loop_exit
                  _
              $region127: #{mixed_3b.7} parent=111 // pred_fallthru
                _
              // Predicated region
              $region135: #{mixed_3b.7} parent=111 // pred_check
                _
              $region136: #{mixed_3b.7} parent=111 // pred_check_branch
                %436 = sbr.rel target = $region138
              $region137: #{mixed_3b.7} parent=111 // pred_region
                _
              $region138: #{mixed_3b.7} parent=111 // pred_fallthru
                _
            $region112: #{mixed_3b.7} parent=107 // pred_fallthru
              _
            // Predicated region
            $region113: #{mixed_3b.7} parent=107 // pred_check
              _
            $region114: #{mixed_3b.7} parent=107 // pred_check_branch
              %383 = sbr.rel target = $region116
            $region115: #{mixed_3b.7} parent=107 // pred_region
              loop: start=0, step=1, limit=1
              $region117: #{mixed_3b.7} parent=115 // loop_pre_header
                _
              $region118: #{mixed_3b.7} parent=115 // loop_header
                %s386 = sphi 0, %s390
                %p387 = scmp.ge.s32.totalorder %s386, 1
                %s391 = sphi %s377, %s377
                %s392 = sphi %s372, %s372
              $region119: #{mixed_3b.7} parent=115 // loop_header_branch
                %389 = sbr.rel (%p387) target = $region123
              $region120: #{mixed_3b.7} parent=115 // loop_body
                %v393 = vld [vmem:[%s391] sm:$0xff]
                %394 = vst [vmem:[%s392] sm:$0xff] %v393
                %v395 = vld [vmem:[%s391 + $0x8] sm:$0xff]
                %396 = vst [vmem:[%s392 + $0x8] sm:$0xff] %v395
                %v397 = vld [vmem:[%s391 + $0x40] sm:$0xff]
                %398 = vst [vmem:[%s392 + $0x10] sm:$0xff] %v397
                %v399 = vld [vmem:[%s391 + $0x48] sm:$0xff]
                %400 = vst [vmem:[%s392 + $0x18] sm:$0xff] %v399
                %v401 = vld [vmem:[%s391 + $0x80] sm:$0xff]
                %402 = vst [vmem:[%s392 + $0x20] sm:$0xff] %v401
                %v403 = vld [vmem:[%s391 + $0x88] sm:$0xff]
                %404 = vst [vmem:[%s392 + $0x28] sm:$0xff] %v403
                %v405 = vld [vmem:[%s391 + $0xc0] sm:$0xff]
                %406 = vst [vmem:[%s392 + $0x30] sm:$0xff] %v405
                %v407 = vld [vmem:[%s391 + $0xc8] sm:$0xff]
                %408 = vst [vmem:[%s392 + $0x38] sm:$0xff] %v407
              $region121: #{mixed_3b.7} parent=115 // loop_footer
                %s390 = sadd.s32 1, %s386
              $region122: #{mixed_3b.7} parent=115 // loop_footer_branch
                %385 = sbr.rel target = $region118
              $region123: #{mixed_3b.7} parent=115 // loop_exit
                _
            $region116: #{mixed_3b.7} parent=107 // pred_fallthru
              _
          $region108: #{mixed_3b.7} parent=103 // pred_fallthru
            _
          %437 = vnop
        $region104: #{mixed_3b.7} parent=23 // pred_fallthru
          _
      $region24: #{mixed_3b.7} parent=5 // pred_fallthru
        _
      %p438 = scmp.le.s32.totalorder 1, %s14
      %p439 = scmp.lt.s32.totalorder %s14, 5
      %p440 = pnand %p438, %p439
      %p441 = pneg %p440
      // Predicated region
      $region139: #{mixed_3b.7} parent=5 // pred_check
        _
      $region140: #{mixed_3b.7} parent=5 // pred_check_branch
        %443 = sbr.rel (%p440) target = $region142
      $region141: #{mixed_3b.7} parent=5 // pred_region
        %s444 = ssub.s32 %s14, 1
        %s445 = sand.u32 %s41, 1
        %s446 = sand.u32 %s41, 1
        %s447 = smul.addr %s446, 96
        %s448 = scalar_lea.vmem [#allocation2], %s447
        // Predicated region
        $region143: #{mixed_3b.7} parent=141 // pred_check
          %p449 = pneg %p54
        $region144: #{mixed_3b.7} parent=141 // pred_check_branch
          %451 = sbr.rel (%p449) target = $region146
        $region145: #{mixed_3b.7} parent=141 // pred_region
          _
        $region146: #{mixed_3b.7} parent=141 // pred_fallthru
          _
        %s452 = sand.u32 %s69, 1
        %s453 = sand.u32 %s69, 1
        %s454 = smul.addr %s453, 64
        %s455 = scalar_lea.vmem [#allocation3], %s454
        // Predicated region
        $region147: #{mixed_3b.7} parent=141 // pred_check
          %p456 = pneg %p82
        $region148: #{mixed_3b.7} parent=141 // pred_check_branch
          %458 = sbr.rel (%p456) target = $region150
        $region149: #{mixed_3b.7} parent=141 // pred_region
          _
        $region150: #{mixed_3b.7} parent=141 // pred_fallthru
          _
        %s459 = sand.u32 %s97, 1
        %s460 = sand.u32 %s97, 1
        %s461 = smul.addr %s460, 64
        %s462 = scalar_lea.vmem [#allocation4], %s461
        // Predicated region
        $region151: #{mixed_3b.7} parent=141 // pred_check
          %p463 = pneg %p110
        $region152: #{mixed_3b.7} parent=141 // pred_check_branch
          %465 = sbr.rel (%p463) target = $region154
        $region153: #{mixed_3b.7} parent=141 // pred_region
          _
        $region154: #{mixed_3b.7} parent=141 // pred_fallthru
          _
        %s466 = sand.u32 %s41, 1
        %s467 = sand.u32 %s41, 1
        %s468 = smul.addr %s467, 96
        %s469 = scalar_lea.vmem [#allocation2], %s468
        %p470 = pneg %p54
        %p471 = pneg %p51
        %s472 = sand.u32 %s69, 1
        %s473 = sand.u32 %s69, 1
        %s474 = smul.addr %s473, 64
        %s475 = scalar_lea.vmem [#allocation3], %s474
        %p476 = pneg %p82
        %p477 = pneg %p79
        %s478 = sand.u32 %s97, 1
        %s479 = sand.u32 %s97, 1
        %s480 = smul.addr %s479, 64
        %s481 = scalar_lea.vmem [#allocation4], %s480
        %p482 = pneg %p110
        %p483 = pneg %p107
        %p484 = pneg %p131
        %p485 = pneg %p128
        %p486 = pneg %p152
        %p487 = pneg %p149
        %p488 = pneg %p180
        %p489 = pneg %p177
        %s490 = sand.u32 %s167, 1
        %s491 = scalar_lea.sflag [#allocation6], %s490
        %s492 = sand.u32 %s167, 1
        %s493 = smul.addr %s492, 128
        %s494 = scalar_lea.vmem [#allocation5], %s493
        %s495 = smul.u32 2, %s24
        %s496 = smul.u32 2, %s24
        %s497 = smul.u32 2, %s24
        %s498 = smul.u32 2, %s24
        %v499 = vld [vmem:[%s448] sm:$0xff]
        %v500 = vld [vmem:[%s448 + $0x8] sm:$0xff]
        %v501 = vld [vmem:[%s448 + $0x10] sm:$0xff]
        %v502 = vld [vmem:[%s448 + $0x18] sm:$0xff]
        %v503 = vld [vmem:[%s448 + $0x20] sm:$0xff]
        %v504 = vld [vmem:[%s448 + $0x28] sm:$0xff]
        %v505 = vld [vmem:[%s448 + $0x30] sm:$0xff]
        %v506 = vld [vmem:[%s448 + $0x38] sm:$0xff]
        %v507 = vld [vmem:[%s448 + $0x40] sm:$0xff]
        %v508 = vld [vmem:[%s448 + $0x48] sm:$0xff]
        %v509 = vld [vmem:[%s448 + $0x50] sm:$0xff]
        %v510 = vld [vmem:[%s448 + $0x58] sm:$0xff]
        %v511 = vld [vmem:[%s3] sm:$0xff]
        %v512 = vld [vmem:[%s3 + $0x8] sm:$0xff]
        %v513 = vld [vmem:[%s3 + $0x10] sm:$0xff]
        %v514 = vld [vmem:[%s3 + $0x18] sm:$0xff]
        %v515 = vld [vmem:[%s3 + $0x20] sm:$0xff]
        %v516 = vld [vmem:[%s3 + $0x28] sm:$0xff]
        %v517 = vld [vmem:[%s3 + $0x30] sm:$0xff]
        %v518 = vld [vmem:[%s3 + $0x38] sm:$0xff]
        %v519 = vld [vmem:[%s3 + $0x40] sm:$0xff]
        %v520 = vld [vmem:[%s3 + $0x48] sm:$0xff]
        %v521 = vld [vmem:[%s3 + $0x50] sm:$0xff]
        %v522 = vld [vmem:[%s3 + $0x58] sm:$0xff]
        %v523 = vld [vmem:[%s3 + $0x60] sm:$0xff]
        %v524 = vld [vmem:[%s3 + $0x68] sm:$0xff]
        %v525 = vld [vmem:[%s3 + $0x70] sm:$0xff]
        %v526 = vld [vmem:[%s3 + $0x78] sm:$0xff]
        %v527 = vld [vmem:[%s3 + $0x80] sm:$0xff]
        %v528 = vld [vmem:[%s3 + $0x88] sm:$0xff]
        %v529 = vld [vmem:[%s3 + $0x90] sm:$0xff]
        %v530 = vld [vmem:[%s3 + $0x98] sm:$0xff]
        %v531 = vld [vmem:[%s3 + $0xa0] sm:$0xff]
        %v532 = vld [vmem:[%s3 + $0xa8] sm:$0xff]
        %v533 = vld [vmem:[%s3 + $0xb0] sm:$0xff]
        %v534 = vld [vmem:[%s3 + $0xb8] sm:$0xff]
        %v535 = vld [vmem:[%s3 + $0xc0] sm:$0xff]
        %v536 = vld [vmem:[%s3 + $0xc8] sm:$0xff]
        %v537 = vld [vmem:[%s3 + $0xd0] sm:$0xff]
        %v538 = vld [vmem:[%s3 + $0xd8] sm:$0xff]
        %v539 = vld [vmem:[%s3 + $0xe0] sm:$0xff]
        %v540 = vld [vmem:[%s3 + $0xe8] sm:$0xff]
        %v541 = vld [vmem:[%s3 + $0xf0] sm:$0xff]
        %v542 = vld [vmem:[%s3 + $0xf8] sm:$0xff]
        %s543 = scalar_lea.vmem %s3, 256
        %v544 = vld [vmem:[%s543] sm:$0xff]
        %v545 = vld [vmem:[%s543 + $0x8] sm:$0xff]
        %v546 = vld [vmem:[%s543 + $0x10] sm:$0xff]
        %v547 = vld [vmem:[%s543 + $0x18] sm:$0xff]
        %v548 = vld [vmem:[%s543 + $0x20] sm:$0xff]
        %v549 = vld [vmem:[%s543 + $0x28] sm:$0xff]
        %v550 = vld [vmem:[%s543 + $0x30] sm:$0xff]
        %v551 = vld [vmem:[%s543 + $0x38] sm:$0xff]
        %v552 = vld [vmem:[%s543 + $0x40] sm:$0xff]
        %v553 = vld [vmem:[%s543 + $0x48] sm:$0xff]
        %v554 = vld [vmem:[%s543 + $0x50] sm:$0xff]
        %v555 = vld [vmem:[%s543 + $0x58] sm:$0xff]
        %v556 = vld [vmem:[%s543 + $0x60] sm:$0xff]
        %v557 = vld [vmem:[%s543 + $0x68] sm:$0xff]
        %v558 = vld [vmem:[%s543 + $0x70] sm:$0xff]
        %v559 = vld [vmem:[%s543 + $0x78] sm:$0xff]
        %v560 = vld [vmem:[%s543 + $0x80] sm:$0xff]
        %v561 = vld [vmem:[%s543 + $0x88] sm:$0xff]
        %v562 = vld [vmem:[%s543 + $0x90] sm:$0xff]
        %v563 = vld [vmem:[%s543 + $0x98] sm:$0xff]
        %v564 = vld [vmem:[%s543 + $0xa0] sm:$0xff]
        %v565 = vld [vmem:[%s543 + $0xa8] sm:$0xff]
        %v566 = vld [vmem:[%s543 + $0xb0] sm:$0xff]
        %v567 = vld [vmem:[%s543 + $0xb8] sm:$0xff]
        %v568 = vld [vmem:[%s543 + $0xc0] sm:$0xff]
        %v569 = vld [vmem:[%s543 + $0xc8] sm:$0xff]
        %v570 = vld [vmem:[%s543 + $0xd0] sm:$0xff]
        %v571 = vld [vmem:[%s543 + $0xd8] sm:$0xff]
        %v572 = vld [vmem:[%s543 + $0xe0] sm:$0xff]
        %v573 = vld [vmem:[%s543 + $0xe8] sm:$0xff]
        %v574 = vld [vmem:[%s543 + $0xf0] sm:$0xff]
        %v575 = vld [vmem:[%s543 + $0xf8] sm:$0xff]
        %v584 = vunpack.c.l.b16 %v501
        %v585 = vunpack.c.h.b16 %v501
        %v586 = vunpack.c.l.b16 %v502
        %v587 = vunpack.c.h.b16 %v502
        %v588 = vunpack.c.l.b16 %v503
        %v589 = vunpack.c.h.b16 %v503
        %v590 = vunpack.c.l.b16 %v504
        %v591 = vunpack.c.h.b16 %v504
        %v592 = vunpack.c.l.b16 %v505
        %v593 = vunpack.c.h.b16 %v505
        %v594 = vunpack.c.l.b16 %v506
        %v595 = vunpack.c.h.b16 %v506
        %v596 = vunpack.c.l.b16 %v507
        %v597 = vunpack.c.h.b16 %v507
        %v598 = vunpack.c.l.b16 %v508
        %v599 = vunpack.c.h.b16 %v508
        %v600 = vpack.c.b16 %v586, %v584
        %v601 = vpack.c.b16 %v587, %v585
        %v602 = vpack.c.b16 %v590, %v588
        %v603 = vpack.c.b16 %v591, %v589
        %v604 = vpack.c.b16 %v594, %v592
        %v605 = vpack.c.b16 %v595, %v593
        %v606 = vpack.c.b16 %v598, %v596
        %v607 = vpack.c.b16 %v599, %v597
        %v648 = vunpack.c.l.b16 %v544
        %v649 = vunpack.c.h.b16 %v544
        %v650 = vunpack.c.l.b16 %v545
        %v651 = vunpack.c.h.b16 %v545
        %v652 = vunpack.c.l.b16 %v546
        %v653 = vunpack.c.h.b16 %v546
        %v654 = vunpack.c.l.b16 %v547
        %v655 = vunpack.c.h.b16 %v547
        %v656 = vunpack.c.l.b16 %v548
        %v657 = vunpack.c.h.b16 %v548
        %v658 = vunpack.c.l.b16 %v549
        %v659 = vunpack.c.h.b16 %v549
        %v660 = vunpack.c.l.b16 %v550
        %v661 = vunpack.c.h.b16 %v550
        %v662 = vunpack.c.l.b16 %v551
        %v663 = vunpack.c.h.b16 %v551
        %v664 = vunpack.c.l.b16 %v552
        %v665 = vunpack.c.h.b16 %v552
        %v666 = vunpack.c.l.b16 %v553
        %v667 = vunpack.c.h.b16 %v553
        %v668 = vunpack.c.l.b16 %v554
        %v669 = vunpack.c.h.b16 %v554
        %v670 = vunpack.c.l.b16 %v555
        %v671 = vunpack.c.h.b16 %v555
        %v672 = vunpack.c.l.b16 %v556
        %v673 = vunpack.c.h.b16 %v556
        %v674 = vunpack.c.l.b16 %v557
        %v675 = vunpack.c.h.b16 %v557
        %v676 = vunpack.c.l.b16 %v558
        %v677 = vunpack.c.h.b16 %v558
        %v678 = vunpack.c.l.b16 %v559
        %v679 = vunpack.c.h.b16 %v559
        %v680 = vunpack.c.l.b16 %v560
        %v681 = vunpack.c.h.b16 %v560
        %v682 = vunpack.c.l.b16 %v561
        %v683 = vunpack.c.h.b16 %v561
        %v684 = vunpack.c.l.b16 %v562
        %v685 = vunpack.c.h.b16 %v562
        %v686 = vunpack.c.l.b16 %v563
        %v687 = vunpack.c.h.b16 %v563
        %v688 = vunpack.c.l.b16 %v564
        %v689 = vunpack.c.h.b16 %v564
        %v690 = vunpack.c.l.b16 %v565
        %v691 = vunpack.c.h.b16 %v565
        %v692 = vunpack.c.l.b16 %v566
        %v693 = vunpack.c.h.b16 %v566
        %v694 = vunpack.c.l.b16 %v567
        %v695 = vunpack.c.h.b16 %v567
        %v696 = vunpack.c.l.b16 %v568
        %v697 = vunpack.c.h.b16 %v568
        %v698 = vunpack.c.l.b16 %v569
        %v699 = vunpack.c.h.b16 %v569
        %v700 = vunpack.c.l.b16 %v570
        %v701 = vunpack.c.h.b16 %v570
        %v702 = vunpack.c.l.b16 %v571
        %v703 = vunpack.c.h.b16 %v571
        %v704 = vunpack.c.l.b16 %v572
        %v705 = vunpack.c.h.b16 %v572
        %v706 = vunpack.c.l.b16 %v573
        %v707 = vunpack.c.h.b16 %v573
        %v708 = vunpack.c.l.b16 %v574
        %v709 = vunpack.c.h.b16 %v574
        %v710 = vunpack.c.l.b16 %v575
        %v711 = vunpack.c.h.b16 %v575
        %v712 = vpack.c.b16 %v650, %v648
        %v713 = vpack.c.b16 %v651, %v649
        %v714 = vpack.c.b16 %v654, %v652
        %v715 = vpack.c.b16 %v655, %v653
        %v716 = vpack.c.b16 %v658, %v656
        %v717 = vpack.c.b16 %v659, %v657
        %v718 = vpack.c.b16 %v662, %v660
        %v719 = vpack.c.b16 %v663, %v661
        %v720 = vpack.c.b16 %v666, %v664
        %v721 = vpack.c.b16 %v667, %v665
        %v722 = vpack.c.b16 %v670, %v668
        %v723 = vpack.c.b16 %v671, %v669
        %v724 = vpack.c.b16 %v674, %v672
        %v725 = vpack.c.b16 %v675, %v673
        %v726 = vpack.c.b16 %v678, %v676
        %v727 = vpack.c.b16 %v679, %v677
        %v728 = vpack.c.b16 %v682, %v680
        %v729 = vpack.c.b16 %v683, %v681
        %v730 = vpack.c.b16 %v686, %v684
        %v731 = vpack.c.b16 %v687, %v685
        %v732 = vpack.c.b16 %v690, %v688
        %v733 = vpack.c.b16 %v691, %v689
        %v734 = vpack.c.b16 %v694, %v692
        %v735 = vpack.c.b16 %v695, %v693
        %v736 = vpack.c.b16 %v698, %v696
        %v737 = vpack.c.b16 %v699, %v697
        %v738 = vpack.c.b16 %v702, %v700
        %v739 = vpack.c.b16 %v703, %v701
        %v740 = vpack.c.b16 %v706, %v704
        %v741 = vpack.c.b16 %v707, %v705
        %v742 = vpack.c.b16 %v710, %v708
        %v743 = vpack.c.b16 %v711, %v709
        %776 = vmatprep.subr.bf16.mxu0 %v713
        %777 = vmatpush1.bf16.msra.mxu0 %v712
        %778 = vmatprep.subr.bf16.mxu0 %v715
        %779 = vmatpush1.bf16.msra.mxu0 %v714
        %780 = vmatprep.subr.bf16.mxu0 %v717
        %781 = vmatpush1.bf16.msra.mxu0 %v716
        %782 = vmatprep.subr.bf16.mxu0 %v719
        %783 = vmatpush1.bf16.msra.mxu0 %v718
        %784 = vmatprep.subr.bf16.mxu0 %v721
        %785 = vmatpush1.bf16.msra.mxu0 %v720
        %786 = vmatprep.subr.bf16.mxu0 %v723
        %787 = vmatpush1.bf16.msra.mxu0 %v722
        %788 = vmatprep.subr.bf16.mxu0 %v725
        %789 = vmatpush1.bf16.msra.mxu0 %v724
        %790 = vmatprep.subr.bf16.mxu0 %v727
        %791 = vmatpush1.bf16.msra.mxu0 %v726
        %792 = vmatprep.subr.bf16.mxu0 %v729
        %793 = vmatpush1.bf16.msra.mxu0 %v728
        %794 = vmatprep.subr.bf16.mxu0 %v731
        %795 = vmatpush1.bf16.msra.mxu0 %v730
        %796 = vmatprep.subr.bf16.mxu0 %v733
        %797 = vmatpush1.bf16.msra.mxu0 %v732
        %798 = vmatprep.subr.bf16.mxu0 %v735
        %799 = vmatpush1.bf16.msra.mxu0 %v734
        %800 = vmatprep.subr.bf16.mxu0 %v737
        %801 = vmatpush1.bf16.msra.mxu0 %v736
        %802 = vmatprep.subr.bf16.mxu0 %v739
        %803 = vmatpush1.bf16.msra.mxu0 %v738
        %804 = vmatprep.subr.bf16.mxu0 %v741
        %805 = vmatpush1.bf16.msra.mxu0 %v740
        %806 = vmatprep.subr.bf16.mxu0 %v743
        %807 = vmatpush1.bf16.msra.mxu0 %v742
        %808 = vmatprep.mubr.bf16.mxu0 %v601
        %809 = vmatmul.mubr.bf16.gmra.mrb[0].mxu0 %v600
        %v810 = vpop.f32.mrb[0].mxu0
        %v811 = vadd.f32 0.0, %v810
        %v812 = vpop.f32.mrb[0].mxu0
        %v813 = vadd.f32 0.0, %v812
        %v814 = vpop.f32.mrb[0].mxu0
        %v815 = vadd.f32 0.0, %v814
        %v816 = vpop.f32.mrb[0].mxu0
        %v817 = vadd.f32 0.0, %v816
        %818 = vmatprep.mubr.bf16.mxu0 %v603
        %819 = vmatmul.mubr.bf16.gmra.mrb[0].mxu0 %v602
        %v820 = vpop.f32.mrb[0].mxu0
        %v821 = vadd.f32 0.0, %v820
        %v822 = vpop.f32.mrb[0].mxu0
        %v823 = vadd.f32 0.0, %v822
        %v824 = vpop.f32.mrb[0].mxu0
        %v825 = vadd.f32 0.0, %v824
        %v826 = vpop.f32.mrb[0].mxu0
        %v827 = vadd.f32 0.0, %v826
        %828 = vmatprep.mubr.bf16.mxu0 %v605
        %829 = vmatmul.mubr.bf16.gmra.mrb[0].mxu0 %v604
        %v830 = vpop.f32.mrb[0].mxu0
        %v831 = vadd.f32 0.0, %v830
        %v832 = vpop.f32.mrb[0].mxu0
        %v833 = vadd.f32 0.0, %v832
        %v834 = vpop.f32.mrb[0].mxu0
        %v835 = vadd.f32 0.0, %v834
        %v836 = vpop.f32.mrb[0].mxu0
        %v837 = vadd.f32 0.0, %v836
        %838 = vmatprep.mubr.bf16.mxu0 %v607
        %839 = vmatmul.mubr.bf16.gmra.mrb[0].mxu0 %v606
        %v840 = vpop.f32.mrb[0].mxu0
        %v841 = vadd.f32 0.0, %v840
        %v842 = vpop.f32.mrb[0].mxu0
        %v843 = vadd.f32 0.0, %v842
        %v844 = vpop.f32.mrb[0].mxu0
        %v845 = vadd.f32 0.0, %v844
        %v846 = vpop.f32.mrb[0].mxu0
        %v847 = vadd.f32 0.0, %v846
        %848 = vdwg.mxu0
        %v851 = vunpack.c.l.b16 %v499
        %v852 = vunpack.c.h.b16 %v499
        %v853 = vunpack.c.l.b16 %v500
        %v854 = vunpack.c.h.b16 %v500
        %v855 = vpack.c.b16 %v853, %v851
        %v856 = vpack.c.b16 %v854, %v852
        %v891 = vunpack.c.l.b16 %v511
        %v892 = vunpack.c.h.b16 %v511
        %v893 = vunpack.c.l.b16 %v512
        %v894 = vunpack.c.h.b16 %v512
        %v895 = vunpack.c.l.b16 %v513
        %v896 = vunpack.c.h.b16 %v513
        %v897 = vunpack.c.l.b16 %v514
        %v898 = vunpack.c.h.b16 %v514
        %v899 = vunpack.c.l.b16 %v515
        %v900 = vunpack.c.h.b16 %v515
        %v901 = vunpack.c.l.b16 %v516
        %v902 = vunpack.c.h.b16 %v516
        %v903 = vunpack.c.l.b16 %v517
        %v904 = vunpack.c.h.b16 %v517
        %v905 = vunpack.c.l.b16 %v518
        %v906 = vunpack.c.h.b16 %v518
        %v907 = vunpack.c.l.b16 %v519
        %v908 = vunpack.c.h.b16 %v519
        %v909 = vunpack.c.l.b16 %v520
        %v910 = vunpack.c.h.b16 %v520
        %v911 = vunpack.c.l.b16 %v521
        %v912 = vunpack.c.h.b16 %v521
        %v913 = vunpack.c.l.b16 %v522
        %v914 = vunpack.c.h.b16 %v522
        %v915 = vunpack.c.l.b16 %v523
        %v916 = vunpack.c.h.b16 %v523
        %v917 = vunpack.c.l.b16 %v524
        %v918 = vunpack.c.h.b16 %v524
        %v919 = vunpack.c.l.b16 %v525
        %v920 = vunpack.c.h.b16 %v525
        %v921 = vunpack.c.l.b16 %v526
        %v922 = vunpack.c.h.b16 %v526
        %v923 = vunpack.c.l.b16 %v527
        %v924 = vunpack.c.h.b16 %v527
        %v925 = vunpack.c.l.b16 %v528
        %v926 = vunpack.c.h.b16 %v528
        %v927 = vunpack.c.l.b16 %v529
        %v928 = vunpack.c.h.b16 %v529
        %v929 = vunpack.c.l.b16 %v530
        %v930 = vunpack.c.h.b16 %v530
        %v931 = vunpack.c.l.b16 %v531
        %v932 = vunpack.c.h.b16 %v531
        %v933 = vunpack.c.l.b16 %v532
        %v934 = vunpack.c.h.b16 %v532
        %v935 = vunpack.c.l.b16 %v533
        %v936 = vunpack.c.h.b16 %v533
        %v937 = vunpack.c.l.b16 %v534
        %v938 = vunpack.c.h.b16 %v534
        %v939 = vunpack.c.l.b16 %v535
        %v940 = vunpack.c.h.b16 %v535
        %v941 = vunpack.c.l.b16 %v536
        %v942 = vunpack.c.h.b16 %v536
        %v943 = vunpack.c.l.b16 %v537
        %v944 = vunpack.c.h.b16 %v537
        %v945 = vunpack.c.l.b16 %v538
        %v946 = vunpack.c.h.b16 %v538
        %v947 = vunpack.c.l.b16 %v539
        %v948 = vunpack.c.h.b16 %v539
        %v949 = vunpack.c.l.b16 %v540
        %v950 = vunpack.c.h.b16 %v540
        %v951 = vunpack.c.l.b16 %v541
        %v952 = vunpack.c.h.b16 %v541
        %v953 = vunpack.c.l.b16 %v542
        %v954 = vunpack.c.h.b16 %v542
        %v955 = vpack.c.b16 %v893, %v891
        %v956 = vpack.c.b16 %v894, %v892
        %v957 = vpack.c.b16 %v897, %v895
        %v958 = vpack.c.b16 %v898, %v896
        %v959 = vpack.c.b16 %v901, %v899
        %v960 = vpack.c.b16 %v902, %v900
        %v961 = vpack.c.b16 %v905, %v903
        %v962 = vpack.c.b16 %v906, %v904
        %v963 = vpack.c.b16 %v909, %v907
        %v964 = vpack.c.b16 %v910, %v908
        %v965 = vpack.c.b16 %v913, %v911
        %v966 = vpack.c.b16 %v914, %v912
        %v967 = vpack.c.b16 %v917, %v915
        %v968 = vpack.c.b16 %v918, %v916
        %v969 = vpack.c.b16 %v921, %v919
        %v970 = vpack.c.b16 %v922, %v920
        %v971 = vpack.c.b16 %v925, %v923
        %v972 = vpack.c.b16 %v926, %v924
        %v973 = vpack.c.b16 %v929, %v927
        %v974 = vpack.c.b16 %v930, %v928
        %v975 = vpack.c.b16 %v933, %v931
        %v976 = vpack.c.b16 %v934, %v932
        %v977 = vpack.c.b16 %v937, %v935
        %v978 = vpack.c.b16 %v938, %v936
        %v979 = vpack.c.b16 %v941, %v939
        %v980 = vpack.c.b16 %v942, %v940
        %v981 = vpack.c.b16 %v945, %v943
        %v982 = vpack.c.b16 %v946, %v944
        %v983 = vpack.c.b16 %v949, %v947
        %v984 = vpack.c.b16 %v950, %v948
        %v985 = vpack.c.b16 %v953, %v951
        %v986 = vpack.c.b16 %v954, %v952
        %1019 = vmatprep.subr.bf16.mxu0 %v956
        %1020 = vmatpush1.bf16.msra.mxu0 %v955
        %1021 = vmatprep.subr.bf16.mxu0 %v958
        %1022 = vmatpush1.bf16.msra.mxu0 %v957
        %1023 = vmatprep.subr.bf16.mxu0 %v960
        %1024 = vmatpush1.bf16.msra.mxu0 %v959
        %1025 = vmatprep.subr.bf16.mxu0 %v962
        %1026 = vmatpush1.bf16.msra.mxu0 %v961
        %1027 = vmatprep.subr.bf16.mxu0 %v964
        %1028 = vmatpush1.bf16.msra.mxu0 %v963
        %1029 = vmatprep.subr.bf16.mxu0 %v966
        %1030 = vmatpush1.bf16.msra.mxu0 %v965
        %1031 = vmatprep.subr.bf16.mxu0 %v968
        %1032 = vmatpush1.bf16.msra.mxu0 %v967
        %1033 = vmatprep.subr.bf16.mxu0 %v970
        %1034 = vmatpush1.bf16.msra.mxu0 %v969
        %1035 = vmatprep.subr.bf16.mxu0 %v972
        %1036 = vmatpush1.bf16.msra.mxu0 %v971
        %1037 = vmatprep.subr.bf16.mxu0 %v974
        %1038 = vmatpush1.bf16.msra.mxu0 %v973
        %1039 = vmatprep.subr.bf16.mxu0 %v976
        %1040 = vmatpush1.bf16.msra.mxu0 %v975
        %1041 = vmatprep.subr.bf16.mxu0 %v978
        %1042 = vmatpush1.bf16.msra.mxu0 %v977
        %1043 = vmatprep.subr.bf16.mxu0 %v980
        %1044 = vmatpush1.bf16.msra.mxu0 %v979
        %1045 = vmatprep.subr.bf16.mxu0 %v982
        %1046 = vmatpush1.bf16.msra.mxu0 %v981
        %1047 = vmatprep.subr.bf16.mxu0 %v984
        %1048 = vmatpush1.bf16.msra.mxu0 %v983
        %1049 = vmatprep.subr.bf16.mxu0 %v986
        %1050 = vmatpush1.bf16.msra.mxu0 %v985
        %1051 = vmatprep.mubr.bf16.mxu0 %v856
        %1052 = vmatmul.mubr.bf16.gmra.mrb[0].mxu0 %v855
        %v1053 = vpop.f32.mrb[0].mxu0
        %v1054 = vadd.f32 %v811, %v1053
        %v1055 = vpop.f32.mrb[0].mxu0
        %v1056 = vadd.f32 %v813, %v1055
        %v1057 = vpop.f32.mrb[0].mxu0
        %v1058 = vadd.f32 %v815, %v1057
        %v1059 = vpop.f32.mrb[0].mxu0
        %v1060 = vadd.f32 %v817, %v1059
        %1061 = vmatprep.mubr.bf16.mxu0 %v601
        %1062 = vmatmul.mubr.bf16.gmra.mrb[0].mxu0 %v600
        %v1063 = vpop.f32.mrb[0].mxu0
        %v1064 = vadd.f32 %v821, %v1063
        %v1065 = vpop.f32.mrb[0].mxu0
        %v1066 = vadd.f32 %v823, %v1065
        %v1067 = vpop.f32.mrb[0].mxu0
        %v1068 = vadd.f32 %v825, %v1067
        %v1069 = vpop.f32.mrb[0].mxu0
        %v1070 = vadd.f32 %v827, %v1069
        %1071 = vmatprep.mubr.bf16.mxu0 %v603
        %1072 = vmatmul.mubr.bf16.gmra.mrb[0].mxu0 %v602
        %v1073 = vpop.f32.mrb[0].mxu0
        %v1074 = vadd.f32 %v831, %v1073
        %v1075 = vpop.f32.mrb[0].mxu0
        %v1076 = vadd.f32 %v833, %v1075
        %v1077 = vpop.f32.mrb[0].mxu0
        %v1078 = vadd.f32 %v835, %v1077
        %v1079 = vpop.f32.mrb[0].mxu0
        %v1080 = vadd.f32 %v837, %v1079
        %1081 = vmatprep.mubr.bf16.mxu0 %v605
        %1082 = vmatmul.mubr.bf16.gmra.mrb[0].mxu0 %v604
        %v1083 = vpop.f32.mrb[0].mxu0
        %v1084 = vadd.f32 %v841, %v1083
        %v1085 = vpop.f32.mrb[0].mxu0
        %v1086 = vadd.f32 %v843, %v1085
        %v1087 = vpop.f32.mrb[0].mxu0
        %v1088 = vadd.f32 %v845, %v1087
        %v1089 = vpop.f32.mrb[0].mxu0
        %v1090 = vadd.f32 %v847, %v1089
        %1091 = vdwg.mxu0
        %s1092 = scalar_lea.vmem %s3, 512
        %v1093 = vld [vmem:[%s1092] sm:$0xff]
        %v1094 = vld [vmem:[%s1092 + $0x8] sm:$0xff]
        %v1095 = vld [vmem:[%s1092 + $0x10] sm:$0xff]
        %v1096 = vld [vmem:[%s1092 + $0x18] sm:$0xff]
        %v1097 = vld [vmem:[%s1092 + $0x20] sm:$0xff]
        %v1098 = vld [vmem:[%s1092 + $0x28] sm:$0xff]
        %v1099 = vld [vmem:[%s1092 + $0x30] sm:$0xff]
        %v1100 = vld [vmem:[%s1092 + $0x38] sm:$0xff]
        %v1101 = vld [vmem:[%s1092 + $0x40] sm:$0xff]
        %v1102 = vld [vmem:[%s1092 + $0x48] sm:$0xff]
        %v1103 = vld [vmem:[%s1092 + $0x50] sm:$0xff]
        %v1104 = vld [vmem:[%s1092 + $0x58] sm:$0xff]
        %v1105 = vld [vmem:[%s1092 + $0x60] sm:$0xff]
        %v1106 = vld [vmem:[%s1092 + $0x68] sm:$0xff]
        %v1107 = vld [vmem:[%s1092 + $0x70] sm:$0xff]
        %v1108 = vld [vmem:[%s1092 + $0x78] sm:$0xff]
        %v1109 = vld [vmem:[%s1092 + $0x80] sm:$0xff]
        %v1110 = vld [vmem:[%s1092 + $0x88] sm:$0xff]
        %v1111 = vld [vmem:[%s1092 + $0x90] sm:$0xff]
        %v1112 = vld [vmem:[%s1092 + $0x98] sm:$0xff]
        %v1113 = vld [vmem:[%s1092 + $0xa0] sm:$0xff]
        %v1114 = vld [vmem:[%s1092 + $0xa8] sm:$0xff]
        %v1115 = vld [vmem:[%s1092 + $0xb0] sm:$0xff]
        %v1116 = vld [vmem:[%s1092 + $0xb8] sm:$0xff]
        %v1117 = vld [vmem:[%s1092 + $0xc0] sm:$0xff]
        %v1118 = vld [vmem:[%s1092 + $0xc8] sm:$0xff]
        %v1119 = vld [vmem:[%s1092 + $0xd0] sm:$0xff]
        %v1120 = vld [vmem:[%s1092 + $0xd8] sm:$0xff]
        %v1121 = vld [vmem:[%s1092 + $0xe0] sm:$0xff]
        %v1122 = vld [vmem:[%s1092 + $0xe8] sm:$0xff]
        %v1123 = vld [vmem:[%s1092 + $0xf0] sm:$0xff]
        %v1124 = vld [vmem:[%s1092 + $0xf8] sm:$0xff]
        %v1127 = vunpack.c.l.b16 %v509
        %v1128 = vunpack.c.h.b16 %v509
        %v1129 = vunpack.c.l.b16 %v510
        %v1130 = vunpack.c.h.b16 %v510
        %v1131 = vpack.c.b16 %v1129, %v1127
        %v1132 = vpack.c.b16 %v1130, %v1128
        %v1167 = vunpack.c.l.b16 %v1093
        %v1168 = vunpack.c.h.b16 %v1093
        %v1169 = vunpack.c.l.b16 %v1094
        %v1170 = vunpack.c.h.b16 %v1094
        %v1171 = vunpack.c.l.b16 %v1095
        %v1172 = vunpack.c.h.b16 %v1095
        %v1173 = vunpack.c.l.b16 %v1096
        %v1174 = vunpack.c.h.b16 %v1096
        %v1175 = vunpack.c.l.b16 %v1097
        %v1176 = vunpack.c.h.b16 %v1097
        %v1177 = vunpack.c.l.b16 %v1098
        %v1178 = vunpack.c.h.b16 %v1098
        %v1179 = vunpack.c.l.b16 %v1099
        %v1180 = vunpack.c.h.b16 %v1099
        %v1181 = vunpack.c.l.b16 %v1100
        %v1182 = vunpack.c.h.b16 %v1100
        %v1183 = vunpack.c.l.b16 %v1101
        %v1184 = vunpack.c.h.b16 %v1101
        %v1185 = vunpack.c.l.b16 %v1102
        %v1186 = vunpack.c.h.b16 %v1102
        %v1187 = vunpack.c.l.b16 %v1103
        %v1188 = vunpack.c.h.b16 %v1103
        %v1189 = vunpack.c.l.b16 %v1104
        %v1190 = vunpack.c.h.b16 %v1104
        %v1191 = vunpack.c.l.b16 %v1105
        %v1192 = vunpack.c.h.b16 %v1105
        %v1193 = vunpack.c.l.b16 %v1106
        %v1194 = vunpack.c.h.b16 %v1106
        %v1195 = vunpack.c.l.b16 %v1107
        %v1196 = vunpack.c.h.b16 %v1107
        %v1197 = vunpack.c.l.b16 %v1108
        %v1198 = vunpack.c.h.b16 %v1108
        %v1199 = vunpack.c.l.b16 %v1109
        %v1200 = vunpack.c.h.b16 %v1109
        %v1201 = vunpack.c.l.b16 %v1110
        %v1202 = vunpack.c.h.b16 %v1110
        %v1203 = vunpack.c.l.b16 %v1111
        %v1204 = vunpack.c.h.b16 %v1111
        %v1205 = vunpack.c.l.b16 %v1112
        %v1206 = vunpack.c.h.b16 %v1112
        %v1207 = vunpack.c.l.b16 %v1113
        %v1208 = vunpack.c.h.b16 %v1113
        %v1209 = vunpack.c.l.b16 %v1114
        %v1210 = vunpack.c.h.b16 %v1114
        %v1211 = vunpack.c.l.b16 %v1115
        %v1212 = vunpack.c.h.b16 %v1115
        %v1213 = vunpack.c.l.b16 %v1116
        %v1214 = vunpack.c.h.b16 %v1116
        %v1215 = vunpack.c.l.b16 %v1117
        %v1216 = vunpack.c.h.b16 %v1117
        %v1217 = vunpack.c.l.b16 %v1118
        %v1218 = vunpack.c.h.b16 %v1118
        %v1219 = vunpack.c.l.b16 %v1119
        %v1220 = vunpack.c.h.b16 %v1119
        %v1221 = vunpack.c.l.b16 %v1120
        %v1222 = vunpack.c.h.b16 %v1120
        %v1223 = vunpack.c.l.b16 %v1121
        %v1224 = vunpack.c.h.b16 %v1121
        %v1225 = vunpack.c.l.b16 %v1122
        %v1226 = vunpack.c.h.b16 %v1122
        %v1227 = vunpack.c.l.b16 %v1123
        %v1228 = vunpack.c.h.b16 %v1123
        %v1229 = vunpack.c.l.b16 %v1124
        %v1230 = vunpack.c.h.b16 %v1124
        %v1231 = vpack.c.b16 %v1169, %v1167
        %v1232 = vpack.c.b16 %v1170, %v1168
        %v1233 = vpack.c.b16 %v1173, %v1171
        %v1234 = vpack.c.b16 %v1174, %v1172
        %v1235 = vpack.c.b16 %v1177, %v1175
        %v1236 = vpack.c.b16 %v1178, %v1176
        %v1237 = vpack.c.b16 %v1181, %v1179
        %v1238 = vpack.c.b16 %v1182, %v1180
        %v1239 = vpack.c.b16 %v1185, %v1183
        %v1240 = vpack.c.b16 %v1186, %v1184
        %v1241 = vpack.c.b16 %v1189, %v1187
        %v1242 = vpack.c.b16 %v1190, %v1188
        %v1243 = vpack.c.b16 %v1193, %v1191
        %v1244 = vpack.c.b16 %v1194, %v1192
        %v1245 = vpack.c.b16 %v1197, %v1195
        %v1246 = vpack.c.b16 %v1198, %v1196
        %v1247 = vpack.c.b16 %v1201, %v1199
        %v1248 = vpack.c.b16 %v1202, %v1200
        %v1249 = vpack.c.b16 %v1205, %v1203
        %v1250 = vpack.c.b16 %v1206, %v1204
        %v1251 = vpack.c.b16 %v1209, %v1207
        %v1252 = vpack.c.b16 %v1210, %v1208
        %v1253 = vpack.c.b16 %v1213, %v1211
        %v1254 = vpack.c.b16 %v1214, %v1212
        %v1255 = vpack.c.b16 %v1217, %v1215
        %v1256 = vpack.c.b16 %v1218, %v1216
        %v1257 = vpack.c.b16 %v1221, %v1219
        %v1258 = vpack.c.b16 %v1222, %v1220
        %v1259 = vpack.c.b16 %v1225, %v1223
        %v1260 = vpack.c.b16 %v1226, %v1224
        %v1261 = vpack.c.b16 %v1229, %v1227
        %v1262 = vpack.c.b16 %v1230, %v1228
        %1295 = vmatprep.subr.bf16.mxu0 %v1232
        %1296 = vmatpush1.bf16.msra.mxu0 %v1231
        %1297 = vmatprep.subr.bf16.mxu0 %v1234
        %1298 = vmatpush1.bf16.msra.mxu0 %v1233
        %1299 = vmatprep.subr.bf16.mxu0 %v1236
        %1300 = vmatpush1.bf16.msra.mxu0 %v1235
        %1301 = vmatprep.subr.bf16.mxu0 %v1238
        %1302 = vmatpush1.bf16.msra.mxu0 %v1237
        %1303 = vmatprep.subr.bf16.mxu0 %v1240
        %1304 = vmatpush1.bf16.msra.mxu0 %v1239
        %1305 = vmatprep.subr.bf16.mxu0 %v1242
        %1306 = vmatpush1.bf16.msra.mxu0 %v1241
        %1307 = vmatprep.subr.bf16.mxu0 %v1244
        %1308 = vmatpush1.bf16.msra.mxu0 %v1243
        %1309 = vmatprep.subr.bf16.mxu0 %v1246
        %1310 = vmatpush1.bf16.msra.mxu0 %v1245
        %1311 = vmatprep.subr.bf16.mxu0 %v1248
        %1312 = vmatpush1.bf16.msra.mxu0 %v1247
        %1313 = vmatprep.subr.bf16.mxu0 %v1250
        %1314 = vmatpush1.bf16.msra.mxu0 %v1249
        %1315 = vmatprep.subr.bf16.mxu0 %v1252
        %1316 = vmatpush1.bf16.msra.mxu0 %v1251
        %1317 = vmatprep.subr.bf16.mxu0 %v1254
        %1318 = vmatpush1.bf16.msra.mxu0 %v1253
        %1319 = vmatprep.subr.bf16.mxu0 %v1256
        %1320 = vmatpush1.bf16.msra.mxu0 %v1255
        %1321 = vmatprep.subr.bf16.mxu0 %v1258
        %1322 = vmatpush1.bf16.msra.mxu0 %v1257
        %1323 = vmatprep.subr.bf16.mxu0 %v1260
        %1324 = vmatpush1.bf16.msra.mxu0 %v1259
        %1325 = vmatprep.subr.bf16.mxu0 %v1262
        %1326 = vmatpush1.bf16.msra.mxu0 %v1261
        %1327 = vmatprep.mubr.bf16.mxu0 %v603
        %1328 = vmatmul.mubr.bf16.gmra.mrb[0].mxu0 %v602
        %v1329 = vpop.f32.mrb[0].mxu0
        %v1330 = vadd.f32 0.0, %v1329
        %v1331 = vpop.f32.mrb[0].mxu0
        %v1332 = vadd.f32 0.0, %v1331
        %v1333 = vpop.f32.mrb[0].mxu0
        %v1334 = vadd.f32 0.0, %v1333
        %v1335 = vpop.f32.mrb[0].mxu0
        %v1336 = vadd.f32 0.0, %v1335
        %1337 = vmatprep.mubr.bf16.mxu0 %v605
        %1338 = vmatmul.mubr.bf16.gmra.mrb[0].mxu0 %v604
        %v1339 = vpop.f32.mrb[0].mxu0
        %v1340 = vadd.f32 0.0, %v1339
        %v1341 = vpop.f32.mrb[0].mxu0
        %v1342 = vadd.f32 0.0, %v1341
        %v1343 = vpop.f32.mrb[0].mxu0
        %v1344 = vadd.f32 0.0, %v1343
        %v1345 = vpop.f32.mrb[0].mxu0
        %v1346 = vadd.f32 0.0, %v1345
        %1347 = vmatprep.mubr.bf16.mxu0 %v607
        %1348 = vmatmul.mubr.bf16.gmra.mrb[0].mxu0 %v606
        %v1349 = vpop.f32.mrb[0].mxu0
        %v1350 = vadd.f32 0.0, %v1349
        %v1351 = vpop.f32.mrb[0].mxu0
        %v1352 = vadd.f32 0.0, %v1351
        %v1353 = vpop.f32.mrb[0].mxu0
        %v1354 = vadd.f32 0.0, %v1353
        %v1355 = vpop.f32.mrb[0].mxu0
        %v1356 = vadd.f32 0.0, %v1355
        %1357 = vmatprep.mubr.bf16.mxu0 %v1132
        %1358 = vmatmul.mubr.bf16.gmra.mrb[0].mxu0 %v1131
        %v1359 = vpop.f32.mrb[0].mxu0
        %v1360 = vadd.f32 0.0, %v1359
        %v1361 = vpop.f32.mrb[0].mxu0
        %v1362 = vadd.f32 0.0, %v1361
        %v1363 = vpop.f32.mrb[0].mxu0
        %v1364 = vadd.f32 0.0, %v1363
        %v1365 = vpop.f32.mrb[0].mxu0
        %v1366 = vadd.f32 0.0, %v1365
        %1367 = vdwg.mxu0
        %v1368 = vadd.f32 %v1054, %v1330
        %v1369 = vadd.f32 %v1056, %v1332
        %v1370 = vadd.f32 %v1058, %v1334
        %v1371 = vadd.f32 %v1060, %v1336
        %v1372 = vadd.f32 %v1064, %v1340
        %v1373 = vadd.f32 %v1066, %v1342
        %v1374 = vadd.f32 %v1068, %v1344
        %v1375 = vadd.f32 %v1070, %v1346
        %v1376 = vadd.f32 %v1074, %v1350
        %v1377 = vadd.f32 %v1076, %v1352
        %v1378 = vadd.f32 %v1078, %v1354
        %v1379 = vadd.f32 %v1080, %v1356
        %v1380 = vadd.f32 %v1084, %v1360
        %v1381 = vadd.f32 %v1086, %v1362
        %v1382 = vadd.f32 %v1088, %v1364
        %v1383 = vadd.f32 %v1090, %v1366
        %v1384 = vld [vmem:[%s4] sm:$0x3]
        %v1386 = vlaneseq
        %v1387 = vshrl.u32 %v1386, 7
        %v1388 = vsub.s32 0, %v1387
        %v1389 = vrot.slane %v1384, %v1388
        %v1390 = vlaneseq
        %v1391 = vshrl.u32 %v1390, 7
        %v1392 = vsub.s32 1, %v1391
        %v1393 = vrot.slane %v1384, %v1392
        %v1396 = vadd.f32 %v1368, %v1389
        %v1397 = vadd.f32 %v1369, %v1393
        %v1398 = vadd.f32 %v1370, %v1389
        %v1399 = vadd.f32 %v1371, %v1393
        %v1400 = vadd.f32 %v1372, %v1389
        %v1401 = vadd.f32 %v1373, %v1393
        %v1402 = vadd.f32 %v1374, %v1389
        %v1403 = vadd.f32 %v1375, %v1393
        %v1404 = vadd.f32 %v1376, %v1389
        %v1405 = vadd.f32 %v1377, %v1393
        %v1406 = vadd.f32 %v1378, %v1389
        %v1407 = vadd.f32 %v1379, %v1393
        %v1408 = vadd.f32 %v1380, %v1389
        %v1409 = vadd.f32 %v1381, %v1393
        %v1410 = vadd.f32 %v1382, %v1389
        %v1411 = vadd.f32 %v1383, %v1393
        %v1412 = vmax.f32 %v1396, 0.0
        %v1413 = vmax.f32 %v1397, 0.0
        %v1414 = vmax.f32 %v1398, 0.0
        %v1415 = vmax.f32 %v1399, 0.0
        %v1416 = vmax.f32 %v1400, 0.0
        %v1417 = vmax.f32 %v1401, 0.0
        %v1418 = vmax.f32 %v1402, 0.0
        %v1419 = vmax.f32 %v1403, 0.0
        %v1420 = vmax.f32 %v1404, 0.0
        %v1421 = vmax.f32 %v1405, 0.0
        %v1422 = vmax.f32 %v1406, 0.0
        %v1423 = vmax.f32 %v1407, 0.0
        %v1424 = vmax.f32 %v1408, 0.0
        %v1425 = vmax.f32 %v1409, 0.0
        %v1426 = vmax.f32 %v1410, 0.0
        %v1427 = vmax.f32 %v1411, 0.0
        %v1428 = vld [vmem:[%s455] sm:$0xff]
        %v1429 = vld [vmem:[%s455 + $0x8] sm:$0xff]
        %v1430 = vld [vmem:[%s455 + $0x10] sm:$0xff]
        %v1431 = vld [vmem:[%s455 + $0x18] sm:$0xff]
        %v1432 = vld [vmem:[%s455 + $0x20] sm:$0xff]
        %v1433 = vld [vmem:[%s455 + $0x28] sm:$0xff]
        %v1434 = vld [vmem:[%s455 + $0x30] sm:$0xff]
        %v1435 = vld [vmem:[%s455 + $0x38] sm:$0xff]
        %vm1436 = vcmask 523264
        %1437 = vst.msk [vmem:[%s494] sm:$0xff] %vm1436, %v1428
        %1438 = vst.msk [vmem:[%s494 + $0x10] sm:$0xff] %vm1436, %v1429
        %1439 = vst.msk [vmem:[%s494 + $0x20] sm:$0xff] %vm1436, %v1430
        %1440 = vst.msk [vmem:[%s494 + $0x30] sm:$0xff] %vm1436, %v1431
        %1441 = vst.msk [vmem:[%s494 + $0x40] sm:$0xff] %vm1436, %v1432
        %1442 = vst.msk [vmem:[%s494 + $0x50] sm:$0xff] %vm1436, %v1433
        %1443 = vst.msk [vmem:[%s494 + $0x60] sm:$0xff] %vm1436, %v1434
        %1444 = vst.msk [vmem:[%s494 + $0x70] sm:$0xff] %vm1436, %v1435
        %1461 = vrot.lane.b32.xlu0 %v1412, 64
        %v1462 = vpop.permute.xlu0 %1461
        %1463 = vrot.lane.b32.xlu0 %v1413, 64
        %v1464 = vpop.permute.xlu0 %1463
        %1465 = vrot.lane.b32.xlu0 %v1414, 64
        %v1466 = vpop.permute.xlu0 %1465
        %1467 = vrot.lane.b32.xlu0 %v1415, 64
        %v1468 = vpop.permute.xlu0 %1467
        %1469 = vrot.lane.b32.xlu0 %v1416, 64
        %v1470 = vpop.permute.xlu0 %1469
        %1471 = vrot.lane.b32.xlu0 %v1417, 64
        %v1472 = vpop.permute.xlu0 %1471
        %1473 = vrot.lane.b32.xlu0 %v1418, 64
        %v1474 = vpop.permute.xlu0 %1473
        %1475 = vrot.lane.b32.xlu0 %v1419, 64
        %v1476 = vpop.permute.xlu0 %1475
        %1477 = vrot.lane.b32.xlu0 %v1420, 64
        %v1478 = vpop.permute.xlu0 %1477
        %1479 = vrot.lane.b32.xlu0 %v1421, 64
        %v1480 = vpop.permute.xlu0 %1479
        %1481 = vrot.lane.b32.xlu0 %v1422, 64
        %v1482 = vpop.permute.xlu0 %1481
        %1483 = vrot.lane.b32.xlu0 %v1423, 64
        %v1484 = vpop.permute.xlu0 %1483
        %1485 = vrot.lane.b32.xlu0 %v1424, 64
        %v1486 = vpop.permute.xlu0 %1485
        %1487 = vrot.lane.b32.xlu0 %v1425, 64
        %v1488 = vpop.permute.xlu0 %1487
        %1489 = vrot.lane.b32.xlu0 %v1426, 64
        %v1490 = vpop.permute.xlu0 %1489
        %1491 = vrot.lane.b32.xlu0 %v1427, 64
        %v1492 = vpop.permute.xlu0 %1491
        %v1493 = vsel %vm1436, %v1462, %v1464
        %v1494 = vsel %vm1436, %v1466, %v1468
        %v1495 = vsel %vm1436, %v1470, %v1472
        %v1496 = vsel %vm1436, %v1474, %v1476
        %v1497 = vsel %vm1436, %v1478, %v1480
        %v1498 = vsel %vm1436, %v1482, %v1484
        %v1499 = vsel %vm1436, %v1486, %v1488
        %v1500 = vsel %vm1436, %v1490, %v1492
        %vm1517 = vcmask 1048064
        %1518 = vst.msk [vmem:[%s494] sm:$0xff] %vm1517, %v1462
        %vm1519 = vcmask 785408
        %1520 = vst.msk [vmem:[%s494 + $0x8] sm:$0xff] %vm1519, %v1493
        %1521 = vst.msk [vmem:[%s494 + $0x10] sm:$0xff] %vm1517, %v1466
        %1522 = vst.msk [vmem:[%s494 + $0x18] sm:$0xff] %vm1519, %v1494
        %1523 = vst.msk [vmem:[%s494 + $0x20] sm:$0xff] %vm1517, %v1470
        %1524 = vst.msk [vmem:[%s494 + $0x28] sm:$0xff] %vm1519, %v1495
        %1525 = vst.msk [vmem:[%s494 + $0x30] sm:$0xff] %vm1517, %v1474
        %1526 = vst.msk [vmem:[%s494 + $0x38] sm:$0xff] %vm1519, %v1496
        %1527 = vst.msk [vmem:[%s494 + $0x40] sm:$0xff] %vm1517, %v1478
        %1528 = vst.msk [vmem:[%s494 + $0x48] sm:$0xff] %vm1519, %v1497
        %1529 = vst.msk [vmem:[%s494 + $0x50] sm:$0xff] %vm1517, %v1482
        %1530 = vst.msk [vmem:[%s494 + $0x58] sm:$0xff] %vm1519, %v1498
        %1531 = vst.msk [vmem:[%s494 + $0x60] sm:$0xff] %vm1517, %v1486
        %1532 = vst.msk [vmem:[%s494 + $0x68] sm:$0xff] %vm1519, %v1499
        %1533 = vst.msk [vmem:[%s494 + $0x70] sm:$0xff] %vm1517, %v1490
        %1534 = vst.msk [vmem:[%s494 + $0x78] sm:$0xff] %vm1519, %v1500
        %v1535 = vld [vmem:[%s462] sm:$0xff]
        %v1536 = vld [vmem:[%s462 + $0x8] sm:$0xff]
        %v1537 = vld [vmem:[%s462 + $0x10] sm:$0xff]
        %v1538 = vld [vmem:[%s462 + $0x18] sm:$0xff]
        %v1539 = vld [vmem:[%s462 + $0x20] sm:$0xff]
        %v1540 = vld [vmem:[%s462 + $0x28] sm:$0xff]
        %v1541 = vld [vmem:[%s462 + $0x30] sm:$0xff]
        %v1542 = vld [vmem:[%s462 + $0x38] sm:$0xff]
        %1551 = vrot.lane.b32.xlu0 %v1535, 96
        %v1552 = vpop.permute.xlu0 %1551
        %1553 = vrot.lane.b32.xlu0 %v1536, 96
        %v1554 = vpop.permute.xlu0 %1553
        %1555 = vrot.lane.b32.xlu0 %v1537, 96
        %v1556 = vpop.permute.xlu0 %1555
        %1557 = vrot.lane.b32.xlu0 %v1538, 96
        %v1558 = vpop.permute.xlu0 %1557
        %1559 = vrot.lane.b32.xlu0 %v1539, 96
        %v1560 = vpop.permute.xlu0 %1559
        %1561 = vrot.lane.b32.xlu0 %v1540, 96
        %v1562 = vpop.permute.xlu0 %1561
        %1563 = vrot.lane.b32.xlu0 %v1541, 96
        %v1564 = vpop.permute.xlu0 %1563
        %1565 = vrot.lane.b32.xlu0 %v1542, 96
        %v1566 = vpop.permute.xlu0 %1565
        %vm1575 = vcmask 1048320
        %1576 = vst.msk [vmem:[%s494 + $0x8] sm:$0xff] %vm1575, %v1552
        %1577 = vst.msk [vmem:[%s494 + $0x18] sm:$0xff] %vm1575, %v1554
        %1578 = vst.msk [vmem:[%s494 + $0x28] sm:$0xff] %vm1575, %v1556
        %1579 = vst.msk [vmem:[%s494 + $0x38] sm:$0xff] %vm1575, %v1558
        %1580 = vst.msk [vmem:[%s494 + $0x48] sm:$0xff] %vm1575, %v1560
        %1581 = vst.msk [vmem:[%s494 + $0x58] sm:$0xff] %vm1575, %v1562
        %1582 = vst.msk [vmem:[%s494 + $0x68] sm:$0xff] %vm1575, %v1564
        %1583 = vst.msk [vmem:[%s494 + $0x78] sm:$0xff] %vm1575, %v1566
        %s1584 = sand.u32 %s167, 1
        %s1585 = scalar_lea.sflag [#allocation6], %s1584
        %s1586 = sand.u32 %s167, 1
        %s1587 = smul.addr %s1586, 128
        %s1588 = scalar_lea.vmem [#allocation5], %s1587
        // Predicated region
        $region155: #{mixed_3b.7} parent=141 // pred_check
          %p1589 = pneg %p177
        $region156: #{mixed_3b.7} parent=141 // pred_check_branch
          %1591 = sbr.rel (%p1589) target = $region158
        $region157: #{mixed_3b.7} parent=141 // pred_region
          #allocation8 [shape = 'u32[6]{0}', space=smem, size = 0x18, scoped, tag = 'DMA stride descriptor']
          %s1592 = smul.u32 2, %s24
          %s1594 = ssub.s32 2048, 2048
          %1595 = vsyncadd %s1585, %s1594
          %s1596 = smul.addr %s1592, 2
          %s1597 = smul.addr %s23, 64
          %s1598 = sadd.s32 %s1596, %s1597
          %s1599 = smul.addr %s1598, 128
          %s1600 = scalar_lea.hbm %s5, %s1599
          %s1602 = sshll.u32 1, 14
          %s1603 = sxor.u32 4294967295, %s1602
          %s1606 = sshll.u32 7, 18
          %s1607 = sxor.u32 4294967295, %s1606
          %s1608 = sand.u32 0, %s1607
          %s1610 = sor.u32 %s1608, 0
          %s1612 = sshll.u32 3, 24
          %s1613 = sxor.u32 4294967295, %s1612
          %s1614 = sand.u32 %s1610, %s1613
          %s1616 = sor.u32 %s1614, 0
          %s1617 = sshll.u32 %s1588, 4
          %s1618 = int_to_ptr.vmem [resolvable:$true] %s1617
          %1624 = sst [smem:[#allocation8]] 512
          %s1625 = scalar_lea.smem [#allocation8], 1
          %1626 = sst [smem:[%s1625]] 2048
          %s1627 = scalar_lea.smem [#allocation8], 2
          %1628 = sst [smem:[%s1627]] 2
          %s1629 = scalar_lea.smem [#allocation8], 3
          %1630 = sst [smem:[%s1629]] 256
          %s1631 = scalar_lea.smem [#allocation8], 4
          %1632 = sst [smem:[%s1631]] 256
          %s1633 = scalar_lea.smem [#allocation8], 5
          %1634 = sst [smem:[%s1633]] 16
          %1636 = dma.general %s1618, 2048, %s1600, %s1585, [#allocation7], [#allocation8], %s1616, 0
        $region158: #{mixed_3b.7} parent=141 // pred_fallthru
          _
      $region142: #{mixed_3b.7} parent=5 // pred_fallthru
        _
      %p1637 = scmp.le.s32.totalorder 2, %s14
      // Predicated region
      $region159: #{mixed_3b.7} parent=5 // pred_check
        %p1638 = pneg %p1637
      $region160: #{mixed_3b.7} parent=5 // pred_check_branch
        %1640 = sbr.rel (%p1638) target = $region162
      $region161: #{mixed_3b.7} parent=5 // pred_region
        %s1641 = ssub.s32 %s14, 2
        // Predicated region
        $region163: #{mixed_3b.7} parent=161 // pred_check
          %p1642 = pneg %p183
        $region164: #{mixed_3b.7} parent=161 // pred_check_branch
          %1644 = sbr.rel (%p1642) target = $region166
        $region165: #{mixed_3b.7} parent=161 // pred_region
          %s1645 = sand.u32 %s168, 1
          %s1646 = scalar_lea.sflag [#allocation6], %s1645
          %s1647 = sand.u32 %s168, 1
          %s1648 = smul.addr %s1647, 128
          %s1649 = scalar_lea.vmem [#allocation5], %s1648
          %1650 = dma.done %s1646, 2048
        $region166: #{mixed_3b.7} parent=161 // pred_fallthru
          _
      $region162: #{mixed_3b.7} parent=5 // pred_fallthru
        _
    $region6: #{mixed_3b.7} parent=1 // loop_footer
      %s18 = sadd.s32 1, %s14
    $region7: #{mixed_3b.7} parent=1 // loop_footer_branch
      %13 = sbr.rel target = $region3
    $region8: #{mixed_3b.7} parent=1 // loop_exit
      _
    %1651 = vsyncpa [#allocation6], 1
    %s1652 = scalar_lea.sflag [#allocation6], 1
    %1653 = vsyncpa %s1652, 1

// kernel: mixed_3b.6
$region0: #{mixed_3b.6}
  #allocation0 [shape = 'u32[]', space=smem, size = 0x4, offset = 0x4, fixed_abs, tag = 'smem constant byte address 0x4 - core index']
  #allocation1 [shape = 'u32[144,128]{1,0:T(1,128)}', space=vmem, size = 0x12000, scoped, tag = 'internal scratch']
  %s0 = inlined_call_operand.vmem [shape: bf16[1,6,10,10,192], index: 0, kind: input, shape index: {}]
  %s1 = inlined_call_operand.vmem [shape: bf16[192,32], index: 1, kind: input, shape index: {}]
  %s2 = inlined_call_operand.vmem [shape: f32[1,32], index: 2, kind: input, shape index: {}]
  %s3 = inlined_call_operand.vmem [shape: f32[1,4,8,8,32], index: 3, kind: output, shape index: {}]
  %s4 = sld [smem:[#allocation0]]
  $region22: #{mixed_3b.6} parent=0
    _
  %s6 = ssub.s32 1, %s4
  %s7 = scalar_select 0, %s6, %s4
  // Predicated region
  $region2: #{mixed_3b.6} parent=0 // pred_check
    _
  $region3: #{mixed_3b.6} parent=0 // pred_check_branch
    %9 = sbr.rel (0) target = $region5
  $region4: #{mixed_3b.6} parent=0 // pred_region
    _
  $region5: #{mixed_3b.6} parent=0 // pred_fallthru
    _
  // Predicated region
  $region6: #{mixed_3b.6} parent=0 // pred_check
    _
  $region7: #{mixed_3b.6} parent=0 // pred_check_branch
    %11 = sbr.rel (0) target = $region9
  $region8: #{mixed_3b.6} parent=0 // pred_region
    _
  $region9: #{mixed_3b.6} parent=0 // pred_fallthru
    _
  // Predicated region
  $region10: #{mixed_3b.6} parent=0 // pred_check
    _
  $region11: #{mixed_3b.6} parent=0 // pred_check_branch
    %13 = sbr.rel (0) target = $region13
  $region12: #{mixed_3b.6} parent=0 // pred_region
    _
  $region13: #{mixed_3b.6} parent=0 // pred_fallthru
    _
  %v15 = vld [vmem:[%s0] sm:$0xff]
  %v16 = vld [vmem:[%s0 + $0x8] sm:$0x11]
  %v17 = vld [vmem:[%s0 + $0x10] sm:$0xff]
  %v18 = vld [vmem:[%s0 + $0x18] sm:$0x11]
  %v19 = vld [vmem:[%s0 + $0x20] sm:$0xff]
  %v20 = vld [vmem:[%s0 + $0x28] sm:$0x11]
  %v21 = vld [vmem:[%s0 + $0x30] sm:$0xff]
  %v22 = vld [vmem:[%s0 + $0x38] sm:$0x11]
  %v23 = vld [vmem:[%s0 + $0x40] sm:$0xff]
  %v24 = vld [vmem:[%s0 + $0x48] sm:$0x11]
  %v25 = vld [vmem:[%s0 + $0x50] sm:$0xff]
  %v26 = vld [vmem:[%s0 + $0x58] sm:$0x11]
  %v27 = vld [vmem:[%s0 + $0x60] sm:$0xff]
  %v28 = vld [vmem:[%s0 + $0x68] sm:$0x11]
  %v29 = vld [vmem:[%s0 + $0x70] sm:$0xff]
  %v30 = vld [vmem:[%s0 + $0x78] sm:$0x11]
  %v31 = vld [vmem:[%s0 + $0x80] sm:$0xff]
  %v32 = vld [vmem:[%s0 + $0x88] sm:$0x11]
  %v33 = vld [vmem:[%s0 + $0x90] sm:$0xff]
  %v34 = vld [vmem:[%s0 + $0x98] sm:$0x11]
  %v35 = vld [vmem:[%s0 + $0xa0] sm:$0xff]
  %v36 = vld [vmem:[%s0 + $0xa8] sm:$0x11]
  %v37 = vld [vmem:[%s0 + $0xb0] sm:$0xff]
  %v38 = vld [vmem:[%s0 + $0xb8] sm:$0x11]
  %v39 = vld [vmem:[%s0 + $0xc0] sm:$0xff]
  %v40 = vld [vmem:[%s0 + $0xc8] sm:$0x11]
  %v41 = vld [vmem:[%s0 + $0xd0] sm:$0xff]
  %v42 = vld [vmem:[%s0 + $0xd8] sm:$0x11]
  %v43 = vld [vmem:[%s0 + $0xe0] sm:$0xff]
  %v44 = vld [vmem:[%s0 + $0xe8] sm:$0x11]
  %v45 = vld [vmem:[%s0 + $0xf0] sm:$0xff]
  %v46 = vld [vmem:[%s0 + $0xf8] sm:$0x11]
  %v47 = vld [vmem:[%s0 + $0x100] sm:$0xff]
  %v48 = vld [vmem:[%s0 + $0x108] sm:$0x11]
  %v49 = vld [vmem:[%s0 + $0x110] sm:$0xff]
  %v50 = vld [vmem:[%s0 + $0x118] sm:$0x11]
  %v51 = vld [vmem:[%s0 + $0x120] sm:$0xff]
  %v52 = vld [vmem:[%s0 + $0x128] sm:$0x11]
  %v53 = vld [vmem:[%s0 + $0x130] sm:$0xff]
  %v54 = vld [vmem:[%s0 + $0x138] sm:$0x11]
  %v55 = vld [vmem:[%s0 + $0x140] sm:$0xff]
  %v56 = vld [vmem:[%s0 + $0x148] sm:$0x11]
  %v57 = vld [vmem:[%s0 + $0x150] sm:$0xff]
  %v58 = vld [vmem:[%s0 + $0x158] sm:$0x11]
  %v59 = vld [vmem:[%s0 + $0x160] sm:$0xff]
  %v60 = vld [vmem:[%s0 + $0x168] sm:$0x11]
  %v61 = vld [vmem:[%s0 + $0x170] sm:$0xff]
  %v62 = vld [vmem:[%s0 + $0x178] sm:$0x11]
  %v63 = vld [vmem:[%s0 + $0x180] sm:$0xff]
  %v64 = vld [vmem:[%s0 + $0x188] sm:$0x11]
  %v65 = vld [vmem:[%s0 + $0x190] sm:$0xff]
  %v66 = vld [vmem:[%s0 + $0x198] sm:$0x11]
  %v67 = vld [vmem:[%s0 + $0x1a0] sm:$0xff]
  %v68 = vld [vmem:[%s0 + $0x1a8] sm:$0x11]
  %v69 = vld [vmem:[%s0 + $0x1b0] sm:$0xff]
  %v70 = vld [vmem:[%s0 + $0x1b8] sm:$0x11]
  %v71 = vld [vmem:[%s0 + $0x1c0] sm:$0xff]
  %v72 = vld [vmem:[%s0 + $0x1c8] sm:$0x11]
  %v73 = vld [vmem:[%s0 + $0x1d0] sm:$0xff]
  %v74 = vld [vmem:[%s0 + $0x1d8] sm:$0x11]
  %v75 = vld [vmem:[%s0 + $0x1e0] sm:$0xff]
  %v76 = vld [vmem:[%s0 + $0x1e8] sm:$0x11]
  %v77 = vld [vmem:[%s0 + $0x1f0] sm:$0xff]
  %v78 = vld [vmem:[%s0 + $0x1f8] sm:$0x11]
  %v79 = vld [vmem:[%s0 + $0x200] sm:$0xff]
  %v80 = vld [vmem:[%s0 + $0x208] sm:$0x11]
  %v81 = vld [vmem:[%s0 + $0x210] sm:$0xff]
  %v82 = vld [vmem:[%s0 + $0x218] sm:$0x11]
  %v83 = vld [vmem:[%s0 + $0x220] sm:$0xff]
  %v84 = vld [vmem:[%s0 + $0x228] sm:$0x11]
  %v85 = vld [vmem:[%s0 + $0x230] sm:$0xff]
  %v86 = vld [vmem:[%s0 + $0x238] sm:$0x11]
  %v87 = vld [vmem:[%s0 + $0x240] sm:$0xff]
  %v88 = vld [vmem:[%s0 + $0x248] sm:$0x11]
  %v89 = vld [vmem:[%s0 + $0x250] sm:$0xff]
  %v90 = vld [vmem:[%s0 + $0x258] sm:$0x11]
  %v91 = vld [vmem:[%s0 + $0x260] sm:$0xff]
  %v92 = vld [vmem:[%s0 + $0x268] sm:$0x11]
  %v93 = vld [vmem:[%s0 + $0x270] sm:$0xff]
  %v94 = vld [vmem:[%s0 + $0x278] sm:$0x11]
  %v95 = vld [vmem:[%s0 + $0x280] sm:$0xff]
  %v96 = vld [vmem:[%s0 + $0x288] sm:$0x11]
  %v97 = vld [vmem:[%s0 + $0x290] sm:$0xff]
  %v98 = vld [vmem:[%s0 + $0x298] sm:$0x11]
  %v99 = vld [vmem:[%s0 + $0x2a0] sm:$0xff]
  %v100 = vld [vmem:[%s0 + $0x2a8] sm:$0x11]
  %v101 = vld [vmem:[%s0 + $0x2b0] sm:$0xff]
  %v102 = vld [vmem:[%s0 + $0x2b8] sm:$0x11]
  %v103 = vld [vmem:[%s0 + $0x2c0] sm:$0xff]
  %v104 = vld [vmem:[%s0 + $0x2c8] sm:$0x11]
  %v105 = vld [vmem:[%s0 + $0x2d0] sm:$0xff]
  %v106 = vld [vmem:[%s0 + $0x2d8] sm:$0x11]
  %v107 = vld [vmem:[%s0 + $0x2e0] sm:$0xff]
  %v108 = vld [vmem:[%s0 + $0x2e8] sm:$0x11]
  %v109 = vld [vmem:[%s0 + $0x2f0] sm:$0xff]
  %v110 = vld [vmem:[%s0 + $0x2f8] sm:$0x11]
  %v111 = vld [vmem:[%s0 + $0x300] sm:$0xff]
  %v112 = vld [vmem:[%s0 + $0x308] sm:$0x11]
  %v113 = vld [vmem:[%s0 + $0x310] sm:$0xff]
  %v114 = vld [vmem:[%s0 + $0x318] sm:$0x11]
  %v115 = vld [vmem:[%s0 + $0x320] sm:$0xff]
  %v116 = vld [vmem:[%s0 + $0x328] sm:$0x11]
  %v117 = vld [vmem:[%s0 + $0x330] sm:$0xff]
  %v118 = vld [vmem:[%s0 + $0x338] sm:$0x11]
  %v119 = vld [vmem:[%s0 + $0x340] sm:$0xff]
  %v120 = vld [vmem:[%s0 + $0x348] sm:$0x11]
  %v121 = vld [vmem:[%s0 + $0x350] sm:$0xff]
  %v122 = vld [vmem:[%s0 + $0x358] sm:$0x11]
  %v123 = vld [vmem:[%s0 + $0x360] sm:$0xff]
  %v124 = vld [vmem:[%s0 + $0x368] sm:$0x11]
  %v125 = vld [vmem:[%s0 + $0x370] sm:$0xff]
  %v126 = vld [vmem:[%s0 + $0x378] sm:$0x11]
  %v127 = vld [vmem:[%s0 + $0x380] sm:$0xff]
  %v128 = vld [vmem:[%s0 + $0x388] sm:$0x11]
  %v129 = vld [vmem:[%s0 + $0x390] sm:$0xff]
  %v130 = vld [vmem:[%s0 + $0x398] sm:$0x11]
  %v131 = vld [vmem:[%s0 + $0x3a0] sm:$0xff]
  %v132 = vld [vmem:[%s0 + $0x3a8] sm:$0x11]
  %v133 = vld [vmem:[%s0 + $0x3b0] sm:$0xff]
  %v134 = vld [vmem:[%s0 + $0x3b8] sm:$0x11]
  %v135 = vmax.bf16 %v15, %v35
  %v136 = vmax.bf16 %v16, %v36
  %v137 = vmax.bf16 %v17, %v37
  %v138 = vmax.bf16 %v18, %v38
  %v139 = vmax.bf16 %v19, %v39
  %v140 = vmax.bf16 %v20, %v40
  %v141 = vmax.bf16 %v21, %v41
  %v142 = vmax.bf16 %v22, %v42
  %v143 = vmax.bf16 %v23, %v43
  %v144 = vmax.bf16 %v24, %v44
  %v145 = vmax.bf16 %v25, %v45
  %v146 = vmax.bf16 %v26, %v46
  %v147 = vmax.bf16 %v27, %v47
  %v148 = vmax.bf16 %v28, %v48
  %v149 = vmax.bf16 %v29, %v49
  %v150 = vmax.bf16 %v30, %v50
  %v151 = vmax.bf16 %v31, %v51
  %v152 = vmax.bf16 %v32, %v52
  %v153 = vmax.bf16 %v33, %v53
  %v154 = vmax.bf16 %v34, %v54
  %v155 = vmax.bf16 %v35, %v55
  %v156 = vmax.bf16 %v36, %v56
  %v157 = vmax.bf16 %v37, %v57
  %v158 = vmax.bf16 %v38, %v58
  %v159 = vmax.bf16 %v39, %v59
  %v160 = vmax.bf16 %v40, %v60
  %v161 = vmax.bf16 %v41, %v61
  %v162 = vmax.bf16 %v42, %v62
  %v163 = vmax.bf16 %v43, %v63
  %v164 = vmax.bf16 %v44, %v64
  %v165 = vmax.bf16 %v45, %v65
  %v166 = vmax.bf16 %v46, %v66
  %v167 = vmax.bf16 %v47, %v67
  %v168 = vmax.bf16 %v48, %v68
  %v169 = vmax.bf16 %v49, %v69
  %v170 = vmax.bf16 %v50, %v70
  %v171 = vmax.bf16 %v51, %v71
  %v172 = vmax.bf16 %v52, %v72
  %v173 = vmax.bf16 %v53, %v73
  %v174 = vmax.bf16 %v54, %v74
  %v175 = vmax.bf16 %v55, %v75
  %v176 = vmax.bf16 %v56, %v76
  %v177 = vmax.bf16 %v57, %v77
  %v178 = vmax.bf16 %v58, %v78
  %v179 = vmax.bf16 %v59, %v79
  %v180 = vmax.bf16 %v60, %v80
  %v181 = vmax.bf16 %v61, %v81
  %v182 = vmax.bf16 %v62, %v82
  %v183 = vmax.bf16 %v63, %v83
  %v184 = vmax.bf16 %v64, %v84
  %v185 = vmax.bf16 %v65, %v85
  %v186 = vmax.bf16 %v66, %v86
  %v187 = vmax.bf16 %v67, %v87
  %v188 = vmax.bf16 %v68, %v88
  %v189 = vmax.bf16 %v69, %v89
  %v190 = vmax.bf16 %v70, %v90
  %v191 = vmax.bf16 %v71, %v91
  %v192 = vmax.bf16 %v72, %v92
  %v193 = vmax.bf16 %v73, %v93
  %v194 = vmax.bf16 %v74, %v94
  %v195 = vmax.bf16 %v75, %v95
  %v196 = vmax.bf16 %v76, %v96
  %v197 = vmax.bf16 %v77, %v97
  %v198 = vmax.bf16 %v78, %v98
  %v199 = vmax.bf16 %v79, %v99
  %v200 = vmax.bf16 %v80, %v100
  %v201 = vmax.bf16 %v81, %v101
  %v202 = vmax.bf16 %v82, %v102
  %v203 = vmax.bf16 %v83, %v103
  %v204 = vmax.bf16 %v84, %v104
  %v205 = vmax.bf16 %v85, %v105
  %v206 = vmax.bf16 %v86, %v106
  %v207 = vmax.bf16 %v87, %v107
  %v208 = vmax.bf16 %v88, %v108
  %v209 = vmax.bf16 %v89, %v109
  %v210 = vmax.bf16 %v90, %v110
  %v211 = vmax.bf16 %v91, %v111
  %v212 = vmax.bf16 %v92, %v112
  %v213 = vmax.bf16 %v93, %v113
  %v214 = vmax.bf16 %v94, %v114
  %v215 = vmax.bf16 %v135, %v55
  %v216 = vmax.bf16 %v136, %v56
  %v217 = vmax.bf16 %v137, %v57
  %v218 = vmax.bf16 %v138, %v58
  %v219 = vmax.bf16 %v139, %v59
  %v220 = vmax.bf16 %v140, %v60
  %v221 = vmax.bf16 %v141, %v61
  %v222 = vmax.bf16 %v142, %v62
  %v223 = vmax.bf16 %v143, %v63
  %v224 = vmax.bf16 %v144, %v64
  %v225 = vmax.bf16 %v145, %v65
  %v226 = vmax.bf16 %v146, %v66
  %v227 = vmax.bf16 %v147, %v67
  %v228 = vmax.bf16 %v148, %v68
  %v229 = vmax.bf16 %v149, %v69
  %v230 = vmax.bf16 %v150, %v70
  %v231 = vmax.bf16 %v151, %v71
  %v232 = vmax.bf16 %v152, %v72
  %v233 = vmax.bf16 %v153, %v73
  %v234 = vmax.bf16 %v154, %v74
  %v235 = vmax.bf16 %v155, %v75
  %v236 = vmax.bf16 %v156, %v76
  %v237 = vmax.bf16 %v157, %v77
  %v238 = vmax.bf16 %v158, %v78
  %v239 = vmax.bf16 %v159, %v79
  %v240 = vmax.bf16 %v160, %v80
  %v241 = vmax.bf16 %v161, %v81
  %v242 = vmax.bf16 %v162, %v82
  %v243 = vmax.bf16 %v163, %v83
  %v244 = vmax.bf16 %v164, %v84
  %v245 = vmax.bf16 %v165, %v85
  %v246 = vmax.bf16 %v166, %v86
  %v247 = vmax.bf16 %v167, %v87
  %v248 = vmax.bf16 %v168, %v88
  %v249 = vmax.bf16 %v169, %v89
  %v250 = vmax.bf16 %v170, %v90
  %v251 = vmax.bf16 %v171, %v91
  %v252 = vmax.bf16 %v172, %v92
  %v253 = vmax.bf16 %v173, %v93
  %v254 = vmax.bf16 %v174, %v94
  %v255 = vmax.bf16 %v175, %v95
  %v256 = vmax.bf16 %v176, %v96
  %v257 = vmax.bf16 %v177, %v97
  %v258 = vmax.bf16 %v178, %v98
  %v259 = vmax.bf16 %v179, %v99
  %v260 = vmax.bf16 %v180, %v100
  %v261 = vmax.bf16 %v181, %v101
  %v262 = vmax.bf16 %v182, %v102
  %v263 = vmax.bf16 %v183, %v103
  %v264 = vmax.bf16 %v184, %v104
  %v265 = vmax.bf16 %v185, %v105
  %v266 = vmax.bf16 %v186, %v106
  %v267 = vmax.bf16 %v187, %v107
  %v268 = vmax.bf16 %v188, %v108
  %v269 = vmax.bf16 %v189, %v109
  %v270 = vmax.bf16 %v190, %v110
  %v271 = vmax.bf16 %v191, %v111
  %v272 = vmax.bf16 %v192, %v112
  %v273 = vmax.bf16 %v193, %v113
  %v274 = vmax.bf16 %v194, %v114
  %v275 = vmax.bf16 %v195, %v115
  %v276 = vmax.bf16 %v196, %v116
  %v277 = vmax.bf16 %v197, %v117
  %v278 = vmax.bf16 %v198, %v118
  %v279 = vmax.bf16 %v199, %v119
  %v280 = vmax.bf16 %v200, %v120
  %v281 = vmax.bf16 %v201, %v121
  %v282 = vmax.bf16 %v202, %v122
  %v283 = vmax.bf16 %v203, %v123
  %v284 = vmax.bf16 %v204, %v124
  %v285 = vmax.bf16 %v205, %v125
  %v286 = vmax.bf16 %v206, %v126
  %v287 = vmax.bf16 %v207, %v127
  %v288 = vmax.bf16 %v208, %v128
  %v289 = vmax.bf16 %v209, %v129
  %v290 = vmax.bf16 %v210, %v130
  %v291 = vmax.bf16 %v211, %v131
  %v292 = vmax.bf16 %v212, %v132
  %v293 = vmax.bf16 %v213, %v133
  %v294 = vmax.bf16 %v214, %v134
  %v295 = vmax.bf16 %v215, %v217
  %v296 = vmax.bf16 %v216, %v218
  %v297 = vmax.bf16 %v217, %v219
  %v298 = vmax.bf16 %v218, %v220
  %v299 = vmax.bf16 %v219, %v221
  %v300 = vmax.bf16 %v220, %v222
  %v301 = vmax.bf16 %v221, %v223
  %v302 = vmax.bf16 %v222, %v224
  %v303 = vmax.bf16 %v223, %v225
  %v304 = vmax.bf16 %v224, %v226
  %v305 = vmax.bf16 %v225, %v227
  %v306 = vmax.bf16 %v226, %v228
  %v307 = vmax.bf16 %v227, %v229
  %v308 = vmax.bf16 %v228, %v230
  %v309 = vmax.bf16 %v229, %v231
  %v310 = vmax.bf16 %v230, %v232
  %v311 = vmax.bf16 %v235, %v237
  %v312 = vmax.bf16 %v236, %v238
  %v313 = vmax.bf16 %v237, %v239
  %v314 = vmax.bf16 %v238, %v240
  %v315 = vmax.bf16 %v239, %v241
  %v316 = vmax.bf16 %v240, %v242
  %v317 = vmax.bf16 %v241, %v243
  %v318 = vmax.bf16 %v242, %v244
  %v319 = vmax.bf16 %v243, %v245
  %v320 = vmax.bf16 %v244, %v246
  %v321 = vmax.bf16 %v245, %v247
  %v322 = vmax.bf16 %v246, %v248
  %v323 = vmax.bf16 %v247, %v249
  %v324 = vmax.bf16 %v248, %v250
  %v325 = vmax.bf16 %v249, %v251
  %v326 = vmax.bf16 %v250, %v252
  %v327 = vmax.bf16 %v255, %v257
  %v328 = vmax.bf16 %v256, %v258
  %v329 = vmax.bf16 %v257, %v259
  %v330 = vmax.bf16 %v258, %v260
  %v331 = vmax.bf16 %v259, %v261
  %v332 = vmax.bf16 %v260, %v262
  %v333 = vmax.bf16 %v261, %v263
  %v334 = vmax.bf16 %v262, %v264
  %v335 = vmax.bf16 %v263, %v265
  %v336 = vmax.bf16 %v264, %v266
  %v337 = vmax.bf16 %v265, %v267
  %v338 = vmax.bf16 %v266, %v268
  %v339 = vmax.bf16 %v267, %v269
  %v340 = vmax.bf16 %v268, %v270
  %v341 = vmax.bf16 %v269, %v271
  %v342 = vmax.bf16 %v270, %v272
  %v343 = vmax.bf16 %v275, %v277
  %v344 = vmax.bf16 %v276, %v278
  %v345 = vmax.bf16 %v277, %v279
  %v346 = vmax.bf16 %v278, %v280
  %v347 = vmax.bf16 %v279, %v281
  %v348 = vmax.bf16 %v280, %v282
  %v349 = vmax.bf16 %v281, %v283
  %v350 = vmax.bf16 %v282, %v284
  %v351 = vmax.bf16 %v283, %v285
  %v352 = vmax.bf16 %v284, %v286
  %v353 = vmax.bf16 %v285, %v287
  %v354 = vmax.bf16 %v286, %v288
  %v355 = vmax.bf16 %v287, %v289
  %v356 = vmax.bf16 %v288, %v290
  %v357 = vmax.bf16 %v289, %v291
  %v358 = vmax.bf16 %v290, %v292
  %v359 = vmax.bf16 %v295, %v219
  %v360 = vmax.bf16 %v296, %v220
  %v361 = vmax.bf16 %v297, %v221
  %v362 = vmax.bf16 %v298, %v222
  %v363 = vmax.bf16 %v299, %v223
  %v364 = vmax.bf16 %v300, %v224
  %v365 = vmax.bf16 %v301, %v225
  %v366 = vmax.bf16 %v302, %v226
  %v367 = vmax.bf16 %v303, %v227
  %v368 = vmax.bf16 %v304, %v228
  %v369 = vmax.bf16 %v305, %v229
  %v370 = vmax.bf16 %v306, %v230
  %v371 = vmax.bf16 %v307, %v231
  %v372 = vmax.bf16 %v308, %v232
  %v373 = vmax.bf16 %v309, %v233
  %v374 = vmax.bf16 %v310, %v234
  %v375 = vmax.bf16 %v311, %v239
  %v376 = vmax.bf16 %v312, %v240
  %v377 = vmax.bf16 %v313, %v241
  %v378 = vmax.bf16 %v314, %v242
  %v379 = vmax.bf16 %v315, %v243
  %v380 = vmax.bf16 %v316, %v244
  %v381 = vmax.bf16 %v317, %v245
  %v382 = vmax.bf16 %v318, %v246
  %v383 = vmax.bf16 %v319, %v247
  %v384 = vmax.bf16 %v320, %v248
  %v385 = vmax.bf16 %v321, %v249
  %v386 = vmax.bf16 %v322, %v250
  %v387 = vmax.bf16 %v323, %v251
  %v388 = vmax.bf16 %v324, %v252
  %v389 = vmax.bf16 %v325, %v253
  %v390 = vmax.bf16 %v326, %v254
  %v391 = vmax.bf16 %v327, %v259
  %v392 = vmax.bf16 %v328, %v260
  %v393 = vmax.bf16 %v329, %v261
  %v394 = vmax.bf16 %v330, %v262
  %v395 = vmax.bf16 %v331, %v263
  %v396 = vmax.bf16 %v332, %v264
  %v397 = vmax.bf16 %v333, %v265
  %v398 = vmax.bf16 %v334, %v266
  %v399 = vmax.bf16 %v335, %v267
  %v400 = vmax.bf16 %v336, %v268
  %v401 = vmax.bf16 %v337, %v269
  %v402 = vmax.bf16 %v338, %v270
  %v403 = vmax.bf16 %v339, %v271
  %v404 = vmax.bf16 %v340, %v272
  %v405 = vmax.bf16 %v341, %v273
  %v406 = vmax.bf16 %v342, %v274
  %v407 = vmax.bf16 %v343, %v279
  %v408 = vmax.bf16 %v344, %v280
  %v409 = vmax.bf16 %v345, %v281
  %v410 = vmax.bf16 %v346, %v282
  %v411 = vmax.bf16 %v347, %v283
  %v412 = vmax.bf16 %v348, %v284
  %v413 = vmax.bf16 %v349, %v285
  %v414 = vmax.bf16 %v350, %v286
  %v415 = vmax.bf16 %v351, %v287
  %v416 = vmax.bf16 %v352, %v288
  %v417 = vmax.bf16 %v353, %v289
  %v418 = vmax.bf16 %v354, %v290
  %v419 = vmax.bf16 %v355, %v291
  %v420 = vmax.bf16 %v356, %v292
  %v421 = vmax.bf16 %v357, %v293
  %v422 = vmax.bf16 %v358, %v294
  %vm423 = vsmask.f32 3328
  %vm424 = vsmask.f32 7440
  %vm425 = vmor %vm423, %vm424
  %v427 = vshrl.u32 %v359, 16
  %v429 = vrot.slane %v427, 4
  %v430 = vshll.u32 %v359, 16
  %v432 = vrot.slane %v430, 5
  %v433 = vor.u32 %v429, %v432
  %v434 = vrot.slane %v433, 4
  %v436 = vshll.u32 %v360, 16
  %v438 = vrot.slane %v436, 5
  %v439 = vsel %vm425, %v434, %v438
  %v441 = vshrl.u32 %v361, 16
  %v443 = vrot.slane %v441, 4
  %v444 = vshll.u32 %v361, 16
  %v446 = vrot.slane %v444, 5
  %v447 = vor.u32 %v443, %v446
  %v448 = vrot.slane %v447, 4
  %v450 = vshll.u32 %v362, 16
  %v452 = vrot.slane %v450, 5
  %v453 = vsel %vm425, %v448, %v452
  %v455 = vshrl.u32 %v363, 16
  %v457 = vrot.slane %v455, 4
  %v458 = vshll.u32 %v363, 16
  %v460 = vrot.slane %v458, 5
  %v461 = vor.u32 %v457, %v460
  %v462 = vrot.slane %v461, 4
  %v464 = vshll.u32 %v364, 16
  %v466 = vrot.slane %v464, 5
  %v467 = vsel %vm425, %v462, %v466
  %v469 = vshrl.u32 %v365, 16
  %v471 = vrot.slane %v469, 4
  %v472 = vshll.u32 %v365, 16
  %v474 = vrot.slane %v472, 5
  %v475 = vor.u32 %v471, %v474
  %v476 = vrot.slane %v475, 4
  %v478 = vshll.u32 %v366, 16
  %v480 = vrot.slane %v478, 5
  %v481 = vsel %vm425, %v476, %v480
  %v483 = vshrl.u32 %v367, 16
  %v485 = vrot.slane %v483, 4
  %v486 = vshll.u32 %v367, 16
  %v488 = vrot.slane %v486, 5
  %v489 = vor.u32 %v485, %v488
  %v490 = vrot.slane %v489, 4
  %v492 = vshll.u32 %v368, 16
  %v494 = vrot.slane %v492, 5
  %v495 = vsel %vm425, %v490, %v494
  %v497 = vshrl.u32 %v369, 16
  %v499 = vrot.slane %v497, 4
  %v500 = vshll.u32 %v369, 16
  %v502 = vrot.slane %v500, 5
  %v503 = vor.u32 %v499, %v502
  %v504 = vrot.slane %v503, 4
  %v506 = vshll.u32 %v370, 16
  %v508 = vrot.slane %v506, 5
  %v509 = vsel %vm425, %v504, %v508
  %v511 = vshrl.u32 %v371, 16
  %v513 = vrot.slane %v511, 4
  %v514 = vshll.u32 %v371, 16
  %v516 = vrot.slane %v514, 5
  %v517 = vor.u32 %v513, %v516
  %v518 = vrot.slane %v517, 4
  %v520 = vshll.u32 %v372, 16
  %v522 = vrot.slane %v520, 5
  %v523 = vsel %vm425, %v518, %v522
  %v525 = vshrl.u32 %v373, 16
  %v527 = vrot.slane %v525, 4
  %v528 = vshll.u32 %v373, 16
  %v530 = vrot.slane %v528, 5
  %v531 = vor.u32 %v527, %v530
  %v532 = vrot.slane %v531, 4
  %v534 = vshll.u32 %v374, 16
  %v536 = vrot.slane %v534, 5
  %v537 = vsel %vm425, %v532, %v536
  %v539 = vshrl.u32 %v375, 16
  %v541 = vrot.slane %v539, 4
  %v542 = vshll.u32 %v375, 16
  %v544 = vrot.slane %v542, 5
  %v545 = vor.u32 %v541, %v544
  %v546 = vrot.slane %v545, 4
  %v548 = vshll.u32 %v376, 16
  %v550 = vrot.slane %v548, 5
  %v551 = vsel %vm425, %v546, %v550
  %v553 = vshrl.u32 %v377, 16
  %v555 = vrot.slane %v553, 4
  %v556 = vshll.u32 %v377, 16
  %v558 = vrot.slane %v556, 5
  %v559 = vor.u32 %v555, %v558
  %v560 = vrot.slane %v559, 4
  %v562 = vshll.u32 %v378, 16
  %v564 = vrot.slane %v562, 5
  %v565 = vsel %vm425, %v560, %v564
  %v567 = vshrl.u32 %v379, 16
  %v569 = vrot.slane %v567, 4
  %v570 = vshll.u32 %v379, 16
  %v572 = vrot.slane %v570, 5
  %v573 = vor.u32 %v569, %v572
  %v574 = vrot.slane %v573, 4
  %v576 = vshll.u32 %v380, 16
  %v578 = vrot.slane %v576, 5
  %v579 = vsel %vm425, %v574, %v578
  %v581 = vshrl.u32 %v381, 16
  %v583 = vrot.slane %v581, 4
  %v584 = vshll.u32 %v381, 16
  %v586 = vrot.slane %v584, 5
  %v587 = vor.u32 %v583, %v586
  %v588 = vrot.slane %v587, 4
  %v590 = vshll.u32 %v382, 16
  %v592 = vrot.slane %v590, 5
  %v593 = vsel %vm425, %v588, %v592
  %v595 = vshrl.u32 %v383, 16
  %v597 = vrot.slane %v595, 4
  %v598 = vshll.u32 %v383, 16
  %v600 = vrot.slane %v598, 5
  %v601 = vor.u32 %v597, %v600
  %v602 = vrot.slane %v601, 4
  %v604 = vshll.u32 %v384, 16
  %v606 = vrot.slane %v604, 5
  %v607 = vsel %vm425, %v602, %v606
  %v609 = vshrl.u32 %v385, 16
  %v611 = vrot.slane %v609, 4
  %v612 = vshll.u32 %v385, 16
  %v614 = vrot.slane %v612, 5
  %v615 = vor.u32 %v611, %v614
  %v616 = vrot.slane %v615, 4
  %v618 = vshll.u32 %v386, 16
  %v620 = vrot.slane %v618, 5
  %v621 = vsel %vm425, %v616, %v620
  %v623 = vshrl.u32 %v387, 16
  %v625 = vrot.slane %v623, 4
  %v626 = vshll.u32 %v387, 16
  %v628 = vrot.slane %v626, 5
  %v629 = vor.u32 %v625, %v628
  %v630 = vrot.slane %v629, 4
  %v632 = vshll.u32 %v388, 16
  %v634 = vrot.slane %v632, 5
  %v635 = vsel %vm425, %v630, %v634
  %v637 = vshrl.u32 %v389, 16
  %v639 = vrot.slane %v637, 4
  %v640 = vshll.u32 %v389, 16
  %v642 = vrot.slane %v640, 5
  %v643 = vor.u32 %v639, %v642
  %v644 = vrot.slane %v643, 4
  %v646 = vshll.u32 %v390, 16
  %v648 = vrot.slane %v646, 5
  %v649 = vsel %vm425, %v644, %v648
  %v651 = vshrl.u32 %v391, 16
  %v653 = vrot.slane %v651, 4
  %v654 = vshll.u32 %v391, 16
  %v656 = vrot.slane %v654, 5
  %v657 = vor.u32 %v653, %v656
  %v658 = vrot.slane %v657, 4
  %v660 = vshll.u32 %v392, 16
  %v662 = vrot.slane %v660, 5
  %v663 = vsel %vm425, %v658, %v662
  %v665 = vshrl.u32 %v393, 16
  %v667 = vrot.slane %v665, 4
  %v668 = vshll.u32 %v393, 16
  %v670 = vrot.slane %v668, 5
  %v671 = vor.u32 %v667, %v670
  %v672 = vrot.slane %v671, 4
  %v674 = vshll.u32 %v394, 16
  %v676 = vrot.slane %v674, 5
  %v677 = vsel %vm425, %v672, %v676
  %v679 = vshrl.u32 %v395, 16
  %v681 = vrot.slane %v679, 4
  %v682 = vshll.u32 %v395, 16
  %v684 = vrot.slane %v682, 5
  %v685 = vor.u32 %v681, %v684
  %v686 = vrot.slane %v685, 4
  %v688 = vshll.u32 %v396, 16
  %v690 = vrot.slane %v688, 5
  %v691 = vsel %vm425, %v686, %v690
  %v693 = vshrl.u32 %v397, 16
  %v695 = vrot.slane %v693, 4
  %v696 = vshll.u32 %v397, 16
  %v698 = vrot.slane %v696, 5
  %v699 = vor.u32 %v695, %v698
  %v700 = vrot.slane %v699, 4
  %v702 = vshll.u32 %v398, 16
  %v704 = vrot.slane %v702, 5
  %v705 = vsel %vm425, %v700, %v704
  %v707 = vshrl.u32 %v399, 16
  %v709 = vrot.slane %v707, 4
  %v710 = vshll.u32 %v399, 16
  %v712 = vrot.slane %v710, 5
  %v713 = vor.u32 %v709, %v712
  %v714 = vrot.slane %v713, 4
  %v716 = vshll.u32 %v400, 16
  %v718 = vrot.slane %v716, 5
  %v719 = vsel %vm425, %v714, %v718
  %v721 = vshrl.u32 %v401, 16
  %v723 = vrot.slane %v721, 4
  %v724 = vshll.u32 %v401, 16
  %v726 = vrot.slane %v724, 5
  %v727 = vor.u32 %v723, %v726
  %v728 = vrot.slane %v727, 4
  %v730 = vshll.u32 %v402, 16
  %v732 = vrot.slane %v730, 5
  %v733 = vsel %vm425, %v728, %v732
  %v735 = vshrl.u32 %v403, 16
  %v737 = vrot.slane %v735, 4
  %v738 = vshll.u32 %v403, 16
  %v740 = vrot.slane %v738, 5
  %v741 = vor.u32 %v737, %v740
  %v742 = vrot.slane %v741, 4
  %v744 = vshll.u32 %v404, 16
  %v746 = vrot.slane %v744, 5
  %v747 = vsel %vm425, %v742, %v746
  %v749 = vshrl.u32 %v405, 16
  %v751 = vrot.slane %v749, 4
  %v752 = vshll.u32 %v405, 16
  %v754 = vrot.slane %v752, 5
  %v755 = vor.u32 %v751, %v754
  %v756 = vrot.slane %v755, 4
  %v758 = vshll.u32 %v406, 16
  %v760 = vrot.slane %v758, 5
  %v761 = vsel %vm425, %v756, %v760
  %v763 = vshrl.u32 %v407, 16
  %v765 = vrot.slane %v763, 4
  %v766 = vshll.u32 %v407, 16
  %v768 = vrot.slane %v766, 5
  %v769 = vor.u32 %v765, %v768
  %v770 = vrot.slane %v769, 4
  %v772 = vshll.u32 %v408, 16
  %v774 = vrot.slane %v772, 5
  %v775 = vsel %vm425, %v770, %v774
  %v777 = vshrl.u32 %v409, 16
  %v779 = vrot.slane %v777, 4
  %v780 = vshll.u32 %v409, 16
  %v782 = vrot.slane %v780, 5
  %v783 = vor.u32 %v779, %v782
  %v784 = vrot.slane %v783, 4
  %v786 = vshll.u32 %v410, 16
  %v788 = vrot.slane %v786, 5
  %v789 = vsel %vm425, %v784, %v788
  %v791 = vshrl.u32 %v411, 16
  %v793 = vrot.slane %v791, 4
  %v794 = vshll.u32 %v411, 16
  %v796 = vrot.slane %v794, 5
  %v797 = vor.u32 %v793, %v796
  %v798 = vrot.slane %v797, 4
  %v800 = vshll.u32 %v412, 16
  %v802 = vrot.slane %v800, 5
  %v803 = vsel %vm425, %v798, %v802
  %v805 = vshrl.u32 %v413, 16
  %v807 = vrot.slane %v805, 4
  %v808 = vshll.u32 %v413, 16
  %v810 = vrot.slane %v808, 5
  %v811 = vor.u32 %v807, %v810
  %v812 = vrot.slane %v811, 4
  %v814 = vshll.u32 %v414, 16
  %v816 = vrot.slane %v814, 5
  %v817 = vsel %vm425, %v812, %v816
  %v819 = vshrl.u32 %v415, 16
  %v821 = vrot.slane %v819, 4
  %v822 = vshll.u32 %v415, 16
  %v824 = vrot.slane %v822, 5
  %v825 = vor.u32 %v821, %v824
  %v826 = vrot.slane %v825, 4
  %v828 = vshll.u32 %v416, 16
  %v830 = vrot.slane %v828, 5
  %v831 = vsel %vm425, %v826, %v830
  %v833 = vshrl.u32 %v417, 16
  %v835 = vrot.slane %v833, 4
  %v836 = vshll.u32 %v417, 16
  %v838 = vrot.slane %v836, 5
  %v839 = vor.u32 %v835, %v838
  %v840 = vrot.slane %v839, 4
  %v842 = vshll.u32 %v418, 16
  %v844 = vrot.slane %v842, 5
  %v845 = vsel %vm425, %v840, %v844
  %v847 = vshrl.u32 %v419, 16
  %v849 = vrot.slane %v847, 4
  %v850 = vshll.u32 %v419, 16
  %v852 = vrot.slane %v850, 5
  %v853 = vor.u32 %v849, %v852
  %v854 = vrot.slane %v853, 4
  %v856 = vshll.u32 %v420, 16
  %v858 = vrot.slane %v856, 5
  %v859 = vsel %vm425, %v854, %v858
  %v861 = vshrl.u32 %v421, 16
  %v863 = vrot.slane %v861, 4
  %v864 = vshll.u32 %v421, 16
  %v866 = vrot.slane %v864, 5
  %v867 = vor.u32 %v863, %v866
  %v868 = vrot.slane %v867, 4
  %v870 = vshll.u32 %v422, 16
  %v872 = vrot.slane %v870, 5
  %v873 = vsel %vm425, %v868, %v872
  %v906 = vmax.bf16 %v359, %v439
  %v907 = vmax.bf16 %v361, %v453
  %v908 = vmax.bf16 %v363, %v467
  %v909 = vmax.bf16 %v365, %v481
  %v910 = vmax.bf16 %v367, %v495
  %v911 = vmax.bf16 %v369, %v509
  %v912 = vmax.bf16 %v371, %v523
  %v913 = vmax.bf16 %v373, %v537
  %v914 = vmax.bf16 %v375, %v551
  %v915 = vmax.bf16 %v377, %v565
  %v916 = vmax.bf16 %v379, %v579
  %v917 = vmax.bf16 %v381, %v593
  %v918 = vmax.bf16 %v383, %v607
  %v919 = vmax.bf16 %v385, %v621
  %v920 = vmax.bf16 %v387, %v635
  %v921 = vmax.bf16 %v389, %v649
  %v922 = vmax.bf16 %v391, %v663
  %v923 = vmax.bf16 %v393, %v677
  %v924 = vmax.bf16 %v395, %v691
  %v925 = vmax.bf16 %v397, %v705
  %v926 = vmax.bf16 %v399, %v719
  %v927 = vmax.bf16 %v401, %v733
  %v928 = vmax.bf16 %v403, %v747
  %v929 = vmax.bf16 %v405, %v761
  %v930 = vmax.bf16 %v407, %v775
  %v931 = vmax.bf16 %v409, %v789
  %v932 = vmax.bf16 %v411, %v803
  %v933 = vmax.bf16 %v413, %v817
  %v934 = vmax.bf16 %v415, %v831
  %v935 = vmax.bf16 %v417, %v845
  %v936 = vmax.bf16 %v419, %v859
  %v937 = vmax.bf16 %v421, %v873
  %vm1002 = vcmask 1042432
  %vm1003 = vcmask 1046532
  %vm1004 = vmor %vm1002, %vm1003
  %v1005 = vrot.slane %v359, 5
  %v1006 = vrot.slane %v1005, 4
  %v1007 = vrot.slane %v360, 5
  %v1008 = vsel %vm1004, %v1006, %v1007
  %v1009 = vrot.slane %v361, 5
  %v1010 = vrot.slane %v1009, 4
  %v1011 = vrot.slane %v362, 5
  %v1012 = vsel %vm1004, %v1010, %v1011
  %v1013 = vrot.slane %v363, 5
  %v1014 = vrot.slane %v1013, 4
  %v1015 = vrot.slane %v364, 5
  %v1016 = vsel %vm1004, %v1014, %v1015
  %v1017 = vrot.slane %v365, 5
  %v1018 = vrot.slane %v1017, 4
  %v1019 = vrot.slane %v366, 5
  %v1020 = vsel %vm1004, %v1018, %v1019
  %v1021 = vrot.slane %v367, 5
  %v1022 = vrot.slane %v1021, 4
  %v1023 = vrot.slane %v368, 5
  %v1024 = vsel %vm1004, %v1022, %v1023
  %v1025 = vrot.slane %v369, 5
  %v1026 = vrot.slane %v1025, 4
  %v1027 = vrot.slane %v370, 5
  %v1028 = vsel %vm1004, %v1026, %v1027
  %v1029 = vrot.slane %v371, 5
  %v1030 = vrot.slane %v1029, 4
  %v1031 = vrot.slane %v372, 5
  %v1032 = vsel %vm1004, %v1030, %v1031
  %v1033 = vrot.slane %v373, 5
  %v1034 = vrot.slane %v1033, 4
  %v1035 = vrot.slane %v374, 5
  %v1036 = vsel %vm1004, %v1034, %v1035
  %v1037 = vrot.slane %v375, 5
  %v1038 = vrot.slane %v1037, 4
  %v1039 = vrot.slane %v376, 5
  %v1040 = vsel %vm1004, %v1038, %v1039
  %v1041 = vrot.slane %v377, 5
  %v1042 = vrot.slane %v1041, 4
  %v1043 = vrot.slane %v378, 5
  %v1044 = vsel %vm1004, %v1042, %v1043
  %v1045 = vrot.slane %v379, 5
  %v1046 = vrot.slane %v1045, 4
  %v1047 = vrot.slane %v380, 5
  %v1048 = vsel %vm1004, %v1046, %v1047
  %v1049 = vrot.slane %v381, 5
  %v1050 = vrot.slane %v1049, 4
  %v1051 = vrot.slane %v382, 5
  %v1052 = vsel %vm1004, %v1050, %v1051
  %v1053 = vrot.slane %v383, 5
  %v1054 = vrot.slane %v1053, 4
  %v1055 = vrot.slane %v384, 5
  %v1056 = vsel %vm1004, %v1054, %v1055
  %v1057 = vrot.slane %v385, 5
  %v1058 = vrot.slane %v1057, 4
  %v1059 = vrot.slane %v386, 5
  %v1060 = vsel %vm1004, %v1058, %v1059
  %v1061 = vrot.slane %v387, 5
  %v1062 = vrot.slane %v1061, 4
  %v1063 = vrot.slane %v388, 5
  %v1064 = vsel %vm1004, %v1062, %v1063
  %v1065 = vrot.slane %v389, 5
  %v1066 = vrot.slane %v1065, 4
  %v1067 = vrot.slane %v390, 5
  %v1068 = vsel %vm1004, %v1066, %v1067
  %v1069 = vrot.slane %v391, 5
  %v1070 = vrot.slane %v1069, 4
  %v1071 = vrot.slane %v392, 5
  %v1072 = vsel %vm1004, %v1070, %v1071
  %v1073 = vrot.slane %v393, 5
  %v1074 = vrot.slane %v1073, 4
  %v1075 = vrot.slane %v394, 5
  %v1076 = vsel %vm1004, %v1074, %v1075
  %v1077 = vrot.slane %v395, 5
  %v1078 = vrot.slane %v1077, 4
  %v1079 = vrot.slane %v396, 5
  %v1080 = vsel %vm1004, %v1078, %v1079
  %v1081 = vrot.slane %v397, 5
  %v1082 = vrot.slane %v1081, 4
  %v1083 = vrot.slane %v398, 5
  %v1084 = vsel %vm1004, %v1082, %v1083
  %v1085 = vrot.slane %v399, 5
  %v1086 = vrot.slane %v1085, 4
  %v1087 = vrot.slane %v400, 5
  %v1088 = vsel %vm1004, %v1086, %v1087
  %v1089 = vrot.slane %v401, 5
  %v1090 = vrot.slane %v1089, 4
  %v1091 = vrot.slane %v402, 5
  %v1092 = vsel %vm1004, %v1090, %v1091
  %v1093 = vrot.slane %v403, 5
  %v1094 = vrot.slane %v1093, 4
  %v1095 = vrot.slane %v404, 5
  %v1096 = vsel %vm1004, %v1094, %v1095
  %v1097 = vrot.slane %v405, 5
  %v1098 = vrot.slane %v1097, 4
  %v1099 = vrot.slane %v406, 5
  %v1100 = vsel %vm1004, %v1098, %v1099
  %v1101 = vrot.slane %v407, 5
  %v1102 = vrot.slane %v1101, 4
  %v1103 = vrot.slane %v408, 5
  %v1104 = vsel %vm1004, %v1102, %v1103
  %v1105 = vrot.slane %v409, 5
  %v1106 = vrot.slane %v1105, 4
  %v1107 = vrot.slane %v410, 5
  %v1108 = vsel %vm1004, %v1106, %v1107
  %v1109 = vrot.slane %v411, 5
  %v1110 = vrot.slane %v1109, 4
  %v1111 = vrot.slane %v412, 5
  %v1112 = vsel %vm1004, %v1110, %v1111
  %v1113 = vrot.slane %v413, 5
  %v1114 = vrot.slane %v1113, 4
  %v1115 = vrot.slane %v414, 5
  %v1116 = vsel %vm1004, %v1114, %v1115
  %v1117 = vrot.slane %v415, 5
  %v1118 = vrot.slane %v1117, 4
  %v1119 = vrot.slane %v416, 5
  %v1120 = vsel %vm1004, %v1118, %v1119
  %v1121 = vrot.slane %v417, 5
  %v1122 = vrot.slane %v1121, 4
  %v1123 = vrot.slane %v418, 5
  %v1124 = vsel %vm1004, %v1122, %v1123
  %v1125 = vrot.slane %v419, 5
  %v1126 = vrot.slane %v1125, 4
  %v1127 = vrot.slane %v420, 5
  %v1128 = vsel %vm1004, %v1126, %v1127
  %v1129 = vrot.slane %v421, 5
  %v1130 = vrot.slane %v1129, 4
  %v1131 = vrot.slane %v422, 5
  %v1132 = vsel %vm1004, %v1130, %v1131
  %v1165 = vmax.bf16 %v906, %v1008
  %v1166 = vmax.bf16 %v907, %v1012
  %v1167 = vmax.bf16 %v908, %v1016
  %v1168 = vmax.bf16 %v909, %v1020
  %v1169 = vmax.bf16 %v910, %v1024
  %v1170 = vmax.bf16 %v911, %v1028
  %v1171 = vmax.bf16 %v912, %v1032
  %v1172 = vmax.bf16 %v913, %v1036
  %v1173 = vmax.bf16 %v914, %v1040
  %v1174 = vmax.bf16 %v915, %v1044
  %v1175 = vmax.bf16 %v916, %v1048
  %v1176 = vmax.bf16 %v917, %v1052
  %v1177 = vmax.bf16 %v918, %v1056
  %v1178 = vmax.bf16 %v919, %v1060
  %v1179 = vmax.bf16 %v920, %v1064
  %v1180 = vmax.bf16 %v921, %v1068
  %v1181 = vmax.bf16 %v922, %v1072
  %v1182 = vmax.bf16 %v923, %v1076
  %v1183 = vmax.bf16 %v924, %v1080
  %v1184 = vmax.bf16 %v925, %v1084
  %v1185 = vmax.bf16 %v926, %v1088
  %v1186 = vmax.bf16 %v927, %v1092
  %v1187 = vmax.bf16 %v928, %v1096
  %v1188 = vmax.bf16 %v929, %v1100
  %v1189 = vmax.bf16 %v930, %v1104
  %v1190 = vmax.bf16 %v931, %v1108
  %v1191 = vmax.bf16 %v932, %v1112
  %v1192 = vmax.bf16 %v933, %v1116
  %v1193 = vmax.bf16 %v934, %v1120
  %v1194 = vmax.bf16 %v935, %v1124
  %v1195 = vmax.bf16 %v936, %v1128
  %v1196 = vmax.bf16 %v937, %v1132
  %v1197 = vld [vmem:[%s1] sm:$0xf]
  %v1198 = vld [vmem:[%s1 + $0x4] sm:$0xf]
  %v1199 = vld [vmem:[%s1 + $0x8] sm:$0xf]
  %v1200 = vld [vmem:[%s1 + $0xc] sm:$0xf]
  %v1201 = vld [vmem:[%s1 + $0x10] sm:$0xf]
  %v1202 = vld [vmem:[%s1 + $0x14] sm:$0xf]
  %v1203 = vld [vmem:[%s1 + $0x18] sm:$0xf]
  %v1204 = vld [vmem:[%s1 + $0x1c] sm:$0xf]
  %v1205 = vld [vmem:[%s1 + $0x20] sm:$0xf]
  %v1206 = vld [vmem:[%s1 + $0x24] sm:$0xf]
  %v1207 = vld [vmem:[%s1 + $0x28] sm:$0xf]
  %v1208 = vld [vmem:[%s1 + $0x2c] sm:$0xf]
  %v1209 = vld [vmem:[%s1 + $0x30] sm:$0xf]
  %v1210 = vld [vmem:[%s1 + $0x34] sm:$0xf]
  %v1211 = vld [vmem:[%s1 + $0x38] sm:$0xf]
  %v1212 = vld [vmem:[%s1 + $0x3c] sm:$0xf]
  %v1213 = vld [vmem:[%s1 + $0x40] sm:$0xf]
  %v1214 = vld [vmem:[%s1 + $0x44] sm:$0xf]
  %v1215 = vld [vmem:[%s1 + $0x48] sm:$0xf]
  %v1216 = vld [vmem:[%s1 + $0x4c] sm:$0xf]
  %v1217 = vld [vmem:[%s1 + $0x50] sm:$0xf]
  %v1218 = vld [vmem:[%s1 + $0x54] sm:$0xf]
  %v1219 = vld [vmem:[%s1 + $0x58] sm:$0xf]
  %v1220 = vld [vmem:[%s1 + $0x5c] sm:$0xf]
  %v1221 = vld [vmem:[%s2] sm:$0x1]
  %v1223 = vlaneseq
  %v1224 = vshrl.u32 %v1223, 7
  %v1225 = vsub.s32 0, %v1224
  %v1226 = vrot.slane %v1221, %v1225
  %v1260 = vunpack.c.l.b16 %v1165
  %v1261 = vunpack.c.h.b16 %v1165
  %v1262 = vunpack.c.l.b16 %v1166
  %v1263 = vunpack.c.h.b16 %v1166
  %v1264 = vunpack.c.l.b16 %v1167
  %v1265 = vunpack.c.h.b16 %v1167
  %v1266 = vunpack.c.l.b16 %v1168
  %v1267 = vunpack.c.h.b16 %v1168
  %v1268 = vunpack.c.l.b16 %v1169
  %v1269 = vunpack.c.h.b16 %v1169
  %v1270 = vunpack.c.l.b16 %v1170
  %v1271 = vunpack.c.h.b16 %v1170
  %v1272 = vunpack.c.l.b16 %v1171
  %v1273 = vunpack.c.h.b16 %v1171
  %v1274 = vunpack.c.l.b16 %v1172
  %v1275 = vunpack.c.h.b16 %v1172
  %v1276 = vunpack.c.l.b16 %v1173
  %v1277 = vunpack.c.h.b16 %v1173
  %v1278 = vunpack.c.l.b16 %v1174
  %v1279 = vunpack.c.h.b16 %v1174
  %v1280 = vunpack.c.l.b16 %v1175
  %v1281 = vunpack.c.h.b16 %v1175
  %v1282 = vunpack.c.l.b16 %v1176
  %v1283 = vunpack.c.h.b16 %v1176
  %v1284 = vunpack.c.l.b16 %v1177
  %v1285 = vunpack.c.h.b16 %v1177
  %v1286 = vunpack.c.l.b16 %v1178
  %v1287 = vunpack.c.h.b16 %v1178
  %v1288 = vunpack.c.l.b16 %v1179
  %v1289 = vunpack.c.h.b16 %v1179
  %v1290 = vunpack.c.l.b16 %v1180
  %v1291 = vunpack.c.h.b16 %v1180
  %v1292 = vunpack.c.l.b16 %v1181
  %v1293 = vunpack.c.h.b16 %v1181
  %v1294 = vunpack.c.l.b16 %v1182
  %v1295 = vunpack.c.h.b16 %v1182
  %v1296 = vunpack.c.l.b16 %v1183
  %v1297 = vunpack.c.h.b16 %v1183
  %v1298 = vunpack.c.l.b16 %v1184
  %v1299 = vunpack.c.h.b16 %v1184
  %v1300 = vunpack.c.l.b16 %v1185
  %v1301 = vunpack.c.h.b16 %v1185
  %v1302 = vunpack.c.l.b16 %v1186
  %v1303 = vunpack.c.h.b16 %v1186
  %v1304 = vunpack.c.l.b16 %v1187
  %v1305 = vunpack.c.h.b16 %v1187
  %v1306 = vunpack.c.l.b16 %v1188
  %v1307 = vunpack.c.h.b16 %v1188
  %v1308 = vunpack.c.l.b16 %v1189
  %v1309 = vunpack.c.h.b16 %v1189
  %v1310 = vunpack.c.l.b16 %v1190
  %v1311 = vunpack.c.h.b16 %v1190
  %v1312 = vunpack.c.l.b16 %v1191
  %v1313 = vunpack.c.h.b16 %v1191
  %v1314 = vunpack.c.l.b16 %v1192
  %v1315 = vunpack.c.h.b16 %v1192
  %v1316 = vunpack.c.l.b16 %v1193
  %v1317 = vunpack.c.h.b16 %v1193
  %v1318 = vunpack.c.l.b16 %v1194
  %v1319 = vunpack.c.h.b16 %v1194
  %v1320 = vunpack.c.l.b16 %v1195
  %v1321 = vunpack.c.h.b16 %v1195
  %v1322 = vunpack.c.l.b16 %v1196
  %v1323 = vunpack.c.h.b16 %v1196
  %v1324 = vpack.c.b16 %v1262, %v1260
  %v1325 = vpack.c.b16 %v1263, %v1261
  %v1326 = vpack.c.b16 %v1266, %v1264
  %v1327 = vpack.c.b16 %v1267, %v1265
  %v1328 = vpack.c.b16 %v1270, %v1268
  %v1329 = vpack.c.b16 %v1271, %v1269
  %v1330 = vpack.c.b16 %v1274, %v1272
  %v1331 = vpack.c.b16 %v1275, %v1273
  %v1332 = vpack.c.b16 %v1278, %v1276
  %v1333 = vpack.c.b16 %v1279, %v1277
  %v1334 = vpack.c.b16 %v1282, %v1280
  %v1335 = vpack.c.b16 %v1283, %v1281
  %v1336 = vpack.c.b16 %v1286, %v1284
  %v1337 = vpack.c.b16 %v1287, %v1285
  %v1338 = vpack.c.b16 %v1290, %v1288
  %v1339 = vpack.c.b16 %v1291, %v1289
  %v1340 = vpack.c.b16 %v1294, %v1292
  %v1341 = vpack.c.b16 %v1295, %v1293
  %v1342 = vpack.c.b16 %v1298, %v1296
  %v1343 = vpack.c.b16 %v1299, %v1297
  %v1344 = vpack.c.b16 %v1302, %v1300
  %v1345 = vpack.c.b16 %v1303, %v1301
  %v1346 = vpack.c.b16 %v1306, %v1304
  %v1347 = vpack.c.b16 %v1307, %v1305
  %v1348 = vpack.c.b16 %v1310, %v1308
  %v1349 = vpack.c.b16 %v1311, %v1309
  %v1350 = vpack.c.b16 %v1314, %v1312
  %v1351 = vpack.c.b16 %v1315, %v1313
  %v1352 = vpack.c.b16 %v1318, %v1316
  %v1353 = vpack.c.b16 %v1319, %v1317
  %v1354 = vpack.c.b16 %v1322, %v1320
  %v1355 = vpack.c.b16 %v1323, %v1321
  %v1396 = vunpack.c.l.b16 %v1197
  %v1397 = vunpack.c.l.b16 %v1198
  %v1398 = vunpack.c.l.b16 %v1199
  %v1399 = vunpack.c.l.b16 %v1200
  %v1400 = vunpack.c.l.b16 %v1201
  %v1401 = vunpack.c.l.b16 %v1202
  %v1402 = vunpack.c.l.b16 %v1203
  %v1403 = vunpack.c.l.b16 %v1204
  %v1404 = vunpack.c.l.b16 %v1205
  %v1405 = vunpack.c.l.b16 %v1206
  %v1406 = vunpack.c.l.b16 %v1207
  %v1407 = vunpack.c.l.b16 %v1208
  %v1408 = vunpack.c.l.b16 %v1209
  %v1409 = vunpack.c.l.b16 %v1210
  %v1410 = vunpack.c.l.b16 %v1211
  %v1411 = vunpack.c.l.b16 %v1212
  %v1412 = vunpack.c.l.b16 %v1213
  %v1413 = vunpack.c.l.b16 %v1214
  %v1414 = vunpack.c.l.b16 %v1215
  %v1415 = vunpack.c.l.b16 %v1216
  %v1416 = vunpack.c.l.b16 %v1217
  %v1417 = vunpack.c.l.b16 %v1218
  %v1418 = vunpack.c.l.b16 %v1219
  %v1419 = vunpack.c.l.b16 %v1220
  %v1420 = vpack.c.b16 %v1397, %v1396
  %v1421 = vpack.c.b16 %v1399, %v1398
  %v1422 = vpack.c.b16 %v1401, %v1400
  %v1423 = vpack.c.b16 %v1403, %v1402
  %v1424 = vpack.c.b16 %v1405, %v1404
  %v1425 = vpack.c.b16 %v1407, %v1406
  %v1426 = vpack.c.b16 %v1409, %v1408
  %v1427 = vpack.c.b16 %v1411, %v1410
  %v1428 = vpack.c.b16 %v1413, %v1412
  %v1429 = vpack.c.b16 %v1415, %v1414
  %v1430 = vpack.c.b16 %v1417, %v1416
  %v1431 = vpack.c.b16 %v1419, %v1418
  %vm1444 = vcmask 523264
  %v1446 = vsel %vm1444, %v1325, 0
  %v1449 = vsel %vm1444, %v1327, 0
  %v1452 = vsel %vm1444, %v1329, 0
  %v1455 = vsel %vm1444, %v1331, 0
  %v1458 = vsel %vm1444, %v1333, 0
  %v1461 = vsel %vm1444, %v1335, 0
  %v1464 = vsel %vm1444, %v1337, 0
  %v1467 = vsel %vm1444, %v1339, 0
  %v1470 = vsel %vm1444, %v1341, 0
  %v1473 = vsel %vm1444, %v1343, 0
  %v1476 = vsel %vm1444, %v1345, 0
  %v1479 = vsel %vm1444, %v1347, 0
  %v1482 = vsel %vm1444, %v1349, 0
  %v1485 = vsel %vm1444, %v1351, 0
  %v1488 = vsel %vm1444, %v1353, 0
  %v1491 = vsel %vm1444, %v1355, 0
  %1493 = vmatprep.subr.bf16.mxu0 0
  %1494 = vmatpush1.bf16.msra.mxu0 %v1420
  %1495 = vmatprep.subr.bf16.mxu0 0
  %1496 = vmatpush1.bf16.msra.mxu0 %v1421
  %1497 = vmatprep.subr.bf16.mxu0 0
  %1498 = vmatpush1.bf16.msra.mxu0 %v1422
  %1499 = vmatprep.subr.bf16.mxu0 0
  %1500 = vmatpush1.bf16.msra.mxu0 %v1423
  %1501 = vmatprep.subr.bf16.mxu0 0
  %1502 = vmatpush1.bf16.msra.mxu0 %v1424
  %1503 = vmatprep.subr.bf16.mxu0 0
  %1504 = vmatpush1.bf16.msra.mxu0 %v1425
  %1505 = vmatprep.subr.bf16.mxu0 0
  %1506 = vmatpush1.bf16.msra.mxu0 %v1426
  %1507 = vmatprep.subr.bf16.mxu0 0
  %1508 = vmatpush1.bf16.msra.mxu0 %v1427
  %1509 = vmatprep.subr.bf16.mxu0 0
  %1510 = vmatpush1.bf16.msra.mxu0 %v1428
  %1511 = vmatprep.subr.bf16.mxu0 0
  %1512 = vmatpush1.bf16.msra.mxu0 %v1429
  %1513 = vmatprep.subr.bf16.mxu0 0
  %1514 = vmatpush1.bf16.msra.mxu0 %v1430
  %1515 = vmatprep.subr.bf16.mxu0 0
  %1516 = vmatpush1.bf16.msra.mxu0 %v1431
  %1517 = vmatprep.subr.bf16.mxu0 0
  %1518 = vmatpush1.bf16.msra.mxu0 0
  %1519 = vmatprep.subr.bf16.mxu0 0
  %1520 = vmatpush1.bf16.msra.mxu0 0
  %1521 = vmatprep.subr.bf16.mxu0 0
  %1522 = vmatpush1.bf16.msra.mxu0 0
  %1523 = vmatprep.subr.bf16.mxu0 0
  %1524 = vmatpush1.bf16.msra.mxu0 0
  %1525 = vmatprep.mubr.bf16.mxu0 %v1446
  %1526 = vmatmul.mubr.bf16.gmra.mrb[0].mxu0 %v1324
  %v1527 = vpop.f32.mrb[0].mxu0
  %v1528 = vadd.f32 %v1226, %v1527
  %v1529 = vpop.f32.mrb[0].mxu0
  %v1530 = vpop.f32.mrb[0].mxu0
  %v1531 = vadd.f32 %v1226, %v1530
  %v1532 = vpop.f32.mrb[0].mxu0
  %1533 = vmatprep.mubr.bf16.mxu0 %v1449
  %1534 = vmatmul.mubr.bf16.gmra.mrb[0].mxu0 %v1326
  %v1535 = vpop.f32.mrb[0].mxu0
  %v1536 = vadd.f32 %v1226, %v1535
  %v1537 = vpop.f32.mrb[0].mxu0
  %v1538 = vpop.f32.mrb[0].mxu0
  %v1539 = vadd.f32 %v1226, %v1538
  %v1540 = vpop.f32.mrb[0].mxu0
  %1541 = vmatprep.mubr.bf16.mxu0 %v1452
  %1542 = vmatmul.mubr.bf16.gmra.mrb[0].mxu0 %v1328
  %v1543 = vpop.f32.mrb[0].mxu0
  %v1544 = vadd.f32 %v1226, %v1543
  %v1545 = vpop.f32.mrb[0].mxu0
  %v1546 = vpop.f32.mrb[0].mxu0
  %v1547 = vadd.f32 %v1226, %v1546
  %v1548 = vpop.f32.mrb[0].mxu0
  %1549 = vmatprep.mubr.bf16.mxu0 %v1455
  %1550 = vmatmul.mubr.bf16.gmra.mrb[0].mxu0 %v1330
  %v1551 = vpop.f32.mrb[0].mxu0
  %v1552 = vadd.f32 %v1226, %v1551
  %v1553 = vpop.f32.mrb[0].mxu0
  %v1554 = vpop.f32.mrb[0].mxu0
  %v1555 = vadd.f32 %v1226, %v1554
  %v1556 = vpop.f32.mrb[0].mxu0
  %1557 = vmatprep.mubr.bf16.mxu0 %v1458
  %1558 = vmatmul.mubr.bf16.gmra.mrb[0].mxu0 %v1332
  %v1559 = vpop.f32.mrb[0].mxu0
  %v1560 = vadd.f32 %v1226, %v1559
  %v1561 = vpop.f32.mrb[0].mxu0
  %v1562 = vpop.f32.mrb[0].mxu0
  %v1563 = vadd.f32 %v1226, %v1562
  %v1564 = vpop.f32.mrb[0].mxu0
  %1565 = vmatprep.mubr.bf16.mxu0 %v1461
  %1566 = vmatmul.mubr.bf16.gmra.mrb[0].mxu0 %v1334
  %v1567 = vpop.f32.mrb[0].mxu0
  %v1568 = vadd.f32 %v1226, %v1567
  %v1569 = vpop.f32.mrb[0].mxu0
  %v1570 = vpop.f32.mrb[0].mxu0
  %v1571 = vadd.f32 %v1226, %v1570
  %v1572 = vpop.f32.mrb[0].mxu0
  %1573 = vmatprep.mubr.bf16.mxu0 %v1464
  %1574 = vmatmul.mubr.bf16.gmra.mrb[0].mxu0 %v1336
  %v1575 = vpop.f32.mrb[0].mxu0
  %v1576 = vadd.f32 %v1226, %v1575
  %v1577 = vpop.f32.mrb[0].mxu0
  %v1578 = vpop.f32.mrb[0].mxu0
  %v1579 = vadd.f32 %v1226, %v1578
  %v1580 = vpop.f32.mrb[0].mxu0
  %1581 = vmatprep.mubr.bf16.mxu0 %v1467
  %1582 = vmatmul.mubr.bf16.gmra.mrb[0].mxu0 %v1338
  %v1583 = vpop.f32.mrb[0].mxu0
  %v1584 = vadd.f32 %v1226, %v1583
  %v1585 = vpop.f32.mrb[0].mxu0
  %v1586 = vpop.f32.mrb[0].mxu0
  %v1587 = vadd.f32 %v1226, %v1586
  %v1588 = vpop.f32.mrb[0].mxu0
  %1589 = vmatprep.mubr.bf16.mxu0 %v1470
  %1590 = vmatmul.mubr.bf16.gmra.mrb[0].mxu0 %v1340
  %v1591 = vpop.f32.mrb[0].mxu0
  %v1592 = vadd.f32 %v1226, %v1591
  %v1593 = vpop.f32.mrb[0].mxu0
  %v1594 = vpop.f32.mrb[0].mxu0
  %v1595 = vadd.f32 %v1226, %v1594
  %v1596 = vpop.f32.mrb[0].mxu0
  %1597 = vmatprep.mubr.bf16.mxu0 %v1473
  %1598 = vmatmul.mubr.bf16.gmra.mrb[0].mxu0 %v1342
  %v1599 = vpop.f32.mrb[0].mxu0
  %v1600 = vadd.f32 %v1226, %v1599
  %v1601 = vpop.f32.mrb[0].mxu0
  %v1602 = vpop.f32.mrb[0].mxu0
  %v1603 = vadd.f32 %v1226, %v1602
  %v1604 = vpop.f32.mrb[0].mxu0
  %1605 = vmatprep.mubr.bf16.mxu0 %v1476
  %1606 = vmatmul.mubr.bf16.gmra.mrb[0].mxu0 %v1344
  %v1607 = vpop.f32.mrb[0].mxu0
  %v1608 = vadd.f32 %v1226, %v1607
  %v1609 = vpop.f32.mrb[0].mxu0
  %v1610 = vpop.f32.mrb[0].mxu0
  %v1611 = vadd.f32 %v1226, %v1610
  %v1612 = vpop.f32.mrb[0].mxu0
  %1613 = vmatprep.mubr.bf16.mxu0 %v1479
  %1614 = vmatmul.mubr.bf16.gmra.mrb[0].mxu0 %v1346
  %v1615 = vpop.f32.mrb[0].mxu0
  %v1616 = vadd.f32 %v1226, %v1615
  %v1617 = vpop.f32.mrb[0].mxu0
  %v1618 = vpop.f32.mrb[0].mxu0
  %v1619 = vadd.f32 %v1226, %v1618
  %v1620 = vpop.f32.mrb[0].mxu0
  %1621 = vmatprep.mubr.bf16.mxu0 %v1482
  %1622 = vmatmul.mubr.bf16.gmra.mrb[0].mxu0 %v1348
  %v1623 = vpop.f32.mrb[0].mxu0
  %v1624 = vadd.f32 %v1226, %v1623
  %v1625 = vpop.f32.mrb[0].mxu0
  %v1626 = vpop.f32.mrb[0].mxu0
  %v1627 = vadd.f32 %v1226, %v1626
  %v1628 = vpop.f32.mrb[0].mxu0
  %1629 = vmatprep.mubr.bf16.mxu0 %v1485
  %1630 = vmatmul.mubr.bf16.gmra.mrb[0].mxu0 %v1350
  %v1631 = vpop.f32.mrb[0].mxu0
  %v1632 = vadd.f32 %v1226, %v1631
  %v1633 = vpop.f32.mrb[0].mxu0
  %v1634 = vpop.f32.mrb[0].mxu0
  %v1635 = vadd.f32 %v1226, %v1634
  %v1636 = vpop.f32.mrb[0].mxu0
  %1637 = vmatprep.mubr.bf16.mxu0 %v1488
  %1638 = vmatmul.mubr.bf16.gmra.mrb[0].mxu0 %v1352
  %v1639 = vpop.f32.mrb[0].mxu0
  %v1640 = vadd.f32 %v1226, %v1639
  %v1641 = vpop.f32.mrb[0].mxu0
  %v1642 = vpop.f32.mrb[0].mxu0
  %v1643 = vadd.f32 %v1226, %v1642
  %v1644 = vpop.f32.mrb[0].mxu0
  %1645 = vmatprep.mubr.bf16.mxu0 %v1491
  %1646 = vmatmul.mubr.bf16.gmra.mrb[0].mxu0 %v1354
  %v1647 = vpop.f32.mrb[0].mxu0
  %v1648 = vadd.f32 %v1226, %v1647
  %v1649 = vpop.f32.mrb[0].mxu0
  %v1650 = vpop.f32.mrb[0].mxu0
  %v1651 = vadd.f32 %v1226, %v1650
  %v1652 = vpop.f32.mrb[0].mxu0
  %1653 = vdwg.mxu0
  %v1654 = vmax.f32 %v1528, 0.0
  %v1655 = vmax.f32 %v1531, 0.0
  %v1656 = vmax.f32 %v1536, 0.0
  %v1657 = vmax.f32 %v1539, 0.0
  %v1658 = vmax.f32 %v1544, 0.0
  %v1659 = vmax.f32 %v1547, 0.0
  %v1660 = vmax.f32 %v1552, 0.0
  %v1661 = vmax.f32 %v1555, 0.0
  %v1662 = vmax.f32 %v1560, 0.0
  %v1663 = vmax.f32 %v1563, 0.0
  %v1664 = vmax.f32 %v1568, 0.0
  %v1665 = vmax.f32 %v1571, 0.0
  %v1666 = vmax.f32 %v1576, 0.0
  %v1667 = vmax.f32 %v1579, 0.0
  %v1668 = vmax.f32 %v1584, 0.0
  %v1669 = vmax.f32 %v1587, 0.0
  %v1670 = vmax.f32 %v1592, 0.0
  %v1671 = vmax.f32 %v1595, 0.0
  %v1672 = vmax.f32 %v1600, 0.0
  %v1673 = vmax.f32 %v1603, 0.0
  %v1674 = vmax.f32 %v1608, 0.0
  %v1675 = vmax.f32 %v1611, 0.0
  %v1676 = vmax.f32 %v1616, 0.0
  %v1677 = vmax.f32 %v1619, 0.0
  %v1678 = vmax.f32 %v1624, 0.0
  %v1679 = vmax.f32 %v1627, 0.0
  %v1680 = vmax.f32 %v1632, 0.0
  %v1681 = vmax.f32 %v1635, 0.0
  %v1682 = vmax.f32 %v1640, 0.0
  %v1683 = vmax.f32 %v1643, 0.0
  %v1684 = vmax.f32 %v1648, 0.0
  %v1685 = vmax.f32 %v1651, 0.0
  %vm1686 = vcmask 261120
  %1687 = vst.msk [vmem:[%s3] sm:$0xff] %vm1686, %v1654
  %1688 = vst.msk [vmem:[%s3 + $0x8] sm:$0xff] %vm1686, %v1655
  %1689 = vst.msk [vmem:[%s3 + $0x10] sm:$0xff] %vm1686, %v1656
  %1690 = vst.msk [vmem:[%s3 + $0x18] sm:$0xff] %vm1686, %v1657
  %1691 = vst.msk [vmem:[%s3 + $0x20] sm:$0xff] %vm1686, %v1658
  %1692 = vst.msk [vmem:[%s3 + $0x28] sm:$0xff] %vm1686, %v1659
  %1693 = vst.msk [vmem:[%s3 + $0x30] sm:$0xff] %vm1686, %v1660
  %1694 = vst.msk [vmem:[%s3 + $0x38] sm:$0xff] %vm1686, %v1661
  %1695 = vst.msk [vmem:[%s3 + $0x40] sm:$0xff] %vm1686, %v1662
  %1696 = vst.msk [vmem:[%s3 + $0x48] sm:$0xff] %vm1686, %v1663
  %1697 = vst.msk [vmem:[%s3 + $0x50] sm:$0xff] %vm1686, %v1664
  %1698 = vst.msk [vmem:[%s3 + $0x58] sm:$0xff] %vm1686, %v1665
  %1699 = vst.msk [vmem:[%s3 + $0x60] sm:$0xff] %vm1686, %v1666
  %1700 = vst.msk [vmem:[%s3 + $0x68] sm:$0xff] %vm1686, %v1667
  %1701 = vst.msk [vmem:[%s3 + $0x70] sm:$0xff] %vm1686, %v1668
  %1702 = vst.msk [vmem:[%s3 + $0x78] sm:$0xff] %vm1686, %v1669
  %1703 = vst.msk [vmem:[%s3 + $0x80] sm:$0xff] %vm1686, %v1670
  %1704 = vst.msk [vmem:[%s3 + $0x88] sm:$0xff] %vm1686, %v1671
  %1705 = vst.msk [vmem:[%s3 + $0x90] sm:$0xff] %vm1686, %v1672
  %1706 = vst.msk [vmem:[%s3 + $0x98] sm:$0xff] %vm1686, %v1673
  %1707 = vst.msk [vmem:[%s3 + $0xa0] sm:$0xff] %vm1686, %v1674
  %1708 = vst.msk [vmem:[%s3 + $0xa8] sm:$0xff] %vm1686, %v1675
  %1709 = vst.msk [vmem:[%s3 + $0xb0] sm:$0xff] %vm1686, %v1676
  %1710 = vst.msk [vmem:[%s3 + $0xb8] sm:$0xff] %vm1686, %v1677
  %1711 = vst.msk [vmem:[%s3 + $0xc0] sm:$0xff] %vm1686, %v1678
  %1712 = vst.msk [vmem:[%s3 + $0xc8] sm:$0xff] %vm1686, %v1679
  %1713 = vst.msk [vmem:[%s3 + $0xd0] sm:$0xff] %vm1686, %v1680
  %1714 = vst.msk [vmem:[%s3 + $0xd8] sm:$0xff] %vm1686, %v1681
  %1715 = vst.msk [vmem:[%s3 + $0xe0] sm:$0xff] %vm1686, %v1682
  %1716 = vst.msk [vmem:[%s3 + $0xe8] sm:$0xff] %vm1686, %v1683
  %1717 = vst.msk [vmem:[%s3 + $0xf0] sm:$0xff] %vm1686, %v1684
  %1718 = vst.msk [vmem:[%s3 + $0xf8] sm:$0xff] %vm1686, %v1685
  // Predicated region
  $region14: #{mixed_3b.6} parent=0 // pred_check
    _
  $region15: #{mixed_3b.6} parent=0 // pred_check_branch
    %1720 = sbr.rel (0) target = $region17
  $region16: #{mixed_3b.6} parent=0 // pred_region
    _
  $region17: #{mixed_3b.6} parent=0 // pred_fallthru
    _
  // Predicated region
  $region18: #{mixed_3b.6} parent=0 // pred_check
    _
  $region19: #{mixed_3b.6} parent=0 // pred_check_branch
    %1722 = sbr.rel (0) target = $region21
  $region20: #{mixed_3b.6} parent=0 // pred_region
    _
  $region21: #{mixed_3b.6} parent=0 // pred_fallthru
    _

</llo_original>
